<compile_context>
chip_gen: v7x
topology: tpu7x:2x2x1
jax: 0.10.0
libtpu: 0.0.40
codegen_flags: <defaults>
</compile_context>

<pallas_src>
import itertools

import jax
import jax.numpy as jnp
from jax.experimental import pallas as pl
from jax.experimental.pallas import tpu as pltpu


FEAT_DIM = 1024      # node feature dim (cfg.COMMON.FEATURE_CHANNEL * 2)
HIDDEN_DIM = 1024    # projection hidden dim
PROJ_DIM = 256       # InnerProduct output_dim
BN_EPS = 1e-5
MAX_ROW_TILE = 256   # row tile cap: x-tile 1 MiB f32; with resident bf16 weights
                     # total VMEM ~8 MiB -> fits v7x's 32 MiB scoped default.


def _round_up(n, m):
    return ((n + m - 1) // m) * m


def lexico_iter(lex):
    return itertools.combinations(lex, 2)


# ----------------------------------------------------------------------------
# Pallas kernel: batched projection MLP (bias + eval-mode BN pre-folded) with
# the InnerProduct row L2-normalization fused into the epilogue.
# ----------------------------------------------------------------------------
def projection_kernel(x_ref, w1_ref, t1_ref, w2_ref, t2_ref, o_ref):
    """normalize( ReLU( ReLU(x @ W1' + t1') @ W2' + t2' ), dim=-1 ).

    W1'/W2' are bf16, column-scaled by the folded BN scale; t1'/t2' are the f32
    folded shifts (b*s + beta - mean*s).  Matmuls run on the bf16 MXU with f32
    accumulation; the elementwise epilogue (ReLU, row-norm rsqrt) stays f32.
    """
    x = x_ref[...].astype(jnp.bfloat16)
    h = jnp.dot(x, w1_ref[...], preferred_element_type=jnp.float32)
    h = jnp.maximum(h + t1_ref[...], 0.0)
    y = jnp.dot(h.astype(jnp.bfloat16), w2_ref[...],
                preferred_element_type=jnp.float32)
    y = jnp.maximum(y + t2_ref[...], 0.0)
    # torch.nn.functional.normalize(y, dim=-1): y / max(||y||, 1e-12)
    sq = jnp.sum(y * y, axis=-1, keepdims=True)           # XLU lane reduce
    inv = jax.lax.rsqrt(jnp.maximum(sq, 1e-24))           # EUP rsqrt
    o_ref[...] = y * inv


@jax.jit
def project_all(x, params):
    """Projection MLP + row L2-norm for ALL graph items at once.
    x: [R, 1024] f32 -> [R, 256] f32 (unit rows)."""
    w1, t1, w2, t2 = params
    r = x.shape[0]
    tm = min(MAX_ROW_TILE, _round_up(r, 8))     # (8,128)-legal row tile
    r_pad = _round_up(r, tm)
    if r_pad != r:
        x = jnp.pad(x, ((0, r_pad - r), (0, 0)))

    out = pl.pallas_call(
        projection_kernel,
        out_shape=jax.ShapeDtypeStruct((r_pad, PROJ_DIM), jnp.float32),
        grid=(r_pad // tm,),
        in_specs=[
            pl.BlockSpec((tm, FEAT_DIM), lambda i: (i, 0)),           # rows tiled
            pl.BlockSpec((FEAT_DIM, HIDDEN_DIM), lambda i: (0, 0)),   # W1' resident
            pl.BlockSpec((1, HIDDEN_DIM), lambda i: (0, 0)),          # t1' resident
            pl.BlockSpec((HIDDEN_DIM, PROJ_DIM), lambda i: (0, 0)),   # W2' resident
            pl.BlockSpec((1, PROJ_DIM), lambda i: (0, 0)),            # t2' resident
        ],
        out_specs=pl.BlockSpec((tm, PROJ_DIM), lambda i: (i, 0)),     # lane-dense (256)
        compiler_params=pltpu.CompilerParams(
            dimension_semantics=("parallel",)),                       # v7x: 2 TCs
    )(x, w1, t1, w2, t2)
    return out[:r]


# ----------------------------------------------------------------------------
# InnerProduct._forward epilogue — plain XLA (tiny 8x8 output; see header note).
# Inputs are already L2-normalized by the kernel, so this is just the matmul.
# ----------------------------------------------------------------------------
@jax.jit
def vertex_affinity(px, py):
    """Cosine-similarity matrix for pre-normalized features: px @ py^T."""
    # contract last dims directly — no explicit transpose materialized
    return jax.lax.dot_general(px, py, (((1,), (1,)), ((), ())),
                               preferred_element_type=jnp.float32)


# ----------------------------------------------------------------------------
# Parameters: nn.Sequential(Linear, BN1d, ReLU, Linear, BN1d, ReLU), eval mode,
# folded on the host into (W1', t1', W2', t2').
# ----------------------------------------------------------------------------
def fold_projection_params(w1, b1, g1, be1, m1, v1, w2, b2, g2, be2, m2, v2):
    """BN(Linear(x)) = (x @ W.T + b)*s + t  with  s = g/sqrt(v+eps), t = be - m*s
                     = x @ (W.T * s) + (b*s + t).
    Weights -> bf16 [in, out]; shifts stay f32 and broadcast over rows as (1, C)."""
    s1 = g1 / jnp.sqrt(v1 + BN_EPS)
    s2 = g2 / jnp.sqrt(v2 + BN_EPS)
    t1 = b1 * s1 + (be1 - m1 * s1)
    t2 = b2 * s2 + (be2 - m2 * s2)
    w1f = (w1.T * s1[None, :]).astype(jnp.bfloat16)
    w2f = (w2.T * s2[None, :]).astype(jnp.bfloat16)
    return (w1f, t1[None, :].astype(jnp.float32),
            w2f, t2[None, :].astype(jnp.float32))


def init_projection_params(key):
    ks = jax.random.split(key, 8)
    # Linear weights in PyTorch layout [out, in]
    w1 = jax.random.normal(ks[0], (HIDDEN_DIM, FEAT_DIM), jnp.float32) * 0.02
    b1 = jax.random.normal(ks[1], (HIDDEN_DIM,), jnp.float32) * 0.01
    w2 = jax.random.normal(ks[2], (PROJ_DIM, HIDDEN_DIM), jnp.float32) * 0.02
    b2 = jax.random.normal(ks[3], (PROJ_DIM,), jnp.float32) * 0.01
    # BatchNorm1d (eval mode) params + running stats
    g1 = 1.0 + 0.1 * jax.random.normal(ks[4], (HIDDEN_DIM,), jnp.float32)
    be1 = 0.05 * jax.random.normal(ks[5], (HIDDEN_DIM,), jnp.float32)
    m1 = jnp.zeros((HIDDEN_DIM,), jnp.float32)
    v1 = jnp.ones((HIDDEN_DIM,), jnp.float32)
    g2 = 1.0 + 0.1 * jax.random.normal(ks[6], (PROJ_DIM,), jnp.float32)
    be2 = 0.05 * jax.random.normal(ks[7], (PROJ_DIM,), jnp.float32)
    m2 = jnp.zeros((PROJ_DIM,), jnp.float32)
    v2 = jnp.ones((PROJ_DIM,), jnp.float32)
    return fold_projection_params(w1, b1, g1, be1, m1, v1, w2, b2, g2, be2, m2, v2)


# ----------------------------------------------------------------------------
# Forward (mirrors Net.forward(data_dict, training=False) unary-affinity path)
# ----------------------------------------------------------------------------
def net_ensemble_forward(data_dict, params):
    """data_dict['node_features']: list (num_graphs) of lists (batch) of [n_i, 1024].
    Returns (unary_affs_list, num_graphs, data_dict) with data_dict['ds_mat'] = None."""
    node_feats = data_dict['node_features']
    num_graphs = len(node_feats)

    # --- one batched projection pallas_call over every item of every graph ---
    flat_feats = [x for graph_items in node_feats for x in graph_items]
    sizes = [int(x.shape[0]) for x in flat_feats]
    x_all = flat_feats[0] if len(flat_feats) == 1 else jnp.concatenate(flat_feats, axis=0)
    proj_all = project_all(x_all, params)        # already row-L2-normalized

    # --- split the [R, 256] result back into the original nested structure ---
    projected, idx, off = [], 0, 0
    for graph_items in node_feats:
        p_items = []
        for _ in graph_items:
            n = sizes[idx]
            p_items.append(proj_all[off:off + n])
            off += n
            idx += 1
        projected.append(p_items)

    # unary_affs_list = [ InnerProduct(proj(g1), proj(g2)) for (g1,g2) in pairs ]
    unary_affs_list = [
        [vertex_affinity(px, py) for px, py in zip(p1, p2)]
        for p1, p2 in lexico_iter(projected)
    ]

    data_dict = dict(data_dict)
    data_dict.update({'ds_mat': None})
    return unary_affs_list, num_graphs, data_dict


# ----------------------------------------------------------------------------
# Pure-JAX reference (same folded bf16 params) for a correctness check
# ----------------------------------------------------------------------------
def _reference_forward(node_feats, params):
    w1, t1, w2, t2 = params

    def proj(x):
        h = jnp.maximum(jnp.dot(x.astype(jnp.bfloat16), w1,
                                preferred_element_type=jnp.float32) + t1, 0.0)
        return jnp.maximum(jnp.dot(h.astype(jnp.bfloat16), w2,
                                   preferred_element_type=jnp.float32) + t2, 0.0)

    def aff(px, py):
        xn = px / jnp.maximum(jnp.linalg.norm(px, axis=-1, keepdims=True), 1e-12)
        yn = py / jnp.maximum(jnp.linalg.norm(py, axis=-1, keepdims=True), 1e-12)
        return xn @ yn.T

    projected = [[proj(x) for x in graph_items] for graph_items in node_feats]
    return [[aff(px, py) for px, py in zip(p1, p2)]
            for p1, p2 in lexico_iter(projected)]


# ----------------------------------------------------------------------------
# Demo / smoke test
# ----------------------------------------------------------------------------
if __name__ == "__main__":
    key = jax.random.PRNGKey(0)
    k_param, k_feat = jax.random.split(key)

    params = init_projection_params(k_param)

    num_graphs = 2     # 2GM problem
    batch_size = 2
    num_nodes = 8      # keypoints per graph item

    feat_keys = jax.random.split(k_feat, num_graphs * batch_size)
    node_features = [
        [
            jax.random.normal(feat_keys[g * batch_size + b],
                              (num_nodes, FEAT_DIM), jnp.float32)
            for b in range(batch_size)
        ]
        for g in range(num_graphs)
    ]

    data_dict = {
        'node_features': node_features,
        'batch_size': batch_size,
    }

    unary_affs_list, n_graphs, out_dict = net_ensemble_forward(data_dict, params)

    # block on all results
    for pair_affs in unary_affs_list:
        for aff in pair_affs:
            jax.block_until_ready(aff)

    # structural checks
    assert n_graphs == num_graphs
    assert len(unary_affs_list) == 1                      # C(2, 2) = 1 pair
    assert unary_affs_list[0][0].shape == (num_nodes, num_nodes)
    assert out_dict['ds_mat'] is None
    # numerical checks
    ref_affs = _reference_forward(node_features, params)
    for pair_affs, ref_pair in zip(unary_affs_list, ref_affs):
        for aff, ref in zip(pair_affs, ref_pair):
            assert bool(jnp.all(jnp.isfinite(aff)))
            # cosine similarities must lie in [-1, 1]
            assert bool(jnp.all(jnp.abs(aff) <= 1.0 + 1e-5))
            assert float(jnp.max(jnp.abs(aff - ref))) < 5e-3

    print("KERNEL_OK")
</pallas_src>

<mosaic_0001>
module attributes {stable_mosaic.version = 11 : i64} {
  func.func @projection_kernel(%arg0: i32, %arg1: memref<32x1024xf32, #tpu.memory_space<vmem>>, %arg2: memref<1024x1024xbf16, #tpu.memory_space<vmem>>, %arg3: memref<1x1024xf32, #tpu.memory_space<vmem>>, %arg4: memref<1024x256xbf16, #tpu.memory_space<vmem>>, %arg5: memref<1x256xf32, #tpu.memory_space<vmem>>, %arg6: memref<32x256xf32, #tpu.memory_space<vmem>>) attributes {dimension_semantics = [#tpu.dimension_semantics<parallel>], iteration_bounds = array<i64: 1>, scalar_prefetch = 0 : i64, scratch_operands = 0 : i64, tpu.core_type = #tpu.core_type<tc>, window_params = [{transform_indices = @transform_0, window_bounds = array<i64: 32, 1024>}, {pipeline_mode = #tpu.pipeline_mode<synchronous>, transform_indices = @transform_1, window_bounds = array<i64: 1024, 1024>}, {pipeline_mode = #tpu.pipeline_mode<synchronous>, transform_indices = @transform_2, window_bounds = array<i64: 1, 1024>}, {pipeline_mode = #tpu.pipeline_mode<synchronous>, transform_indices = @transform_3, window_bounds = array<i64: 1024, 256>}, {pipeline_mode = #tpu.pipeline_mode<synchronous>, transform_indices = @transform_4, window_bounds = array<i64: 1, 256>}, {transform_indices = @transform_5, window_bounds = array<i64: 32, 256>}]} {
    %c0 = arith.constant 0 : index
    %c0_0 = arith.constant 0 : index
    %0 = vector.load %arg1[%c0, %c0_0] : memref<32x1024xf32, #tpu.memory_space<vmem>>, vector<32x1024xf32>
    %1 = arith.truncf %0 : vector<32x1024xf32> to vector<32x1024xbf16>
    %c0_1 = arith.constant 0 : index
    %c0_2 = arith.constant 0 : index
    %2 = vector.load %arg2[%c0_1, %c0_2] : memref<1024x1024xbf16, #tpu.memory_space<vmem>>, vector<1024x1024xbf16>
    %cst = arith.constant dense<0.000000e+00> : vector<32x1024xf32>
    %3 = tpu.matmul %1, %2, %cst {dimension_numbers = #tpu.dot_dimension_numbers<[1], [0], [0], [1], [0, 0, 1, 1], [], []>} : vector<32x1024xbf16>, vector<1024x1024xbf16>, vector<32x1024xf32> -> vector<32x1024xf32>
    %c0_3 = arith.constant 0 : index
    %c0_4 = arith.constant 0 : index
    %4 = vector.load %arg3[%c0_3, %c0_4] : memref<1x1024xf32, #tpu.memory_space<vmem>>, vector<1x1024xf32>
    %5 = vector.broadcast %4 : vector<1x1024xf32> to vector<32x1024xf32>
    %6 = arith.addf %3, %5 : vector<32x1024xf32>
    %cst_5 = arith.constant 0.000000e+00 : f32
    %7 = vector.broadcast %cst_5 : f32 to vector<32x1024xf32>
    %8 = arith.maximumf %6, %7 : vector<32x1024xf32>
    %9 = arith.truncf %8 : vector<32x1024xf32> to vector<32x1024xbf16>
    %c0_6 = arith.constant 0 : index
    %c0_7 = arith.constant 0 : index
    %10 = vector.load %arg4[%c0_6, %c0_7] : memref<1024x256xbf16, #tpu.memory_space<vmem>>, vector<1024x256xbf16>
    %cst_8 = arith.constant dense<0.000000e+00> : vector<32x256xf32>
    %11 = tpu.matmul %9, %10, %cst_8 {dimension_numbers = #tpu.dot_dimension_numbers<[1], [0], [0], [1], [0, 0, 1, 1], [], []>} : vector<32x1024xbf16>, vector<1024x256xbf16>, vector<32x256xf32> -> vector<32x256xf32>
    %c0_9 = arith.constant 0 : index
    %c0_10 = arith.constant 0 : index
    %12 = vector.load %arg5[%c0_9, %c0_10] : memref<1x256xf32, #tpu.memory_space<vmem>>, vector<1x256xf32>
    %13 = vector.broadcast %12 : vector<1x256xf32> to vector<32x256xf32>
    %14 = arith.addf %11, %13 : vector<32x256xf32>
    %cst_11 = arith.constant 0.000000e+00 : f32
    %15 = vector.broadcast %cst_11 : f32 to vector<32x256xf32>
    %16 = arith.maximumf %14, %15 : vector<32x256xf32>
    %17 = arith.mulf %16, %16 : vector<32x256xf32>
    %cst_12 = arith.constant dense<0.000000e+00> : vector<32xf32>
    %18 = vector.multi_reduction <add>, %17, %cst_12 [1] : vector<32x256xf32> to vector<32xf32>
    %19 = vector.shape_cast %18 : vector<32xf32> to vector<32x1xf32>
    %cst_13 = arith.constant 1.000000e-24 : f32
    %20 = vector.broadcast %cst_13 : f32 to vector<32x1xf32>
    %21 = arith.maximumf %19, %20 : vector<32x1xf32>
    %22 = math.rsqrt %21 : vector<32x1xf32>
    %23 = vector.broadcast %22 : vector<32x1xf32> to vector<32x256xf32>
    %24 = arith.mulf %16, %23 : vector<32x256xf32>
    %c0_14 = arith.constant 0 : index
    %c0_15 = arith.constant 0 : index
    %25 = vector.load %arg6[%c0_14, %c0_15] : memref<32x256xf32, #tpu.memory_space<vmem>>, vector<32x256xf32>
    tpu.vector_store %arg6[%c0_14, %c0_15], %24 {strides = array<i32>} : memref<32x256xf32, #tpu.memory_space<vmem>>, vector<32x256xf32>,
    return
  }
  func.func @transform_0(%arg0: i32) -> (i32, i32) {
    %c0_i32 = arith.constant 0 : i32
    %c0_i32_0 = arith.constant 0 : i32
    return %arg0, %c0_i32 : i32, i32
  }
  func.func @transform_1(%arg0: i32) -> (i32, i32) {
    %c0_i32 = arith.constant 0 : i32
    %c0_i32_0 = arith.constant 0 : i32
    %c0_i32_1 = arith.constant 0 : i32
    return %c0_i32, %c0_i32_0 : i32, i32
  }
  func.func @transform_2(%arg0: i32) -> (i32, i32) {
    %c0_i32 = arith.constant 0 : i32
    %c0_i32_0 = arith.constant 0 : i32
    %c0_i32_1 = arith.constant 0 : i32
    return %c0_i32, %c0_i32_0 : i32, i32
  }
  func.func @transform_3(%arg0: i32) -> (i32, i32) {
    %c0_i32 = arith.constant 0 : i32
    %c0_i32_0 = arith.constant 0 : i32
    %c0_i32_1 = arith.constant 0 : i32
    return %c0_i32, %c0_i32_0 : i32, i32
  }
  func.func @transform_4(%arg0: i32) -> (i32, i32) {
    %c0_i32 = arith.constant 0 : i32
    %c0_i32_0 = arith.constant 0 : i32
    %c0_i32_1 = arith.constant 0 : i32
    return %c0_i32, %c0_i32_0 : i32, i32
  }
  func.func @transform_5(%arg0: i32) -> (i32, i32) {
    %c0_i32 = arith.constant 0 : i32
    %c0_i32_0 = arith.constant 0 : i32
    return %arg0, %c0_i32 : i32, i32
  }
}

</mosaic_0001>

<llo_original>
// kernel: project_all.1
$region0: #{project_all.1}
  #allocation0 [shape = 'u32[]', space=smem, size = 0x4, offset = 0x4, fixed_abs, tag = 'smem constant byte address 0x4 - core index']
  #allocation1 [shape = 'u32[144,128]{1,0:T(1,128)}', space=vmem, size = 0x12000, scoped, tag = 'internal scratch']
  %s0 = inlined_call_operand.hbm [shape: f32[32,1024], index: 0, kind: input, shape index: {}]
  %s1 = inlined_call_operand.hbm [shape: bf16[1024,1024], index: 1, kind: input, shape index: {}]
  %s2 = inlined_call_operand.hbm [shape: f32[1,1024], index: 2, kind: input, shape index: {}]
  %s3 = inlined_call_operand.hbm [shape: bf16[1024,256], index: 3, kind: input, shape index: {}]
  %s4 = inlined_call_operand.hbm [shape: f32[1,256], index: 4, kind: input, shape index: {}]
  %s5 = inlined_call_operand.hbm [shape: f32[32,256], index: 5, kind: output, shape index: {}]
  %s6 = sld [smem:[#allocation0]]
  $region50: #{project_all.1} parent=0
    _
  %s8 = ssub.s32 1, %s6
  %s9 = scalar_select 0, %s8, %s6
  $region1: #{project_all.1} parent=0
    #allocation2 [shape = 'u8[131072]{0}', space=vmem, size = 0x20000, scoped, tag = 'input window, operand 0, single buffered']
    #allocation3 [shape = 's32[1]{0}', space=sflag, size = 0x4, scoped, tag = 'scoped memory for project_all.1']
    #allocation4 [shape = 's32[1]{0}', space=sflag, size = 0x4, scoped, tag = 'scoped memory for project_all.1']
    #allocation5 [shape = 'u8[2097152]{0}', space=vmem, size = 0x200000, scoped, tag = 'input window, operand 1, single buffered']
    #allocation6 [shape = 's32[1]{0}', space=sflag, size = 0x4, scoped, tag = 'scoped memory for project_all.1']
    #allocation7 [shape = 'u8[4096]{0}', space=vmem, size = 0x1000, scoped, tag = 'input window, operand 2, single buffered']
    #allocation8 [shape = 'u8[524288]{0}', space=vmem, size = 0x80000, scoped, tag = 'input window, operand 3, single buffered']
    #allocation9 [shape = 's32[1]{0}', space=sflag, size = 0x4, scoped, tag = 'scoped memory for project_all.1']
    #allocation10 [shape = 'u8[1024]{0}', space=vmem, size = 0x400, scoped, tag = 'input window, operand 4, single buffered']
    #allocation11 [shape = 'u8[32768]{0}', space=vmem, size = 0x8000, scoped, tag = 'output window, operand 0, single buffered']
    %10 = vsyncpa [#allocation3], 0
    %11 = vsyncpa [#allocation6], 0
    %12 = vsyncpa [#allocation9], 0
    %13 = vsyncpa [#allocation4], 0
    // Predicated region
    $region2: #{project_all.1} parent=1 // pred_check
      _
    $region3: #{project_all.1} parent=1 // pred_check_branch
      %15 = sbr.rel (0) target = $region5
    $region4: #{project_all.1} parent=1 // pred_region
      %s17 = ssub.s32 4096, 4096
      %18 = vsyncadd [#allocation3], %s17
      %s19 = sshll.u32 [#allocation2], 4
      %s20 = int_to_ptr.vmem [resolvable:$true] %s19
      %25 = dma.hbm_to_vmem [thread:$0]  %s0, 4096, %s20, [#allocation3], 1024, 1024, 64
    $region5: #{project_all.1} parent=1 // pred_fallthru
      _
    // Predicated region
    $region6: #{project_all.1} parent=1 // pred_check
      _
    $region7: #{project_all.1} parent=1 // pred_check_branch
      %27 = sbr.rel (0) target = $region9
    $region8: #{project_all.1} parent=1 // pred_region
      %s29 = ssub.s32 65536, 65536
      %30 = vsyncadd [#allocation6], %s29
      %s31 = sshll.u32 [#allocation5], 4
      %s32 = int_to_ptr.vmem [resolvable:$true] %s31
      %37 = dma.hbm_to_vmem [thread:$0]  %s1, 65536, %s32, [#allocation6], 512, 512, 32
    $region9: #{project_all.1} parent=1 // pred_fallthru
      _
    // Predicated region
    $region10: #{project_all.1} parent=1 // pred_check
      _
    $region11: #{project_all.1} parent=1 // pred_check_branch
      %39 = sbr.rel (0) target = $region13
    $region12: #{project_all.1} parent=1 // pred_region
      %s41 = ssub.s32 128, 128
      %42 = vsyncadd [#allocation6], %s41
      %s44 = sshll.u32 [#allocation7], 4
      %s45 = int_to_ptr.vmem [resolvable:$true] %s44
      %47 = dma.hbm_to_vmem [thread:$0]  %s2, 128, %s45, [#allocation6]
    $region13: #{project_all.1} parent=1 // pred_fallthru
      _
    // Predicated region
    $region14: #{project_all.1} parent=1 // pred_check
      _
    $region15: #{project_all.1} parent=1 // pred_check_branch
      %49 = sbr.rel (0) target = $region17
    $region16: #{project_all.1} parent=1 // pred_region
      %s51 = ssub.s32 16384, 16384
      %52 = vsyncadd [#allocation9], %s51
      %s53 = sshll.u32 [#allocation8], 4
      %s54 = int_to_ptr.vmem [resolvable:$true] %s53
      %59 = dma.hbm_to_vmem [thread:$0]  %s3, 16384, %s54, [#allocation9], 128, 128, 8
    $region17: #{project_all.1} parent=1 // pred_fallthru
      _
    // Predicated region
    $region18: #{project_all.1} parent=1 // pred_check
      _
    $region19: #{project_all.1} parent=1 // pred_check_branch
      %61 = sbr.rel (0) target = $region21
    $region20: #{project_all.1} parent=1 // pred_region
      %s63 = ssub.s32 32, 32
      %64 = vsyncadd [#allocation9], %s63
      %s66 = sshll.u32 [#allocation10], 4
      %s67 = int_to_ptr.vmem [resolvable:$true] %s66
      %69 = dma.hbm_to_vmem [thread:$0]  %s4, 32, %s67, [#allocation9]
    $region21: #{project_all.1} parent=1 // pred_fallthru
      _
    // Predicated region
    $region22: #{project_all.1} parent=1 // pred_check
      _
    $region23: #{project_all.1} parent=1 // pred_check_branch
      %71 = sbr.rel (0) target = $region25
    $region24: #{project_all.1} parent=1 // pred_region
      %72 = dma.done [#allocation3], 4096
    $region25: #{project_all.1} parent=1 // pred_fallthru
      _
    // Predicated region
    $region26: #{project_all.1} parent=1 // pred_check
      _
    $region27: #{project_all.1} parent=1 // pred_check_branch
      %74 = sbr.rel (0) target = $region29
    $region28: #{project_all.1} parent=1 // pred_region
      %75 = dma.done [#allocation6], 65536
    $region29: #{project_all.1} parent=1 // pred_fallthru
      _
    // Predicated region
    $region30: #{project_all.1} parent=1 // pred_check
      _
    $region31: #{project_all.1} parent=1 // pred_check_branch
      %77 = sbr.rel (0) target = $region33
    $region32: #{project_all.1} parent=1 // pred_region
      %78 = dma.done [#allocation6], 128
    $region33: #{project_all.1} parent=1 // pred_fallthru
      _
    // Predicated region
    $region34: #{project_all.1} parent=1 // pred_check
      _
    $region35: #{project_all.1} parent=1 // pred_check_branch
      %80 = sbr.rel (0) target = $region37
    $region36: #{project_all.1} parent=1 // pred_region
      %81 = dma.done [#allocation9], 16384
    $region37: #{project_all.1} parent=1 // pred_fallthru
      _
    // Predicated region
    $region38: #{project_all.1} parent=1 // pred_check
      _
    $region39: #{project_all.1} parent=1 // pred_check_branch
      %83 = sbr.rel (0) target = $region41
    $region40: #{project_all.1} parent=1 // pred_region
      %84 = dma.done [#allocation9], 32
    $region41: #{project_all.1} parent=1 // pred_fallthru
      _
    %v85 = vld [vmem:[#allocation2] sm:$0xff]
    %v86 = vld [vmem:[#allocation2 + $0x8] sm:$0xff]
    %v87 = vld [vmem:[#allocation2 + $0x10] sm:$0xff]
    %v88 = vld [vmem:[#allocation2 + $0x18] sm:$0xff]
    %v89 = vld [vmem:[#allocation2 + $0x20] sm:$0xff]
    %v90 = vld [vmem:[#allocation2 + $0x28] sm:$0xff]
    %v91 = vld [vmem:[#allocation2 + $0x30] sm:$0xff]
    %v92 = vld [vmem:[#allocation2 + $0x38] sm:$0xff]
    %v93 = vld [vmem:[#allocation2 + $0x40] sm:$0xff]
    %v94 = vld [vmem:[#allocation2 + $0x48] sm:$0xff]
    %v95 = vld [vmem:[#allocation2 + $0x50] sm:$0xff]
    %v96 = vld [vmem:[#allocation2 + $0x58] sm:$0xff]
    %v97 = vld [vmem:[#allocation2 + $0x60] sm:$0xff]
    %v98 = vld [vmem:[#allocation2 + $0x68] sm:$0xff]
    %v99 = vld [vmem:[#allocation2 + $0x70] sm:$0xff]
    %v100 = vld [vmem:[#allocation2 + $0x78] sm:$0xff]
    %v101 = vld [vmem:[#allocation2 + $0x80] sm:$0xff]
    %v102 = vld [vmem:[#allocation2 + $0x88] sm:$0xff]
    %v103 = vld [vmem:[#allocation2 + $0x90] sm:$0xff]
    %v104 = vld [vmem:[#allocation2 + $0x98] sm:$0xff]
    %v105 = vld [vmem:[#allocation2 + $0xa0] sm:$0xff]
    %v106 = vld [vmem:[#allocation2 + $0xa8] sm:$0xff]
    %v107 = vld [vmem:[#allocation2 + $0xb0] sm:$0xff]
    %v108 = vld [vmem:[#allocation2 + $0xb8] sm:$0xff]
    %v109 = vld [vmem:[#allocation2 + $0xc0] sm:$0xff]
    %v110 = vld [vmem:[#allocation2 + $0xc8] sm:$0xff]
    %v111 = vld [vmem:[#allocation2 + $0xd0] sm:$0xff]
    %v112 = vld [vmem:[#allocation2 + $0xd8] sm:$0xff]
    %v113 = vld [vmem:[#allocation2 + $0xe0] sm:$0xff]
    %v114 = vld [vmem:[#allocation2 + $0xe8] sm:$0xff]
    %v115 = vld [vmem:[#allocation2 + $0xf0] sm:$0xff]
    %v116 = vld [vmem:[#allocation2 + $0xf8] sm:$0xff]
    %v117 = vpack.c.bf16 %v93, %v85
    %v118 = vpack.c.bf16 %v94, %v86
    %v119 = vpack.c.bf16 %v95, %v87
    %v120 = vpack.c.bf16 %v96, %v88
    %v121 = vpack.c.bf16 %v97, %v89
    %v122 = vpack.c.bf16 %v98, %v90
    %v123 = vpack.c.bf16 %v99, %v91
    %v124 = vpack.c.bf16 %v100, %v92
    %v125 = vpack.c.bf16 %v109, %v101
    %v126 = vpack.c.bf16 %v110, %v102
    %v127 = vpack.c.bf16 %v111, %v103
    %v128 = vpack.c.bf16 %v112, %v104
    %v129 = vpack.c.bf16 %v113, %v105
    %v130 = vpack.c.bf16 %v114, %v106
    %v131 = vpack.c.bf16 %v115, %v107
    %v132 = vpack.c.bf16 %v116, %v108
    %v133 = vld [vmem:[#allocation5] sm:$0xff]
    %v134 = vld [vmem:[#allocation5 + $0x8] sm:$0xff]
    %v135 = vld [vmem:[#allocation5 + $0x10] sm:$0xff]
    %v136 = vld [vmem:[#allocation5 + $0x18] sm:$0xff]
    %v137 = vld [vmem:[#allocation5 + $0x20] sm:$0xff]
    %v138 = vld [vmem:[#allocation5 + $0x28] sm:$0xff]
    %v139 = vld [vmem:[#allocation5 + $0x30] sm:$0xff]
    %v140 = vld [vmem:[#allocation5 + $0x38] sm:$0xff]
    %v141 = vld [vmem:[#allocation5 + $0x40] sm:$0xff]
    %v142 = vld [vmem:[#allocation5 + $0x48] sm:$0xff]
    %v143 = vld [vmem:[#allocation5 + $0x50] sm:$0xff]
    %v144 = vld [vmem:[#allocation5 + $0x58] sm:$0xff]
    %v145 = vld [vmem:[#allocation5 + $0x60] sm:$0xff]
    %v146 = vld [vmem:[#allocation5 + $0x68] sm:$0xff]
    %v147 = vld [vmem:[#allocation5 + $0x70] sm:$0xff]
    %v148 = vld [vmem:[#allocation5 + $0x78] sm:$0xff]
    %v149 = vld [vmem:[#allocation5 + $0x80] sm:$0xff]
    %v150 = vld [vmem:[#allocation5 + $0x88] sm:$0xff]
    %v151 = vld [vmem:[#allocation5 + $0x90] sm:$0xff]
    %v152 = vld [vmem:[#allocation5 + $0x98] sm:$0xff]
    %v153 = vld [vmem:[#allocation5 + $0xa0] sm:$0xff]
    %v154 = vld [vmem:[#allocation5 + $0xa8] sm:$0xff]
    %v155 = vld [vmem:[#allocation5 + $0xb0] sm:$0xff]
    %v156 = vld [vmem:[#allocation5 + $0xb8] sm:$0xff]
    %v157 = vld [vmem:[#allocation5 + $0xc0] sm:$0xff]
    %v158 = vld [vmem:[#allocation5 + $0xc8] sm:$0xff]
    %v159 = vld [vmem:[#allocation5 + $0xd0] sm:$0xff]
    %v160 = vld [vmem:[#allocation5 + $0xd8] sm:$0xff]
    %v161 = vld [vmem:[#allocation5 + $0xe0] sm:$0xff]
    %v162 = vld [vmem:[#allocation5 + $0xe8] sm:$0xff]
    %v163 = vld [vmem:[#allocation5 + $0xf0] sm:$0xff]
    %v164 = vld [vmem:[#allocation5 + $0xf8] sm:$0xff]
    %v165 = vld [vmem:[#allocation5 + $0x100] sm:$0xff]
    %v166 = vld [vmem:[#allocation5 + $0x108] sm:$0xff]
    %v167 = vld [vmem:[#allocation5 + $0x110] sm:$0xff]
    %v168 = vld [vmem:[#allocation5 + $0x118] sm:$0xff]
    %v169 = vld [vmem:[#allocation5 + $0x120] sm:$0xff]
    %v170 = vld [vmem:[#allocation5 + $0x128] sm:$0xff]
    %v171 = vld [vmem:[#allocation5 + $0x130] sm:$0xff]
    %v172 = vld [vmem:[#allocation5 + $0x138] sm:$0xff]
    %v173 = vld [vmem:[#allocation5 + $0x140] sm:$0xff]
    %v174 = vld [vmem:[#allocation5 + $0x148] sm:$0xff]
    %v175 = vld [vmem:[#allocation5 + $0x150] sm:$0xff]
    %v176 = vld [vmem:[#allocation5 + $0x158] sm:$0xff]
    %v177 = vld [vmem:[#allocation5 + $0x160] sm:$0xff]
    %v178 = vld [vmem:[#allocation5 + $0x168] sm:$0xff]
    %v179 = vld [vmem:[#allocation5 + $0x170] sm:$0xff]
    %v180 = vld [vmem:[#allocation5 + $0x178] sm:$0xff]
    %v181 = vld [vmem:[#allocation5 + $0x180] sm:$0xff]
    %v182 = vld [vmem:[#allocation5 + $0x188] sm:$0xff]
    %v183 = vld [vmem:[#allocation5 + $0x190] sm:$0xff]
    %v184 = vld [vmem:[#allocation5 + $0x198] sm:$0xff]
    %v185 = vld [vmem:[#allocation5 + $0x1a0] sm:$0xff]
    %v186 = vld [vmem:[#allocation5 + $0x1a8] sm:$0xff]
    %v187 = vld [vmem:[#allocation5 + $0x1b0] sm:$0xff]
    %v188 = vld [vmem:[#allocation5 + $0x1b8] sm:$0xff]
    %v189 = vld [vmem:[#allocation5 + $0x1c0] sm:$0xff]
    %v190 = vld [vmem:[#allocation5 + $0x1c8] sm:$0xff]
    %v191 = vld [vmem:[#allocation5 + $0x1d0] sm:$0xff]
    %v192 = vld [vmem:[#allocation5 + $0x1d8] sm:$0xff]
    %v193 = vld [vmem:[#allocation5 + $0x1e0] sm:$0xff]
    %v194 = vld [vmem:[#allocation5 + $0x1e8] sm:$0xff]
    %v195 = vld [vmem:[#allocation5 + $0x1f0] sm:$0xff]
    %v196 = vld [vmem:[#allocation5 + $0x1f8] sm:$0xff]
    %v197 = vld [vmem:[#allocation5 + $0x200] sm:$0xff]
    %v198 = vld [vmem:[#allocation5 + $0x208] sm:$0xff]
    %v199 = vld [vmem:[#allocation5 + $0x210] sm:$0xff]
    %v200 = vld [vmem:[#allocation5 + $0x218] sm:$0xff]
    %v201 = vld [vmem:[#allocation5 + $0x220] sm:$0xff]
    %v202 = vld [vmem:[#allocation5 + $0x228] sm:$0xff]
    %v203 = vld [vmem:[#allocation5 + $0x230] sm:$0xff]
    %v204 = vld [vmem:[#allocation5 + $0x238] sm:$0xff]
    %v205 = vld [vmem:[#allocation5 + $0x240] sm:$0xff]
    %v206 = vld [vmem:[#allocation5 + $0x248] sm:$0xff]
    %v207 = vld [vmem:[#allocation5 + $0x250] sm:$0xff]
    %v208 = vld [vmem:[#allocation5 + $0x258] sm:$0xff]
    %v209 = vld [vmem:[#allocation5 + $0x260] sm:$0xff]
    %v210 = vld [vmem:[#allocation5 + $0x268] sm:$0xff]
    %v211 = vld [vmem:[#allocation5 + $0x270] sm:$0xff]
    %v212 = vld [vmem:[#allocation5 + $0x278] sm:$0xff]
    %v213 = vld [vmem:[#allocation5 + $0x280] sm:$0xff]
    %v214 = vld [vmem:[#allocation5 + $0x288] sm:$0xff]
    %v215 = vld [vmem:[#allocation5 + $0x290] sm:$0xff]
    %v216 = vld [vmem:[#allocation5 + $0x298] sm:$0xff]
    %v217 = vld [vmem:[#allocation5 + $0x2a0] sm:$0xff]
    %v218 = vld [vmem:[#allocation5 + $0x2a8] sm:$0xff]
    %v219 = vld [vmem:[#allocation5 + $0x2b0] sm:$0xff]
    %v220 = vld [vmem:[#allocation5 + $0x2b8] sm:$0xff]
    %v221 = vld [vmem:[#allocation5 + $0x2c0] sm:$0xff]
    %v222 = vld [vmem:[#allocation5 + $0x2c8] sm:$0xff]
    %v223 = vld [vmem:[#allocation5 + $0x2d0] sm:$0xff]
    %v224 = vld [vmem:[#allocation5 + $0x2d8] sm:$0xff]
    %v225 = vld [vmem:[#allocation5 + $0x2e0] sm:$0xff]
    %v226 = vld [vmem:[#allocation5 + $0x2e8] sm:$0xff]
    %v227 = vld [vmem:[#allocation5 + $0x2f0] sm:$0xff]
    %v228 = vld [vmem:[#allocation5 + $0x2f8] sm:$0xff]
    %v229 = vld [vmem:[#allocation5 + $0x300] sm:$0xff]
    %v230 = vld [vmem:[#allocation5 + $0x308] sm:$0xff]
    %v231 = vld [vmem:[#allocation5 + $0x310] sm:$0xff]
    %v232 = vld [vmem:[#allocation5 + $0x318] sm:$0xff]
    %v233 = vld [vmem:[#allocation5 + $0x320] sm:$0xff]
    %v234 = vld [vmem:[#allocation5 + $0x328] sm:$0xff]
    %v235 = vld [vmem:[#allocation5 + $0x330] sm:$0xff]
    %v236 = vld [vmem:[#allocation5 + $0x338] sm:$0xff]
    %v237 = vld [vmem:[#allocation5 + $0x340] sm:$0xff]
    %v238 = vld [vmem:[#allocation5 + $0x348] sm:$0xff]
    %v239 = vld [vmem:[#allocation5 + $0x350] sm:$0xff]
    %v240 = vld [vmem:[#allocation5 + $0x358] sm:$0xff]
    %v241 = vld [vmem:[#allocation5 + $0x360] sm:$0xff]
    %v242 = vld [vmem:[#allocation5 + $0x368] sm:$0xff]
    %v243 = vld [vmem:[#allocation5 + $0x370] sm:$0xff]
    %v244 = vld [vmem:[#allocation5 + $0x378] sm:$0xff]
    %v245 = vld [vmem:[#allocation5 + $0x380] sm:$0xff]
    %v246 = vld [vmem:[#allocation5 + $0x388] sm:$0xff]
    %v247 = vld [vmem:[#allocation5 + $0x390] sm:$0xff]
    %v248 = vld [vmem:[#allocation5 + $0x398] sm:$0xff]
    %v249 = vld [vmem:[#allocation5 + $0x3a0] sm:$0xff]
    %v250 = vld [vmem:[#allocation5 + $0x3a8] sm:$0xff]
    %v251 = vld [vmem:[#allocation5 + $0x3b0] sm:$0xff]
    %v252 = vld [vmem:[#allocation5 + $0x3b8] sm:$0xff]
    %v253 = vld [vmem:[#allocation5 + $0x3c0] sm:$0xff]
    %v254 = vld [vmem:[#allocation5 + $0x3c8] sm:$0xff]
    %v255 = vld [vmem:[#allocation5 + $0x3d0] sm:$0xff]
    %v256 = vld [vmem:[#allocation5 + $0x3d8] sm:$0xff]
    %v257 = vld [vmem:[#allocation5 + $0x3e0] sm:$0xff]
    %v258 = vld [vmem:[#allocation5 + $0x3e8] sm:$0xff]
    %v259 = vld [vmem:[#allocation5 + $0x3f0] sm:$0xff]
    %v260 = vld [vmem:[#allocation5 + $0x3f8] sm:$0xff]
    %v261 = vld [vmem:[#allocation5 + $0x400] sm:$0xff]
    %v262 = vld [vmem:[#allocation5 + $0x408] sm:$0xff]
    %v263 = vld [vmem:[#allocation5 + $0x410] sm:$0xff]
    %v264 = vld [vmem:[#allocation5 + $0x418] sm:$0xff]
    %v265 = vld [vmem:[#allocation5 + $0x420] sm:$0xff]
    %v266 = vld [vmem:[#allocation5 + $0x428] sm:$0xff]
    %v267 = vld [vmem:[#allocation5 + $0x430] sm:$0xff]
    %v268 = vld [vmem:[#allocation5 + $0x438] sm:$0xff]
    %v269 = vld [vmem:[#allocation5 + $0x440] sm:$0xff]
    %v270 = vld [vmem:[#allocation5 + $0x448] sm:$0xff]
    %v271 = vld [vmem:[#allocation5 + $0x450] sm:$0xff]
    %v272 = vld [vmem:[#allocation5 + $0x458] sm:$0xff]
    %v273 = vld [vmem:[#allocation5 + $0x460] sm:$0xff]
    %v274 = vld [vmem:[#allocation5 + $0x468] sm:$0xff]
    %v275 = vld [vmem:[#allocation5 + $0x470] sm:$0xff]
    %v276 = vld [vmem:[#allocation5 + $0x478] sm:$0xff]
    %v277 = vld [vmem:[#allocation5 + $0x480] sm:$0xff]
    %v278 = vld [vmem:[#allocation5 + $0x488] sm:$0xff]
    %v279 = vld [vmem:[#allocation5 + $0x490] sm:$0xff]
    %v280 = vld [vmem:[#allocation5 + $0x498] sm:$0xff]
    %v281 = vld [vmem:[#allocation5 + $0x4a0] sm:$0xff]
    %v282 = vld [vmem:[#allocation5 + $0x4a8] sm:$0xff]
    %v283 = vld [vmem:[#allocation5 + $0x4b0] sm:$0xff]
    %v284 = vld [vmem:[#allocation5 + $0x4b8] sm:$0xff]
    %v285 = vld [vmem:[#allocation5 + $0x4c0] sm:$0xff]
    %v286 = vld [vmem:[#allocation5 + $0x4c8] sm:$0xff]
    %v287 = vld [vmem:[#allocation5 + $0x4d0] sm:$0xff]
    %v288 = vld [vmem:[#allocation5 + $0x4d8] sm:$0xff]
    %v289 = vld [vmem:[#allocation5 + $0x4e0] sm:$0xff]
    %v290 = vld [vmem:[#allocation5 + $0x4e8] sm:$0xff]
    %v291 = vld [vmem:[#allocation5 + $0x4f0] sm:$0xff]
    %v292 = vld [vmem:[#allocation5 + $0x4f8] sm:$0xff]
    %v293 = vld [vmem:[#allocation5 + $0x500] sm:$0xff]
    %v294 = vld [vmem:[#allocation5 + $0x508] sm:$0xff]
    %v295 = vld [vmem:[#allocation5 + $0x510] sm:$0xff]
    %v296 = vld [vmem:[#allocation5 + $0x518] sm:$0xff]
    %v297 = vld [vmem:[#allocation5 + $0x520] sm:$0xff]
    %v298 = vld [vmem:[#allocation5 + $0x528] sm:$0xff]
    %v299 = vld [vmem:[#allocation5 + $0x530] sm:$0xff]
    %v300 = vld [vmem:[#allocation5 + $0x538] sm:$0xff]
    %v301 = vld [vmem:[#allocation5 + $0x540] sm:$0xff]
    %v302 = vld [vmem:[#allocation5 + $0x548] sm:$0xff]
    %v303 = vld [vmem:[#allocation5 + $0x550] sm:$0xff]
    %v304 = vld [vmem:[#allocation5 + $0x558] sm:$0xff]
    %v305 = vld [vmem:[#allocation5 + $0x560] sm:$0xff]
    %v306 = vld [vmem:[#allocation5 + $0x568] sm:$0xff]
    %v307 = vld [vmem:[#allocation5 + $0x570] sm:$0xff]
    %v308 = vld [vmem:[#allocation5 + $0x578] sm:$0xff]
    %v309 = vld [vmem:[#allocation5 + $0x580] sm:$0xff]
    %v310 = vld [vmem:[#allocation5 + $0x588] sm:$0xff]
    %v311 = vld [vmem:[#allocation5 + $0x590] sm:$0xff]
    %v312 = vld [vmem:[#allocation5 + $0x598] sm:$0xff]
    %v313 = vld [vmem:[#allocation5 + $0x5a0] sm:$0xff]
    %v314 = vld [vmem:[#allocation5 + $0x5a8] sm:$0xff]
    %v315 = vld [vmem:[#allocation5 + $0x5b0] sm:$0xff]
    %v316 = vld [vmem:[#allocation5 + $0x5b8] sm:$0xff]
    %v317 = vld [vmem:[#allocation5 + $0x5c0] sm:$0xff]
    %v318 = vld [vmem:[#allocation5 + $0x5c8] sm:$0xff]
    %v319 = vld [vmem:[#allocation5 + $0x5d0] sm:$0xff]
    %v320 = vld [vmem:[#allocation5 + $0x5d8] sm:$0xff]
    %v321 = vld [vmem:[#allocation5 + $0x5e0] sm:$0xff]
    %v322 = vld [vmem:[#allocation5 + $0x5e8] sm:$0xff]
    %v323 = vld [vmem:[#allocation5 + $0x5f0] sm:$0xff]
    %v324 = vld [vmem:[#allocation5 + $0x5f8] sm:$0xff]
    %v325 = vld [vmem:[#allocation5 + $0x600] sm:$0xff]
    %v326 = vld [vmem:[#allocation5 + $0x608] sm:$0xff]
    %v327 = vld [vmem:[#allocation5 + $0x610] sm:$0xff]
    %v328 = vld [vmem:[#allocation5 + $0x618] sm:$0xff]
    %v329 = vld [vmem:[#allocation5 + $0x620] sm:$0xff]
    %v330 = vld [vmem:[#allocation5 + $0x628] sm:$0xff]
    %v331 = vld [vmem:[#allocation5 + $0x630] sm:$0xff]
    %v332 = vld [vmem:[#allocation5 + $0x638] sm:$0xff]
    %v333 = vld [vmem:[#allocation5 + $0x640] sm:$0xff]
    %v334 = vld [vmem:[#allocation5 + $0x648] sm:$0xff]
    %v335 = vld [vmem:[#allocation5 + $0x650] sm:$0xff]
    %v336 = vld [vmem:[#allocation5 + $0x658] sm:$0xff]
    %v337 = vld [vmem:[#allocation5 + $0x660] sm:$0xff]
    %v338 = vld [vmem:[#allocation5 + $0x668] sm:$0xff]
    %v339 = vld [vmem:[#allocation5 + $0x670] sm:$0xff]
    %v340 = vld [vmem:[#allocation5 + $0x678] sm:$0xff]
    %v341 = vld [vmem:[#allocation5 + $0x680] sm:$0xff]
    %v342 = vld [vmem:[#allocation5 + $0x688] sm:$0xff]
    %v343 = vld [vmem:[#allocation5 + $0x690] sm:$0xff]
    %v344 = vld [vmem:[#allocation5 + $0x698] sm:$0xff]
    %v345 = vld [vmem:[#allocation5 + $0x6a0] sm:$0xff]
    %v346 = vld [vmem:[#allocation5 + $0x6a8] sm:$0xff]
    %v347 = vld [vmem:[#allocation5 + $0x6b0] sm:$0xff]
    %v348 = vld [vmem:[#allocation5 + $0x6b8] sm:$0xff]
    %v349 = vld [vmem:[#allocation5 + $0x6c0] sm:$0xff]
    %v350 = vld [vmem:[#allocation5 + $0x6c8] sm:$0xff]
    %v351 = vld [vmem:[#allocation5 + $0x6d0] sm:$0xff]
    %v352 = vld [vmem:[#allocation5 + $0x6d8] sm:$0xff]
    %v353 = vld [vmem:[#allocation5 + $0x6e0] sm:$0xff]
    %v354 = vld [vmem:[#allocation5 + $0x6e8] sm:$0xff]
    %v355 = vld [vmem:[#allocation5 + $0x6f0] sm:$0xff]
    %v356 = vld [vmem:[#allocation5 + $0x6f8] sm:$0xff]
    %v357 = vld [vmem:[#allocation5 + $0x700] sm:$0xff]
    %v358 = vld [vmem:[#allocation5 + $0x708] sm:$0xff]
    %v359 = vld [vmem:[#allocation5 + $0x710] sm:$0xff]
    %v360 = vld [vmem:[#allocation5 + $0x718] sm:$0xff]
    %v361 = vld [vmem:[#allocation5 + $0x720] sm:$0xff]
    %v362 = vld [vmem:[#allocation5 + $0x728] sm:$0xff]
    %v363 = vld [vmem:[#allocation5 + $0x730] sm:$0xff]
    %v364 = vld [vmem:[#allocation5 + $0x738] sm:$0xff]
    %v365 = vld [vmem:[#allocation5 + $0x740] sm:$0xff]
    %v366 = vld [vmem:[#allocation5 + $0x748] sm:$0xff]
    %v367 = vld [vmem:[#allocation5 + $0x750] sm:$0xff]
    %v368 = vld [vmem:[#allocation5 + $0x758] sm:$0xff]
    %v369 = vld [vmem:[#allocation5 + $0x760] sm:$0xff]
    %v370 = vld [vmem:[#allocation5 + $0x768] sm:$0xff]
    %v371 = vld [vmem:[#allocation5 + $0x770] sm:$0xff]
    %v372 = vld [vmem:[#allocation5 + $0x778] sm:$0xff]
    %v373 = vld [vmem:[#allocation5 + $0x780] sm:$0xff]
    %v374 = vld [vmem:[#allocation5 + $0x788] sm:$0xff]
    %v375 = vld [vmem:[#allocation5 + $0x790] sm:$0xff]
    %v376 = vld [vmem:[#allocation5 + $0x798] sm:$0xff]
    %v377 = vld [vmem:[#allocation5 + $0x7a0] sm:$0xff]
    %v378 = vld [vmem:[#allocation5 + $0x7a8] sm:$0xff]
    %v379 = vld [vmem:[#allocation5 + $0x7b0] sm:$0xff]
    %v380 = vld [vmem:[#allocation5 + $0x7b8] sm:$0xff]
    %v381 = vld [vmem:[#allocation5 + $0x7c0] sm:$0xff]
    %v382 = vld [vmem:[#allocation5 + $0x7c8] sm:$0xff]
    %v383 = vld [vmem:[#allocation5 + $0x7d0] sm:$0xff]
    %v384 = vld [vmem:[#allocation5 + $0x7d8] sm:$0xff]
    %v385 = vld [vmem:[#allocation5 + $0x7e0] sm:$0xff]
    %v386 = vld [vmem:[#allocation5 + $0x7e8] sm:$0xff]
    %v387 = vld [vmem:[#allocation5 + $0x7f0] sm:$0xff]
    %v388 = vld [vmem:[#allocation5 + $0x7f8] sm:$0xff]
    %v389 = vld [vmem:[#allocation5 + $0x800] sm:$0xff]
    %v390 = vld [vmem:[#allocation5 + $0x808] sm:$0xff]
    %v391 = vld [vmem:[#allocation5 + $0x810] sm:$0xff]
    %v392 = vld [vmem:[#allocation5 + $0x818] sm:$0xff]
    %v393 = vld [vmem:[#allocation5 + $0x820] sm:$0xff]
    %v394 = vld [vmem:[#allocation5 + $0x828] sm:$0xff]
    %v395 = vld [vmem:[#allocation5 + $0x830] sm:$0xff]
    %v396 = vld [vmem:[#allocation5 + $0x838] sm:$0xff]
    %v397 = vld [vmem:[#allocation5 + $0x840] sm:$0xff]
    %v398 = vld [vmem:[#allocation5 + $0x848] sm:$0xff]
    %v399 = vld [vmem:[#allocation5 + $0x850] sm:$0xff]
    %v400 = vld [vmem:[#allocation5 + $0x858] sm:$0xff]
    %v401 = vld [vmem:[#allocation5 + $0x860] sm:$0xff]
    %v402 = vld [vmem:[#allocation5 + $0x868] sm:$0xff]
    %v403 = vld [vmem:[#allocation5 + $0x870] sm:$0xff]
    %v404 = vld [vmem:[#allocation5 + $0x878] sm:$0xff]
    %v405 = vld [vmem:[#allocation5 + $0x880] sm:$0xff]
    %v406 = vld [vmem:[#allocation5 + $0x888] sm:$0xff]
    %v407 = vld [vmem:[#allocation5 + $0x890] sm:$0xff]
    %v408 = vld [vmem:[#allocation5 + $0x898] sm:$0xff]
    %v409 = vld [vmem:[#allocation5 + $0x8a0] sm:$0xff]
    %v410 = vld [vmem:[#allocation5 + $0x8a8] sm:$0xff]
    %v411 = vld [vmem:[#allocation5 + $0x8b0] sm:$0xff]
    %v412 = vld [vmem:[#allocation5 + $0x8b8] sm:$0xff]
    %v413 = vld [vmem:[#allocation5 + $0x8c0] sm:$0xff]
    %v414 = vld [vmem:[#allocation5 + $0x8c8] sm:$0xff]
    %v415 = vld [vmem:[#allocation5 + $0x8d0] sm:$0xff]
    %v416 = vld [vmem:[#allocation5 + $0x8d8] sm:$0xff]
    %v417 = vld [vmem:[#allocation5 + $0x8e0] sm:$0xff]
    %v418 = vld [vmem:[#allocation5 + $0x8e8] sm:$0xff]
    %v419 = vld [vmem:[#allocation5 + $0x8f0] sm:$0xff]
    %v420 = vld [vmem:[#allocation5 + $0x8f8] sm:$0xff]
    %v421 = vld [vmem:[#allocation5 + $0x900] sm:$0xff]
    %v422 = vld [vmem:[#allocation5 + $0x908] sm:$0xff]
    %v423 = vld [vmem:[#allocation5 + $0x910] sm:$0xff]
    %v424 = vld [vmem:[#allocation5 + $0x918] sm:$0xff]
    %v425 = vld [vmem:[#allocation5 + $0x920] sm:$0xff]
    %v426 = vld [vmem:[#allocation5 + $0x928] sm:$0xff]
    %v427 = vld [vmem:[#allocation5 + $0x930] sm:$0xff]
    %v428 = vld [vmem:[#allocation5 + $0x938] sm:$0xff]
    %v429 = vld [vmem:[#allocation5 + $0x940] sm:$0xff]
    %v430 = vld [vmem:[#allocation5 + $0x948] sm:$0xff]
    %v431 = vld [vmem:[#allocation5 + $0x950] sm:$0xff]
    %v432 = vld [vmem:[#allocation5 + $0x958] sm:$0xff]
    %v433 = vld [vmem:[#allocation5 + $0x960] sm:$0xff]
    %v434 = vld [vmem:[#allocation5 + $0x968] sm:$0xff]
    %v435 = vld [vmem:[#allocation5 + $0x970] sm:$0xff]
    %v436 = vld [vmem:[#allocation5 + $0x978] sm:$0xff]
    %v437 = vld [vmem:[#allocation5 + $0x980] sm:$0xff]
    %v438 = vld [vmem:[#allocation5 + $0x988] sm:$0xff]
    %v439 = vld [vmem:[#allocation5 + $0x990] sm:$0xff]
    %v440 = vld [vmem:[#allocation5 + $0x998] sm:$0xff]
    %v441 = vld [vmem:[#allocation5 + $0x9a0] sm:$0xff]
    %v442 = vld [vmem:[#allocation5 + $0x9a8] sm:$0xff]
    %v443 = vld [vmem:[#allocation5 + $0x9b0] sm:$0xff]
    %v444 = vld [vmem:[#allocation5 + $0x9b8] sm:$0xff]
    %v445 = vld [vmem:[#allocation5 + $0x9c0] sm:$0xff]
    %v446 = vld [vmem:[#allocation5 + $0x9c8] sm:$0xff]
    %v447 = vld [vmem:[#allocation5 + $0x9d0] sm:$0xff]
    %v448 = vld [vmem:[#allocation5 + $0x9d8] sm:$0xff]
    %v449 = vld [vmem:[#allocation5 + $0x9e0] sm:$0xff]
    %v450 = vld [vmem:[#allocation5 + $0x9e8] sm:$0xff]
    %v451 = vld [vmem:[#allocation5 + $0x9f0] sm:$0xff]
    %v452 = vld [vmem:[#allocation5 + $0x9f8] sm:$0xff]
    %v453 = vld [vmem:[#allocation5 + $0xa00] sm:$0xff]
    %v454 = vld [vmem:[#allocation5 + $0xa08] sm:$0xff]
    %v455 = vld [vmem:[#allocation5 + $0xa10] sm:$0xff]
    %v456 = vld [vmem:[#allocation5 + $0xa18] sm:$0xff]
    %v457 = vld [vmem:[#allocation5 + $0xa20] sm:$0xff]
    %v458 = vld [vmem:[#allocation5 + $0xa28] sm:$0xff]
    %v459 = vld [vmem:[#allocation5 + $0xa30] sm:$0xff]
    %v460 = vld [vmem:[#allocation5 + $0xa38] sm:$0xff]
    %v461 = vld [vmem:[#allocation5 + $0xa40] sm:$0xff]
    %v462 = vld [vmem:[#allocation5 + $0xa48] sm:$0xff]
    %v463 = vld [vmem:[#allocation5 + $0xa50] sm:$0xff]
    %v464 = vld [vmem:[#allocation5 + $0xa58] sm:$0xff]
    %v465 = vld [vmem:[#allocation5 + $0xa60] sm:$0xff]
    %v466 = vld [vmem:[#allocation5 + $0xa68] sm:$0xff]
    %v467 = vld [vmem:[#allocation5 + $0xa70] sm:$0xff]
    %v468 = vld [vmem:[#allocation5 + $0xa78] sm:$0xff]
    %v469 = vld [vmem:[#allocation5 + $0xa80] sm:$0xff]
    %v470 = vld [vmem:[#allocation5 + $0xa88] sm:$0xff]
    %v471 = vld [vmem:[#allocation5 + $0xa90] sm:$0xff]
    %v472 = vld [vmem:[#allocation5 + $0xa98] sm:$0xff]
    %v473 = vld [vmem:[#allocation5 + $0xaa0] sm:$0xff]
    %v474 = vld [vmem:[#allocation5 + $0xaa8] sm:$0xff]
    %v475 = vld [vmem:[#allocation5 + $0xab0] sm:$0xff]
    %v476 = vld [vmem:[#allocation5 + $0xab8] sm:$0xff]
    %v477 = vld [vmem:[#allocation5 + $0xac0] sm:$0xff]
    %v478 = vld [vmem:[#allocation5 + $0xac8] sm:$0xff]
    %v479 = vld [vmem:[#allocation5 + $0xad0] sm:$0xff]
    %v480 = vld [vmem:[#allocation5 + $0xad8] sm:$0xff]
    %v481 = vld [vmem:[#allocation5 + $0xae0] sm:$0xff]
    %v482 = vld [vmem:[#allocation5 + $0xae8] sm:$0xff]
    %v483 = vld [vmem:[#allocation5 + $0xaf0] sm:$0xff]
    %v484 = vld [vmem:[#allocation5 + $0xaf8] sm:$0xff]
    %v485 = vld [vmem:[#allocation5 + $0xb00] sm:$0xff]
    %v486 = vld [vmem:[#allocation5 + $0xb08] sm:$0xff]
    %v487 = vld [vmem:[#allocation5 + $0xb10] sm:$0xff]
    %v488 = vld [vmem:[#allocation5 + $0xb18] sm:$0xff]
    %v489 = vld [vmem:[#allocation5 + $0xb20] sm:$0xff]
    %v490 = vld [vmem:[#allocation5 + $0xb28] sm:$0xff]
    %v491 = vld [vmem:[#allocation5 + $0xb30] sm:$0xff]
    %v492 = vld [vmem:[#allocation5 + $0xb38] sm:$0xff]
    %v493 = vld [vmem:[#allocation5 + $0xb40] sm:$0xff]
    %v494 = vld [vmem:[#allocation5 + $0xb48] sm:$0xff]
    %v495 = vld [vmem:[#allocation5 + $0xb50] sm:$0xff]
    %v496 = vld [vmem:[#allocation5 + $0xb58] sm:$0xff]
    %v497 = vld [vmem:[#allocation5 + $0xb60] sm:$0xff]
    %v498 = vld [vmem:[#allocation5 + $0xb68] sm:$0xff]
    %v499 = vld [vmem:[#allocation5 + $0xb70] sm:$0xff]
    %v500 = vld [vmem:[#allocation5 + $0xb78] sm:$0xff]
    %v501 = vld [vmem:[#allocation5 + $0xb80] sm:$0xff]
    %v502 = vld [vmem:[#allocation5 + $0xb88] sm:$0xff]
    %v503 = vld [vmem:[#allocation5 + $0xb90] sm:$0xff]
    %v504 = vld [vmem:[#allocation5 + $0xb98] sm:$0xff]
    %v505 = vld [vmem:[#allocation5 + $0xba0] sm:$0xff]
    %v506 = vld [vmem:[#allocation5 + $0xba8] sm:$0xff]
    %v507 = vld [vmem:[#allocation5 + $0xbb0] sm:$0xff]
    %v508 = vld [vmem:[#allocation5 + $0xbb8] sm:$0xff]
    %v509 = vld [vmem:[#allocation5 + $0xbc0] sm:$0xff]
    %v510 = vld [vmem:[#allocation5 + $0xbc8] sm:$0xff]
    %v511 = vld [vmem:[#allocation5 + $0xbd0] sm:$0xff]
    %v512 = vld [vmem:[#allocation5 + $0xbd8] sm:$0xff]
    %v513 = vld [vmem:[#allocation5 + $0xbe0] sm:$0xff]
    %v514 = vld [vmem:[#allocation5 + $0xbe8] sm:$0xff]
    %v515 = vld [vmem:[#allocation5 + $0xbf0] sm:$0xff]
    %v516 = vld [vmem:[#allocation5 + $0xbf8] sm:$0xff]
    %v517 = vld [vmem:[#allocation5 + $0xc00] sm:$0xff]
    %v518 = vld [vmem:[#allocation5 + $0xc08] sm:$0xff]
    %v519 = vld [vmem:[#allocation5 + $0xc10] sm:$0xff]
    %v520 = vld [vmem:[#allocation5 + $0xc18] sm:$0xff]
    %v521 = vld [vmem:[#allocation5 + $0xc20] sm:$0xff]
    %v522 = vld [vmem:[#allocation5 + $0xc28] sm:$0xff]
    %v523 = vld [vmem:[#allocation5 + $0xc30] sm:$0xff]
    %v524 = vld [vmem:[#allocation5 + $0xc38] sm:$0xff]
    %v525 = vld [vmem:[#allocation5 + $0xc40] sm:$0xff]
    %v526 = vld [vmem:[#allocation5 + $0xc48] sm:$0xff]
    %v527 = vld [vmem:[#allocation5 + $0xc50] sm:$0xff]
    %v528 = vld [vmem:[#allocation5 + $0xc58] sm:$0xff]
    %v529 = vld [vmem:[#allocation5 + $0xc60] sm:$0xff]
    %v530 = vld [vmem:[#allocation5 + $0xc68] sm:$0xff]
    %v531 = vld [vmem:[#allocation5 + $0xc70] sm:$0xff]
    %v532 = vld [vmem:[#allocation5 + $0xc78] sm:$0xff]
    %v533 = vld [vmem:[#allocation5 + $0xc80] sm:$0xff]
    %v534 = vld [vmem:[#allocation5 + $0xc88] sm:$0xff]
    %v535 = vld [vmem:[#allocation5 + $0xc90] sm:$0xff]
    %v536 = vld [vmem:[#allocation5 + $0xc98] sm:$0xff]
    %v537 = vld [vmem:[#allocation5 + $0xca0] sm:$0xff]
    %v538 = vld [vmem:[#allocation5 + $0xca8] sm:$0xff]
    %v539 = vld [vmem:[#allocation5 + $0xcb0] sm:$0xff]
    %v540 = vld [vmem:[#allocation5 + $0xcb8] sm:$0xff]
    %v541 = vld [vmem:[#allocation5 + $0xcc0] sm:$0xff]
    %v542 = vld [vmem:[#allocation5 + $0xcc8] sm:$0xff]
    %v543 = vld [vmem:[#allocation5 + $0xcd0] sm:$0xff]
    %v544 = vld [vmem:[#allocation5 + $0xcd8] sm:$0xff]
    %v545 = vld [vmem:[#allocation5 + $0xce0] sm:$0xff]
    %v546 = vld [vmem:[#allocation5 + $0xce8] sm:$0xff]
    %v547 = vld [vmem:[#allocation5 + $0xcf0] sm:$0xff]
    %v548 = vld [vmem:[#allocation5 + $0xcf8] sm:$0xff]
    %v549 = vld [vmem:[#allocation5 + $0xd00] sm:$0xff]
    %v550 = vld [vmem:[#allocation5 + $0xd08] sm:$0xff]
    %v551 = vld [vmem:[#allocation5 + $0xd10] sm:$0xff]
    %v552 = vld [vmem:[#allocation5 + $0xd18] sm:$0xff]
    %v553 = vld [vmem:[#allocation5 + $0xd20] sm:$0xff]
    %v554 = vld [vmem:[#allocation5 + $0xd28] sm:$0xff]
    %v555 = vld [vmem:[#allocation5 + $0xd30] sm:$0xff]
    %v556 = vld [vmem:[#allocation5 + $0xd38] sm:$0xff]
    %v557 = vld [vmem:[#allocation5 + $0xd40] sm:$0xff]
    %v558 = vld [vmem:[#allocation5 + $0xd48] sm:$0xff]
    %v559 = vld [vmem:[#allocation5 + $0xd50] sm:$0xff]
    %v560 = vld [vmem:[#allocation5 + $0xd58] sm:$0xff]
    %v561 = vld [vmem:[#allocation5 + $0xd60] sm:$0xff]
    %v562 = vld [vmem:[#allocation5 + $0xd68] sm:$0xff]
    %v563 = vld [vmem:[#allocation5 + $0xd70] sm:$0xff]
    %v564 = vld [vmem:[#allocation5 + $0xd78] sm:$0xff]
    %v565 = vld [vmem:[#allocation5 + $0xd80] sm:$0xff]
    %v566 = vld [vmem:[#allocation5 + $0xd88] sm:$0xff]
    %v567 = vld [vmem:[#allocation5 + $0xd90] sm:$0xff]
    %v568 = vld [vmem:[#allocation5 + $0xd98] sm:$0xff]
    %v569 = vld [vmem:[#allocation5 + $0xda0] sm:$0xff]
    %v570 = vld [vmem:[#allocation5 + $0xda8] sm:$0xff]
    %v571 = vld [vmem:[#allocation5 + $0xdb0] sm:$0xff]
    %v572 = vld [vmem:[#allocation5 + $0xdb8] sm:$0xff]
    %v573 = vld [vmem:[#allocation5 + $0xdc0] sm:$0xff]
    %v574 = vld [vmem:[#allocation5 + $0xdc8] sm:$0xff]
    %v575 = vld [vmem:[#allocation5 + $0xdd0] sm:$0xff]
    %v576 = vld [vmem:[#allocation5 + $0xdd8] sm:$0xff]
    %v577 = vld [vmem:[#allocation5 + $0xde0] sm:$0xff]
    %v578 = vld [vmem:[#allocation5 + $0xde8] sm:$0xff]
    %v579 = vld [vmem:[#allocation5 + $0xdf0] sm:$0xff]
    %v580 = vld [vmem:[#allocation5 + $0xdf8] sm:$0xff]
    %v581 = vld [vmem:[#allocation5 + $0xe00] sm:$0xff]
    %v582 = vld [vmem:[#allocation5 + $0xe08] sm:$0xff]
    %v583 = vld [vmem:[#allocation5 + $0xe10] sm:$0xff]
    %v584 = vld [vmem:[#allocation5 + $0xe18] sm:$0xff]
    %v585 = vld [vmem:[#allocation5 + $0xe20] sm:$0xff]
    %v586 = vld [vmem:[#allocation5 + $0xe28] sm:$0xff]
    %v587 = vld [vmem:[#allocation5 + $0xe30] sm:$0xff]
    %v588 = vld [vmem:[#allocation5 + $0xe38] sm:$0xff]
    %v589 = vld [vmem:[#allocation5 + $0xe40] sm:$0xff]
    %v590 = vld [vmem:[#allocation5 + $0xe48] sm:$0xff]
    %v591 = vld [vmem:[#allocation5 + $0xe50] sm:$0xff]
    %v592 = vld [vmem:[#allocation5 + $0xe58] sm:$0xff]
    %v593 = vld [vmem:[#allocation5 + $0xe60] sm:$0xff]
    %v594 = vld [vmem:[#allocation5 + $0xe68] sm:$0xff]
    %v595 = vld [vmem:[#allocation5 + $0xe70] sm:$0xff]
    %v596 = vld [vmem:[#allocation5 + $0xe78] sm:$0xff]
    %v597 = vld [vmem:[#allocation5 + $0xe80] sm:$0xff]
    %v598 = vld [vmem:[#allocation5 + $0xe88] sm:$0xff]
    %v599 = vld [vmem:[#allocation5 + $0xe90] sm:$0xff]
    %v600 = vld [vmem:[#allocation5 + $0xe98] sm:$0xff]
    %v601 = vld [vmem:[#allocation5 + $0xea0] sm:$0xff]
    %v602 = vld [vmem:[#allocation5 + $0xea8] sm:$0xff]
    %v603 = vld [vmem:[#allocation5 + $0xeb0] sm:$0xff]
    %v604 = vld [vmem:[#allocation5 + $0xeb8] sm:$0xff]
    %v605 = vld [vmem:[#allocation5 + $0xec0] sm:$0xff]
    %v606 = vld [vmem:[#allocation5 + $0xec8] sm:$0xff]
    %v607 = vld [vmem:[#allocation5 + $0xed0] sm:$0xff]
    %v608 = vld [vmem:[#allocation5 + $0xed8] sm:$0xff]
    %v609 = vld [vmem:[#allocation5 + $0xee0] sm:$0xff]
    %v610 = vld [vmem:[#allocation5 + $0xee8] sm:$0xff]
    %v611 = vld [vmem:[#allocation5 + $0xef0] sm:$0xff]
    %v612 = vld [vmem:[#allocation5 + $0xef8] sm:$0xff]
    %v613 = vld [vmem:[#allocation5 + $0xf00] sm:$0xff]
    %v614 = vld [vmem:[#allocation5 + $0xf08] sm:$0xff]
    %v615 = vld [vmem:[#allocation5 + $0xf10] sm:$0xff]
    %v616 = vld [vmem:[#allocation5 + $0xf18] sm:$0xff]
    %v617 = vld [vmem:[#allocation5 + $0xf20] sm:$0xff]
    %v618 = vld [vmem:[#allocation5 + $0xf28] sm:$0xff]
    %v619 = vld [vmem:[#allocation5 + $0xf30] sm:$0xff]
    %v620 = vld [vmem:[#allocation5 + $0xf38] sm:$0xff]
    %v621 = vld [vmem:[#allocation5 + $0xf40] sm:$0xff]
    %v622 = vld [vmem:[#allocation5 + $0xf48] sm:$0xff]
    %v623 = vld [vmem:[#allocation5 + $0xf50] sm:$0xff]
    %v624 = vld [vmem:[#allocation5 + $0xf58] sm:$0xff]
    %v625 = vld [vmem:[#allocation5 + $0xf60] sm:$0xff]
    %v626 = vld [vmem:[#allocation5 + $0xf68] sm:$0xff]
    %v627 = vld [vmem:[#allocation5 + $0xf70] sm:$0xff]
    %v628 = vld [vmem:[#allocation5 + $0xf78] sm:$0xff]
    %v629 = vld [vmem:[#allocation5 + $0xf80] sm:$0xff]
    %v630 = vld [vmem:[#allocation5 + $0xf88] sm:$0xff]
    %v631 = vld [vmem:[#allocation5 + $0xf90] sm:$0xff]
    %v632 = vld [vmem:[#allocation5 + $0xf98] sm:$0xff]
    %v633 = vld [vmem:[#allocation5 + $0xfa0] sm:$0xff]
    %v634 = vld [vmem:[#allocation5 + $0xfa8] sm:$0xff]
    %v635 = vld [vmem:[#allocation5 + $0xfb0] sm:$0xff]
    %v636 = vld [vmem:[#allocation5 + $0xfb8] sm:$0xff]
    %v637 = vld [vmem:[#allocation5 + $0xfc0] sm:$0xff]
    %v638 = vld [vmem:[#allocation5 + $0xfc8] sm:$0xff]
    %v639 = vld [vmem:[#allocation5 + $0xfd0] sm:$0xff]
    %v640 = vld [vmem:[#allocation5 + $0xfd8] sm:$0xff]
    %v641 = vld [vmem:[#allocation5 + $0xfe0] sm:$0xff]
    %v642 = vld [vmem:[#allocation5 + $0xfe8] sm:$0xff]
    %v643 = vld [vmem:[#allocation5 + $0xff0] sm:$0xff]
    %v644 = vld [vmem:[#allocation5 + $0xff8] sm:$0xff]
    %v645 = vld [vmem:[#allocation7] sm:$0xff]
    %v647 = vlaneseq
    %v648 = vshrl.u32 %v647, 7
    %v649 = vsub.s32 0, %v648
    %v650 = vrot.slane %v645, %v649
    %v651 = vlaneseq
    %v652 = vshrl.u32 %v651, 7
    %v653 = vsub.s32 1, %v652
    %v654 = vrot.slane %v645, %v653
    %v655 = vlaneseq
    %v656 = vshrl.u32 %v655, 7
    %v657 = vsub.s32 2, %v656
    %v658 = vrot.slane %v645, %v657
    %v659 = vlaneseq
    %v660 = vshrl.u32 %v659, 7
    %v661 = vsub.s32 3, %v660
    %v662 = vrot.slane %v645, %v661
    %v663 = vlaneseq
    %v664 = vshrl.u32 %v663, 7
    %v665 = vsub.s32 4, %v664
    %v666 = vrot.slane %v645, %v665
    %v667 = vlaneseq
    %v668 = vshrl.u32 %v667, 7
    %v669 = vsub.s32 5, %v668
    %v670 = vrot.slane %v645, %v669
    %v671 = vlaneseq
    %v672 = vshrl.u32 %v671, 7
    %v673 = vsub.s32 6, %v672
    %v674 = vrot.slane %v645, %v673
    %v675 = vlaneseq
    %v676 = vshrl.u32 %v675, 7
    %v677 = vsub.s32 7, %v676
    %v678 = vrot.slane %v645, %v677
    %v1199 = vunpack.c.l.b16 %v133
    %v1200 = vunpack.c.h.b16 %v133
    %v1201 = vunpack.c.l.b16 %v134
    %v1202 = vunpack.c.h.b16 %v134
    %v1203 = vunpack.c.l.b16 %v135
    %v1204 = vunpack.c.h.b16 %v135
    %v1205 = vunpack.c.l.b16 %v136
    %v1206 = vunpack.c.h.b16 %v136
    %v1207 = vunpack.c.l.b16 %v137
    %v1208 = vunpack.c.h.b16 %v137
    %v1209 = vunpack.c.l.b16 %v138
    %v1210 = vunpack.c.h.b16 %v138
    %v1211 = vunpack.c.l.b16 %v139
    %v1212 = vunpack.c.h.b16 %v139
    %v1213 = vunpack.c.l.b16 %v140
    %v1214 = vunpack.c.h.b16 %v140
    %v1215 = vunpack.c.l.b16 %v141
    %v1216 = vunpack.c.h.b16 %v141
    %v1217 = vunpack.c.l.b16 %v142
    %v1218 = vunpack.c.h.b16 %v142
    %v1219 = vunpack.c.l.b16 %v143
    %v1220 = vunpack.c.h.b16 %v143
    %v1221 = vunpack.c.l.b16 %v144
    %v1222 = vunpack.c.h.b16 %v144
    %v1223 = vunpack.c.l.b16 %v145
    %v1224 = vunpack.c.h.b16 %v145
    %v1225 = vunpack.c.l.b16 %v146
    %v1226 = vunpack.c.h.b16 %v146
    %v1227 = vunpack.c.l.b16 %v147
    %v1228 = vunpack.c.h.b16 %v147
    %v1229 = vunpack.c.l.b16 %v148
    %v1230 = vunpack.c.h.b16 %v148
    %v1231 = vunpack.c.l.b16 %v149
    %v1232 = vunpack.c.h.b16 %v149
    %v1233 = vunpack.c.l.b16 %v150
    %v1234 = vunpack.c.h.b16 %v150
    %v1235 = vunpack.c.l.b16 %v151
    %v1236 = vunpack.c.h.b16 %v151
    %v1237 = vunpack.c.l.b16 %v152
    %v1238 = vunpack.c.h.b16 %v152
    %v1239 = vunpack.c.l.b16 %v153
    %v1240 = vunpack.c.h.b16 %v153
    %v1241 = vunpack.c.l.b16 %v154
    %v1242 = vunpack.c.h.b16 %v154
    %v1243 = vunpack.c.l.b16 %v155
    %v1244 = vunpack.c.h.b16 %v155
    %v1245 = vunpack.c.l.b16 %v156
    %v1246 = vunpack.c.h.b16 %v156
    %v1247 = vunpack.c.l.b16 %v157
    %v1248 = vunpack.c.h.b16 %v157
    %v1249 = vunpack.c.l.b16 %v158
    %v1250 = vunpack.c.h.b16 %v158
    %v1251 = vunpack.c.l.b16 %v159
    %v1252 = vunpack.c.h.b16 %v159
    %v1253 = vunpack.c.l.b16 %v160
    %v1254 = vunpack.c.h.b16 %v160
    %v1255 = vunpack.c.l.b16 %v161
    %v1256 = vunpack.c.h.b16 %v161
    %v1257 = vunpack.c.l.b16 %v162
    %v1258 = vunpack.c.h.b16 %v162
    %v1259 = vunpack.c.l.b16 %v163
    %v1260 = vunpack.c.h.b16 %v163
    %v1261 = vunpack.c.l.b16 %v164
    %v1262 = vunpack.c.h.b16 %v164
    %v1263 = vunpack.c.l.b16 %v165
    %v1264 = vunpack.c.h.b16 %v165
    %v1265 = vunpack.c.l.b16 %v166
    %v1266 = vunpack.c.h.b16 %v166
    %v1267 = vunpack.c.l.b16 %v167
    %v1268 = vunpack.c.h.b16 %v167
    %v1269 = vunpack.c.l.b16 %v168
    %v1270 = vunpack.c.h.b16 %v168
    %v1271 = vunpack.c.l.b16 %v169
    %v1272 = vunpack.c.h.b16 %v169
    %v1273 = vunpack.c.l.b16 %v170
    %v1274 = vunpack.c.h.b16 %v170
    %v1275 = vunpack.c.l.b16 %v171
    %v1276 = vunpack.c.h.b16 %v171
    %v1277 = vunpack.c.l.b16 %v172
    %v1278 = vunpack.c.h.b16 %v172
    %v1279 = vunpack.c.l.b16 %v173
    %v1280 = vunpack.c.h.b16 %v173
    %v1281 = vunpack.c.l.b16 %v174
    %v1282 = vunpack.c.h.b16 %v174
    %v1283 = vunpack.c.l.b16 %v175
    %v1284 = vunpack.c.h.b16 %v175
    %v1285 = vunpack.c.l.b16 %v176
    %v1286 = vunpack.c.h.b16 %v176
    %v1287 = vunpack.c.l.b16 %v177
    %v1288 = vunpack.c.h.b16 %v177
    %v1289 = vunpack.c.l.b16 %v178
    %v1290 = vunpack.c.h.b16 %v178
    %v1291 = vunpack.c.l.b16 %v179
    %v1292 = vunpack.c.h.b16 %v179
    %v1293 = vunpack.c.l.b16 %v180
    %v1294 = vunpack.c.h.b16 %v180
    %v1295 = vunpack.c.l.b16 %v181
    %v1296 = vunpack.c.h.b16 %v181
    %v1297 = vunpack.c.l.b16 %v182
    %v1298 = vunpack.c.h.b16 %v182
    %v1299 = vunpack.c.l.b16 %v183
    %v1300 = vunpack.c.h.b16 %v183
    %v1301 = vunpack.c.l.b16 %v184
    %v1302 = vunpack.c.h.b16 %v184
    %v1303 = vunpack.c.l.b16 %v185
    %v1304 = vunpack.c.h.b16 %v185
    %v1305 = vunpack.c.l.b16 %v186
    %v1306 = vunpack.c.h.b16 %v186
    %v1307 = vunpack.c.l.b16 %v187
    %v1308 = vunpack.c.h.b16 %v187
    %v1309 = vunpack.c.l.b16 %v188
    %v1310 = vunpack.c.h.b16 %v188
    %v1311 = vunpack.c.l.b16 %v189
    %v1312 = vunpack.c.h.b16 %v189
    %v1313 = vunpack.c.l.b16 %v190
    %v1314 = vunpack.c.h.b16 %v190
    %v1315 = vunpack.c.l.b16 %v191
    %v1316 = vunpack.c.h.b16 %v191
    %v1317 = vunpack.c.l.b16 %v192
    %v1318 = vunpack.c.h.b16 %v192
    %v1319 = vunpack.c.l.b16 %v193
    %v1320 = vunpack.c.h.b16 %v193
    %v1321 = vunpack.c.l.b16 %v194
    %v1322 = vunpack.c.h.b16 %v194
    %v1323 = vunpack.c.l.b16 %v195
    %v1324 = vunpack.c.h.b16 %v195
    %v1325 = vunpack.c.l.b16 %v196
    %v1326 = vunpack.c.h.b16 %v196
    %v1327 = vunpack.c.l.b16 %v197
    %v1328 = vunpack.c.h.b16 %v197
    %v1329 = vunpack.c.l.b16 %v198
    %v1330 = vunpack.c.h.b16 %v198
    %v1331 = vunpack.c.l.b16 %v199
    %v1332 = vunpack.c.h.b16 %v199
    %v1333 = vunpack.c.l.b16 %v200
    %v1334 = vunpack.c.h.b16 %v200
    %v1335 = vunpack.c.l.b16 %v201
    %v1336 = vunpack.c.h.b16 %v201
    %v1337 = vunpack.c.l.b16 %v202
    %v1338 = vunpack.c.h.b16 %v202
    %v1339 = vunpack.c.l.b16 %v203
    %v1340 = vunpack.c.h.b16 %v203
    %v1341 = vunpack.c.l.b16 %v204
    %v1342 = vunpack.c.h.b16 %v204
    %v1343 = vunpack.c.l.b16 %v205
    %v1344 = vunpack.c.h.b16 %v205
    %v1345 = vunpack.c.l.b16 %v206
    %v1346 = vunpack.c.h.b16 %v206
    %v1347 = vunpack.c.l.b16 %v207
    %v1348 = vunpack.c.h.b16 %v207
    %v1349 = vunpack.c.l.b16 %v208
    %v1350 = vunpack.c.h.b16 %v208
    %v1351 = vunpack.c.l.b16 %v209
    %v1352 = vunpack.c.h.b16 %v209
    %v1353 = vunpack.c.l.b16 %v210
    %v1354 = vunpack.c.h.b16 %v210
    %v1355 = vunpack.c.l.b16 %v211
    %v1356 = vunpack.c.h.b16 %v211
    %v1357 = vunpack.c.l.b16 %v212
    %v1358 = vunpack.c.h.b16 %v212
    %v1359 = vunpack.c.l.b16 %v213
    %v1360 = vunpack.c.h.b16 %v213
    %v1361 = vunpack.c.l.b16 %v214
    %v1362 = vunpack.c.h.b16 %v214
    %v1363 = vunpack.c.l.b16 %v215
    %v1364 = vunpack.c.h.b16 %v215
    %v1365 = vunpack.c.l.b16 %v216
    %v1366 = vunpack.c.h.b16 %v216
    %v1367 = vunpack.c.l.b16 %v217
    %v1368 = vunpack.c.h.b16 %v217
    %v1369 = vunpack.c.l.b16 %v218
    %v1370 = vunpack.c.h.b16 %v218
    %v1371 = vunpack.c.l.b16 %v219
    %v1372 = vunpack.c.h.b16 %v219
    %v1373 = vunpack.c.l.b16 %v220
    %v1374 = vunpack.c.h.b16 %v220
    %v1375 = vunpack.c.l.b16 %v221
    %v1376 = vunpack.c.h.b16 %v221
    %v1377 = vunpack.c.l.b16 %v222
    %v1378 = vunpack.c.h.b16 %v222
    %v1379 = vunpack.c.l.b16 %v223
    %v1380 = vunpack.c.h.b16 %v223
    %v1381 = vunpack.c.l.b16 %v224
    %v1382 = vunpack.c.h.b16 %v224
    %v1383 = vunpack.c.l.b16 %v225
    %v1384 = vunpack.c.h.b16 %v225
    %v1385 = vunpack.c.l.b16 %v226
    %v1386 = vunpack.c.h.b16 %v226
    %v1387 = vunpack.c.l.b16 %v227
    %v1388 = vunpack.c.h.b16 %v227
    %v1389 = vunpack.c.l.b16 %v228
    %v1390 = vunpack.c.h.b16 %v228
    %v1391 = vunpack.c.l.b16 %v229
    %v1392 = vunpack.c.h.b16 %v229
    %v1393 = vunpack.c.l.b16 %v230
    %v1394 = vunpack.c.h.b16 %v230
    %v1395 = vunpack.c.l.b16 %v231
    %v1396 = vunpack.c.h.b16 %v231
    %v1397 = vunpack.c.l.b16 %v232
    %v1398 = vunpack.c.h.b16 %v232
    %v1399 = vunpack.c.l.b16 %v233
    %v1400 = vunpack.c.h.b16 %v233
    %v1401 = vunpack.c.l.b16 %v234
    %v1402 = vunpack.c.h.b16 %v234
    %v1403 = vunpack.c.l.b16 %v235
    %v1404 = vunpack.c.h.b16 %v235
    %v1405 = vunpack.c.l.b16 %v236
    %v1406 = vunpack.c.h.b16 %v236
    %v1407 = vunpack.c.l.b16 %v237
    %v1408 = vunpack.c.h.b16 %v237
    %v1409 = vunpack.c.l.b16 %v238
    %v1410 = vunpack.c.h.b16 %v238
    %v1411 = vunpack.c.l.b16 %v239
    %v1412 = vunpack.c.h.b16 %v239
    %v1413 = vunpack.c.l.b16 %v240
    %v1414 = vunpack.c.h.b16 %v240
    %v1415 = vunpack.c.l.b16 %v241
    %v1416 = vunpack.c.h.b16 %v241
    %v1417 = vunpack.c.l.b16 %v242
    %v1418 = vunpack.c.h.b16 %v242
    %v1419 = vunpack.c.l.b16 %v243
    %v1420 = vunpack.c.h.b16 %v243
    %v1421 = vunpack.c.l.b16 %v244
    %v1422 = vunpack.c.h.b16 %v244
    %v1423 = vunpack.c.l.b16 %v245
    %v1424 = vunpack.c.h.b16 %v245
    %v1425 = vunpack.c.l.b16 %v246
    %v1426 = vunpack.c.h.b16 %v246
    %v1427 = vunpack.c.l.b16 %v247
    %v1428 = vunpack.c.h.b16 %v247
    %v1429 = vunpack.c.l.b16 %v248
    %v1430 = vunpack.c.h.b16 %v248
    %v1431 = vunpack.c.l.b16 %v249
    %v1432 = vunpack.c.h.b16 %v249
    %v1433 = vunpack.c.l.b16 %v250
    %v1434 = vunpack.c.h.b16 %v250
    %v1435 = vunpack.c.l.b16 %v251
    %v1436 = vunpack.c.h.b16 %v251
    %v1437 = vunpack.c.l.b16 %v252
    %v1438 = vunpack.c.h.b16 %v252
    %v1439 = vunpack.c.l.b16 %v253
    %v1440 = vunpack.c.h.b16 %v253
    %v1441 = vunpack.c.l.b16 %v254
    %v1442 = vunpack.c.h.b16 %v254
    %v1443 = vunpack.c.l.b16 %v255
    %v1444 = vunpack.c.h.b16 %v255
    %v1445 = vunpack.c.l.b16 %v256
    %v1446 = vunpack.c.h.b16 %v256
    %v1447 = vunpack.c.l.b16 %v257
    %v1448 = vunpack.c.h.b16 %v257
    %v1449 = vunpack.c.l.b16 %v258
    %v1450 = vunpack.c.h.b16 %v258
    %v1451 = vunpack.c.l.b16 %v259
    %v1452 = vunpack.c.h.b16 %v259
    %v1453 = vunpack.c.l.b16 %v260
    %v1454 = vunpack.c.h.b16 %v260
    %v1455 = vunpack.c.l.b16 %v261
    %v1456 = vunpack.c.h.b16 %v261
    %v1457 = vunpack.c.l.b16 %v262
    %v1458 = vunpack.c.h.b16 %v262
    %v1459 = vunpack.c.l.b16 %v263
    %v1460 = vunpack.c.h.b16 %v263
    %v1461 = vunpack.c.l.b16 %v264
    %v1462 = vunpack.c.h.b16 %v264
    %v1463 = vunpack.c.l.b16 %v265
    %v1464 = vunpack.c.h.b16 %v265
    %v1465 = vunpack.c.l.b16 %v266
    %v1466 = vunpack.c.h.b16 %v266
    %v1467 = vunpack.c.l.b16 %v267
    %v1468 = vunpack.c.h.b16 %v267
    %v1469 = vunpack.c.l.b16 %v268
    %v1470 = vunpack.c.h.b16 %v268
    %v1471 = vunpack.c.l.b16 %v269
    %v1472 = vunpack.c.h.b16 %v269
    %v1473 = vunpack.c.l.b16 %v270
    %v1474 = vunpack.c.h.b16 %v270
    %v1475 = vunpack.c.l.b16 %v271
    %v1476 = vunpack.c.h.b16 %v271
    %v1477 = vunpack.c.l.b16 %v272
    %v1478 = vunpack.c.h.b16 %v272
    %v1479 = vunpack.c.l.b16 %v273
    %v1480 = vunpack.c.h.b16 %v273
    %v1481 = vunpack.c.l.b16 %v274
    %v1482 = vunpack.c.h.b16 %v274
    %v1483 = vunpack.c.l.b16 %v275
    %v1484 = vunpack.c.h.b16 %v275
    %v1485 = vunpack.c.l.b16 %v276
    %v1486 = vunpack.c.h.b16 %v276
    %v1487 = vunpack.c.l.b16 %v277
    %v1488 = vunpack.c.h.b16 %v277
    %v1489 = vunpack.c.l.b16 %v278
    %v1490 = vunpack.c.h.b16 %v278
    %v1491 = vunpack.c.l.b16 %v279
    %v1492 = vunpack.c.h.b16 %v279
    %v1493 = vunpack.c.l.b16 %v280
    %v1494 = vunpack.c.h.b16 %v280
    %v1495 = vunpack.c.l.b16 %v281
    %v1496 = vunpack.c.h.b16 %v281
    %v1497 = vunpack.c.l.b16 %v282
    %v1498 = vunpack.c.h.b16 %v282
    %v1499 = vunpack.c.l.b16 %v283
    %v1500 = vunpack.c.h.b16 %v283
    %v1501 = vunpack.c.l.b16 %v284
    %v1502 = vunpack.c.h.b16 %v284
    %v1503 = vunpack.c.l.b16 %v285
    %v1504 = vunpack.c.h.b16 %v285
    %v1505 = vunpack.c.l.b16 %v286
    %v1506 = vunpack.c.h.b16 %v286
    %v1507 = vunpack.c.l.b16 %v287
    %v1508 = vunpack.c.h.b16 %v287
    %v1509 = vunpack.c.l.b16 %v288
    %v1510 = vunpack.c.h.b16 %v288
    %v1511 = vunpack.c.l.b16 %v289
    %v1512 = vunpack.c.h.b16 %v289
    %v1513 = vunpack.c.l.b16 %v290
    %v1514 = vunpack.c.h.b16 %v290
    %v1515 = vunpack.c.l.b16 %v291
    %v1516 = vunpack.c.h.b16 %v291
    %v1517 = vunpack.c.l.b16 %v292
    %v1518 = vunpack.c.h.b16 %v292
    %v1519 = vunpack.c.l.b16 %v293
    %v1520 = vunpack.c.h.b16 %v293
    %v1521 = vunpack.c.l.b16 %v294
    %v1522 = vunpack.c.h.b16 %v294
    %v1523 = vunpack.c.l.b16 %v295
    %v1524 = vunpack.c.h.b16 %v295
    %v1525 = vunpack.c.l.b16 %v296
    %v1526 = vunpack.c.h.b16 %v296
    %v1527 = vunpack.c.l.b16 %v297
    %v1528 = vunpack.c.h.b16 %v297
    %v1529 = vunpack.c.l.b16 %v298
    %v1530 = vunpack.c.h.b16 %v298
    %v1531 = vunpack.c.l.b16 %v299
    %v1532 = vunpack.c.h.b16 %v299
    %v1533 = vunpack.c.l.b16 %v300
    %v1534 = vunpack.c.h.b16 %v300
    %v1535 = vunpack.c.l.b16 %v301
    %v1536 = vunpack.c.h.b16 %v301
    %v1537 = vunpack.c.l.b16 %v302
    %v1538 = vunpack.c.h.b16 %v302
    %v1539 = vunpack.c.l.b16 %v303
    %v1540 = vunpack.c.h.b16 %v303
    %v1541 = vunpack.c.l.b16 %v304
    %v1542 = vunpack.c.h.b16 %v304
    %v1543 = vunpack.c.l.b16 %v305
    %v1544 = vunpack.c.h.b16 %v305
    %v1545 = vunpack.c.l.b16 %v306
    %v1546 = vunpack.c.h.b16 %v306
    %v1547 = vunpack.c.l.b16 %v307
    %v1548 = vunpack.c.h.b16 %v307
    %v1549 = vunpack.c.l.b16 %v308
    %v1550 = vunpack.c.h.b16 %v308
    %v1551 = vunpack.c.l.b16 %v309
    %v1552 = vunpack.c.h.b16 %v309
    %v1553 = vunpack.c.l.b16 %v310
    %v1554 = vunpack.c.h.b16 %v310
    %v1555 = vunpack.c.l.b16 %v311
    %v1556 = vunpack.c.h.b16 %v311
    %v1557 = vunpack.c.l.b16 %v312
    %v1558 = vunpack.c.h.b16 %v312
    %v1559 = vunpack.c.l.b16 %v313
    %v1560 = vunpack.c.h.b16 %v313
    %v1561 = vunpack.c.l.b16 %v314
    %v1562 = vunpack.c.h.b16 %v314
    %v1563 = vunpack.c.l.b16 %v315
    %v1564 = vunpack.c.h.b16 %v315
    %v1565 = vunpack.c.l.b16 %v316
    %v1566 = vunpack.c.h.b16 %v316
    %v1567 = vunpack.c.l.b16 %v317
    %v1568 = vunpack.c.h.b16 %v317
    %v1569 = vunpack.c.l.b16 %v318
    %v1570 = vunpack.c.h.b16 %v318
    %v1571 = vunpack.c.l.b16 %v319
    %v1572 = vunpack.c.h.b16 %v319
    %v1573 = vunpack.c.l.b16 %v320
    %v1574 = vunpack.c.h.b16 %v320
    %v1575 = vunpack.c.l.b16 %v321
    %v1576 = vunpack.c.h.b16 %v321
    %v1577 = vunpack.c.l.b16 %v322
    %v1578 = vunpack.c.h.b16 %v322
    %v1579 = vunpack.c.l.b16 %v323
    %v1580 = vunpack.c.h.b16 %v323
    %v1581 = vunpack.c.l.b16 %v324
    %v1582 = vunpack.c.h.b16 %v324
    %v1583 = vunpack.c.l.b16 %v325
    %v1584 = vunpack.c.h.b16 %v325
    %v1585 = vunpack.c.l.b16 %v326
    %v1586 = vunpack.c.h.b16 %v326
    %v1587 = vunpack.c.l.b16 %v327
    %v1588 = vunpack.c.h.b16 %v327
    %v1589 = vunpack.c.l.b16 %v328
    %v1590 = vunpack.c.h.b16 %v328
    %v1591 = vunpack.c.l.b16 %v329
    %v1592 = vunpack.c.h.b16 %v329
    %v1593 = vunpack.c.l.b16 %v330
    %v1594 = vunpack.c.h.b16 %v330
    %v1595 = vunpack.c.l.b16 %v331
    %v1596 = vunpack.c.h.b16 %v331
    %v1597 = vunpack.c.l.b16 %v332
    %v1598 = vunpack.c.h.b16 %v332
    %v1599 = vunpack.c.l.b16 %v333
    %v1600 = vunpack.c.h.b16 %v333
    %v1601 = vunpack.c.l.b16 %v334
    %v1602 = vunpack.c.h.b16 %v334
    %v1603 = vunpack.c.l.b16 %v335
    %v1604 = vunpack.c.h.b16 %v335
    %v1605 = vunpack.c.l.b16 %v336
    %v1606 = vunpack.c.h.b16 %v336
    %v1607 = vunpack.c.l.b16 %v337
    %v1608 = vunpack.c.h.b16 %v337
    %v1609 = vunpack.c.l.b16 %v338
    %v1610 = vunpack.c.h.b16 %v338
    %v1611 = vunpack.c.l.b16 %v339
    %v1612 = vunpack.c.h.b16 %v339
    %v1613 = vunpack.c.l.b16 %v340
    %v1614 = vunpack.c.h.b16 %v340
    %v1615 = vunpack.c.l.b16 %v341
    %v1616 = vunpack.c.h.b16 %v341
    %v1617 = vunpack.c.l.b16 %v342
    %v1618 = vunpack.c.h.b16 %v342
    %v1619 = vunpack.c.l.b16 %v343
    %v1620 = vunpack.c.h.b16 %v343
    %v1621 = vunpack.c.l.b16 %v344
    %v1622 = vunpack.c.h.b16 %v344
    %v1623 = vunpack.c.l.b16 %v345
    %v1624 = vunpack.c.h.b16 %v345
    %v1625 = vunpack.c.l.b16 %v346
    %v1626 = vunpack.c.h.b16 %v346
    %v1627 = vunpack.c.l.b16 %v347
    %v1628 = vunpack.c.h.b16 %v347
    %v1629 = vunpack.c.l.b16 %v348
    %v1630 = vunpack.c.h.b16 %v348
    %v1631 = vunpack.c.l.b16 %v349
    %v1632 = vunpack.c.h.b16 %v349
    %v1633 = vunpack.c.l.b16 %v350
    %v1634 = vunpack.c.h.b16 %v350
    %v1635 = vunpack.c.l.b16 %v351
    %v1636 = vunpack.c.h.b16 %v351
    %v1637 = vunpack.c.l.b16 %v352
    %v1638 = vunpack.c.h.b16 %v352
    %v1639 = vunpack.c.l.b16 %v353
    %v1640 = vunpack.c.h.b16 %v353
    %v1641 = vunpack.c.l.b16 %v354
    %v1642 = vunpack.c.h.b16 %v354
    %v1643 = vunpack.c.l.b16 %v355
    %v1644 = vunpack.c.h.b16 %v355
    %v1645 = vunpack.c.l.b16 %v356
    %v1646 = vunpack.c.h.b16 %v356
    %v1647 = vunpack.c.l.b16 %v357
    %v1648 = vunpack.c.h.b16 %v357
    %v1649 = vunpack.c.l.b16 %v358
    %v1650 = vunpack.c.h.b16 %v358
    %v1651 = vunpack.c.l.b16 %v359
    %v1652 = vunpack.c.h.b16 %v359
    %v1653 = vunpack.c.l.b16 %v360
    %v1654 = vunpack.c.h.b16 %v360
    %v1655 = vunpack.c.l.b16 %v361
    %v1656 = vunpack.c.h.b16 %v361
    %v1657 = vunpack.c.l.b16 %v362
    %v1658 = vunpack.c.h.b16 %v362
    %v1659 = vunpack.c.l.b16 %v363
    %v1660 = vunpack.c.h.b16 %v363
    %v1661 = vunpack.c.l.b16 %v364
    %v1662 = vunpack.c.h.b16 %v364
    %v1663 = vunpack.c.l.b16 %v365
    %v1664 = vunpack.c.h.b16 %v365
    %v1665 = vunpack.c.l.b16 %v366
    %v1666 = vunpack.c.h.b16 %v366
    %v1667 = vunpack.c.l.b16 %v367
    %v1668 = vunpack.c.h.b16 %v367
    %v1669 = vunpack.c.l.b16 %v368
    %v1670 = vunpack.c.h.b16 %v368
    %v1671 = vunpack.c.l.b16 %v369
    %v1672 = vunpack.c.h.b16 %v369
    %v1673 = vunpack.c.l.b16 %v370
    %v1674 = vunpack.c.h.b16 %v370
    %v1675 = vunpack.c.l.b16 %v371
    %v1676 = vunpack.c.h.b16 %v371
    %v1677 = vunpack.c.l.b16 %v372
    %v1678 = vunpack.c.h.b16 %v372
    %v1679 = vunpack.c.l.b16 %v373
    %v1680 = vunpack.c.h.b16 %v373
    %v1681 = vunpack.c.l.b16 %v374
    %v1682 = vunpack.c.h.b16 %v374
    %v1683 = vunpack.c.l.b16 %v375
    %v1684 = vunpack.c.h.b16 %v375
    %v1685 = vunpack.c.l.b16 %v376
    %v1686 = vunpack.c.h.b16 %v376
    %v1687 = vunpack.c.l.b16 %v377
    %v1688 = vunpack.c.h.b16 %v377
    %v1689 = vunpack.c.l.b16 %v378
    %v1690 = vunpack.c.h.b16 %v378
    %v1691 = vunpack.c.l.b16 %v379
    %v1692 = vunpack.c.h.b16 %v379
    %v1693 = vunpack.c.l.b16 %v380
    %v1694 = vunpack.c.h.b16 %v380
    %v1695 = vunpack.c.l.b16 %v381
    %v1696 = vunpack.c.h.b16 %v381
    %v1697 = vunpack.c.l.b16 %v382
    %v1698 = vunpack.c.h.b16 %v382
    %v1699 = vunpack.c.l.b16 %v383
    %v1700 = vunpack.c.h.b16 %v383
    %v1701 = vunpack.c.l.b16 %v384
    %v1702 = vunpack.c.h.b16 %v384
    %v1703 = vunpack.c.l.b16 %v385
    %v1704 = vunpack.c.h.b16 %v385
    %v1705 = vunpack.c.l.b16 %v386
    %v1706 = vunpack.c.h.b16 %v386
    %v1707 = vunpack.c.l.b16 %v387
    %v1708 = vunpack.c.h.b16 %v387
    %v1709 = vunpack.c.l.b16 %v388
    %v1710 = vunpack.c.h.b16 %v388
    %v1711 = vunpack.c.l.b16 %v389
    %v1712 = vunpack.c.h.b16 %v389
    %v1713 = vunpack.c.l.b16 %v390
    %v1714 = vunpack.c.h.b16 %v390
    %v1715 = vunpack.c.l.b16 %v391
    %v1716 = vunpack.c.h.b16 %v391
    %v1717 = vunpack.c.l.b16 %v392
    %v1718 = vunpack.c.h.b16 %v392
    %v1719 = vunpack.c.l.b16 %v393
    %v1720 = vunpack.c.h.b16 %v393
    %v1721 = vunpack.c.l.b16 %v394
    %v1722 = vunpack.c.h.b16 %v394
    %v1723 = vunpack.c.l.b16 %v395
    %v1724 = vunpack.c.h.b16 %v395
    %v1725 = vunpack.c.l.b16 %v396
    %v1726 = vunpack.c.h.b16 %v396
    %v1727 = vunpack.c.l.b16 %v397
    %v1728 = vunpack.c.h.b16 %v397
    %v1729 = vunpack.c.l.b16 %v398
    %v1730 = vunpack.c.h.b16 %v398
    %v1731 = vunpack.c.l.b16 %v399
    %v1732 = vunpack.c.h.b16 %v399
    %v1733 = vunpack.c.l.b16 %v400
    %v1734 = vunpack.c.h.b16 %v400
    %v1735 = vunpack.c.l.b16 %v401
    %v1736 = vunpack.c.h.b16 %v401
    %v1737 = vunpack.c.l.b16 %v402
    %v1738 = vunpack.c.h.b16 %v402
    %v1739 = vunpack.c.l.b16 %v403
    %v1740 = vunpack.c.h.b16 %v403
    %v1741 = vunpack.c.l.b16 %v404
    %v1742 = vunpack.c.h.b16 %v404
    %v1743 = vunpack.c.l.b16 %v405
    %v1744 = vunpack.c.h.b16 %v405
    %v1745 = vunpack.c.l.b16 %v406
    %v1746 = vunpack.c.h.b16 %v406
    %v1747 = vunpack.c.l.b16 %v407
    %v1748 = vunpack.c.h.b16 %v407
    %v1749 = vunpack.c.l.b16 %v408
    %v1750 = vunpack.c.h.b16 %v408
    %v1751 = vunpack.c.l.b16 %v409
    %v1752 = vunpack.c.h.b16 %v409
    %v1753 = vunpack.c.l.b16 %v410
    %v1754 = vunpack.c.h.b16 %v410
    %v1755 = vunpack.c.l.b16 %v411
    %v1756 = vunpack.c.h.b16 %v411
    %v1757 = vunpack.c.l.b16 %v412
    %v1758 = vunpack.c.h.b16 %v412
    %v1759 = vunpack.c.l.b16 %v413
    %v1760 = vunpack.c.h.b16 %v413
    %v1761 = vunpack.c.l.b16 %v414
    %v1762 = vunpack.c.h.b16 %v414
    %v1763 = vunpack.c.l.b16 %v415
    %v1764 = vunpack.c.h.b16 %v415
    %v1765 = vunpack.c.l.b16 %v416
    %v1766 = vunpack.c.h.b16 %v416
    %v1767 = vunpack.c.l.b16 %v417
    %v1768 = vunpack.c.h.b16 %v417
    %v1769 = vunpack.c.l.b16 %v418
    %v1770 = vunpack.c.h.b16 %v418
    %v1771 = vunpack.c.l.b16 %v419
    %v1772 = vunpack.c.h.b16 %v419
    %v1773 = vunpack.c.l.b16 %v420
    %v1774 = vunpack.c.h.b16 %v420
    %v1775 = vunpack.c.l.b16 %v421
    %v1776 = vunpack.c.h.b16 %v421
    %v1777 = vunpack.c.l.b16 %v422
    %v1778 = vunpack.c.h.b16 %v422
    %v1779 = vunpack.c.l.b16 %v423
    %v1780 = vunpack.c.h.b16 %v423
    %v1781 = vunpack.c.l.b16 %v424
    %v1782 = vunpack.c.h.b16 %v424
    %v1783 = vunpack.c.l.b16 %v425
    %v1784 = vunpack.c.h.b16 %v425
    %v1785 = vunpack.c.l.b16 %v426
    %v1786 = vunpack.c.h.b16 %v426
    %v1787 = vunpack.c.l.b16 %v427
    %v1788 = vunpack.c.h.b16 %v427
    %v1789 = vunpack.c.l.b16 %v428
    %v1790 = vunpack.c.h.b16 %v428
    %v1791 = vunpack.c.l.b16 %v429
    %v1792 = vunpack.c.h.b16 %v429
    %v1793 = vunpack.c.l.b16 %v430
    %v1794 = vunpack.c.h.b16 %v430
    %v1795 = vunpack.c.l.b16 %v431
    %v1796 = vunpack.c.h.b16 %v431
    %v1797 = vunpack.c.l.b16 %v432
    %v1798 = vunpack.c.h.b16 %v432
    %v1799 = vunpack.c.l.b16 %v433
    %v1800 = vunpack.c.h.b16 %v433
    %v1801 = vunpack.c.l.b16 %v434
    %v1802 = vunpack.c.h.b16 %v434
    %v1803 = vunpack.c.l.b16 %v435
    %v1804 = vunpack.c.h.b16 %v435
    %v1805 = vunpack.c.l.b16 %v436
    %v1806 = vunpack.c.h.b16 %v436
    %v1807 = vunpack.c.l.b16 %v437
    %v1808 = vunpack.c.h.b16 %v437
    %v1809 = vunpack.c.l.b16 %v438
    %v1810 = vunpack.c.h.b16 %v438
    %v1811 = vunpack.c.l.b16 %v439
    %v1812 = vunpack.c.h.b16 %v439
    %v1813 = vunpack.c.l.b16 %v440
    %v1814 = vunpack.c.h.b16 %v440
    %v1815 = vunpack.c.l.b16 %v441
    %v1816 = vunpack.c.h.b16 %v441
    %v1817 = vunpack.c.l.b16 %v442
    %v1818 = vunpack.c.h.b16 %v442
    %v1819 = vunpack.c.l.b16 %v443
    %v1820 = vunpack.c.h.b16 %v443
    %v1821 = vunpack.c.l.b16 %v444
    %v1822 = vunpack.c.h.b16 %v444
    %v1823 = vunpack.c.l.b16 %v445
    %v1824 = vunpack.c.h.b16 %v445
    %v1825 = vunpack.c.l.b16 %v446
    %v1826 = vunpack.c.h.b16 %v446
    %v1827 = vunpack.c.l.b16 %v447
    %v1828 = vunpack.c.h.b16 %v447
    %v1829 = vunpack.c.l.b16 %v448
    %v1830 = vunpack.c.h.b16 %v448
    %v1831 = vunpack.c.l.b16 %v449
    %v1832 = vunpack.c.h.b16 %v449
    %v1833 = vunpack.c.l.b16 %v450
    %v1834 = vunpack.c.h.b16 %v450
    %v1835 = vunpack.c.l.b16 %v451
    %v1836 = vunpack.c.h.b16 %v451
    %v1837 = vunpack.c.l.b16 %v452
    %v1838 = vunpack.c.h.b16 %v452
    %v1839 = vunpack.c.l.b16 %v453
    %v1840 = vunpack.c.h.b16 %v453
    %v1841 = vunpack.c.l.b16 %v454
    %v1842 = vunpack.c.h.b16 %v454
    %v1843 = vunpack.c.l.b16 %v455
    %v1844 = vunpack.c.h.b16 %v455
    %v1845 = vunpack.c.l.b16 %v456
    %v1846 = vunpack.c.h.b16 %v456
    %v1847 = vunpack.c.l.b16 %v457
    %v1848 = vunpack.c.h.b16 %v457
    %v1849 = vunpack.c.l.b16 %v458
    %v1850 = vunpack.c.h.b16 %v458
    %v1851 = vunpack.c.l.b16 %v459
    %v1852 = vunpack.c.h.b16 %v459
    %v1853 = vunpack.c.l.b16 %v460
    %v1854 = vunpack.c.h.b16 %v460
    %v1855 = vunpack.c.l.b16 %v461
    %v1856 = vunpack.c.h.b16 %v461
    %v1857 = vunpack.c.l.b16 %v462
    %v1858 = vunpack.c.h.b16 %v462
    %v1859 = vunpack.c.l.b16 %v463
    %v1860 = vunpack.c.h.b16 %v463
    %v1861 = vunpack.c.l.b16 %v464
    %v1862 = vunpack.c.h.b16 %v464
    %v1863 = vunpack.c.l.b16 %v465
    %v1864 = vunpack.c.h.b16 %v465
    %v1865 = vunpack.c.l.b16 %v466
    %v1866 = vunpack.c.h.b16 %v466
    %v1867 = vunpack.c.l.b16 %v467
    %v1868 = vunpack.c.h.b16 %v467
    %v1869 = vunpack.c.l.b16 %v468
    %v1870 = vunpack.c.h.b16 %v468
    %v1871 = vunpack.c.l.b16 %v469
    %v1872 = vunpack.c.h.b16 %v469
    %v1873 = vunpack.c.l.b16 %v470
    %v1874 = vunpack.c.h.b16 %v470
    %v1875 = vunpack.c.l.b16 %v471
    %v1876 = vunpack.c.h.b16 %v471
    %v1877 = vunpack.c.l.b16 %v472
    %v1878 = vunpack.c.h.b16 %v472
    %v1879 = vunpack.c.l.b16 %v473
    %v1880 = vunpack.c.h.b16 %v473
    %v1881 = vunpack.c.l.b16 %v474
    %v1882 = vunpack.c.h.b16 %v474
    %v1883 = vunpack.c.l.b16 %v475
    %v1884 = vunpack.c.h.b16 %v475
    %v1885 = vunpack.c.l.b16 %v476
    %v1886 = vunpack.c.h.b16 %v476
    %v1887 = vunpack.c.l.b16 %v477
    %v1888 = vunpack.c.h.b16 %v477
    %v1889 = vunpack.c.l.b16 %v478
    %v1890 = vunpack.c.h.b16 %v478
    %v1891 = vunpack.c.l.b16 %v479
    %v1892 = vunpack.c.h.b16 %v479
    %v1893 = vunpack.c.l.b16 %v480
    %v1894 = vunpack.c.h.b16 %v480
    %v1895 = vunpack.c.l.b16 %v481
    %v1896 = vunpack.c.h.b16 %v481
    %v1897 = vunpack.c.l.b16 %v482
    %v1898 = vunpack.c.h.b16 %v482
    %v1899 = vunpack.c.l.b16 %v483
    %v1900 = vunpack.c.h.b16 %v483
    %v1901 = vunpack.c.l.b16 %v484
    %v1902 = vunpack.c.h.b16 %v484
    %v1903 = vunpack.c.l.b16 %v485
    %v1904 = vunpack.c.h.b16 %v485
    %v1905 = vunpack.c.l.b16 %v486
    %v1906 = vunpack.c.h.b16 %v486
    %v1907 = vunpack.c.l.b16 %v487
    %v1908 = vunpack.c.h.b16 %v487
    %v1909 = vunpack.c.l.b16 %v488
    %v1910 = vunpack.c.h.b16 %v488
    %v1911 = vunpack.c.l.b16 %v489
    %v1912 = vunpack.c.h.b16 %v489
    %v1913 = vunpack.c.l.b16 %v490
    %v1914 = vunpack.c.h.b16 %v490
    %v1915 = vunpack.c.l.b16 %v491
    %v1916 = vunpack.c.h.b16 %v491
    %v1917 = vunpack.c.l.b16 %v492
    %v1918 = vunpack.c.h.b16 %v492
    %v1919 = vunpack.c.l.b16 %v493
    %v1920 = vunpack.c.h.b16 %v493
    %v1921 = vunpack.c.l.b16 %v494
    %v1922 = vunpack.c.h.b16 %v494
    %v1923 = vunpack.c.l.b16 %v495
    %v1924 = vunpack.c.h.b16 %v495
    %v1925 = vunpack.c.l.b16 %v496
    %v1926 = vunpack.c.h.b16 %v496
    %v1927 = vunpack.c.l.b16 %v497
    %v1928 = vunpack.c.h.b16 %v497
    %v1929 = vunpack.c.l.b16 %v498
    %v1930 = vunpack.c.h.b16 %v498
    %v1931 = vunpack.c.l.b16 %v499
    %v1932 = vunpack.c.h.b16 %v499
    %v1933 = vunpack.c.l.b16 %v500
    %v1934 = vunpack.c.h.b16 %v500
    %v1935 = vunpack.c.l.b16 %v501
    %v1936 = vunpack.c.h.b16 %v501
    %v1937 = vunpack.c.l.b16 %v502
    %v1938 = vunpack.c.h.b16 %v502
    %v1939 = vunpack.c.l.b16 %v503
    %v1940 = vunpack.c.h.b16 %v503
    %v1941 = vunpack.c.l.b16 %v504
    %v1942 = vunpack.c.h.b16 %v504
    %v1943 = vunpack.c.l.b16 %v505
    %v1944 = vunpack.c.h.b16 %v505
    %v1945 = vunpack.c.l.b16 %v506
    %v1946 = vunpack.c.h.b16 %v506
    %v1947 = vunpack.c.l.b16 %v507
    %v1948 = vunpack.c.h.b16 %v507
    %v1949 = vunpack.c.l.b16 %v508
    %v1950 = vunpack.c.h.b16 %v508
    %v1951 = vunpack.c.l.b16 %v509
    %v1952 = vunpack.c.h.b16 %v509
    %v1953 = vunpack.c.l.b16 %v510
    %v1954 = vunpack.c.h.b16 %v510
    %v1955 = vunpack.c.l.b16 %v511
    %v1956 = vunpack.c.h.b16 %v511
    %v1957 = vunpack.c.l.b16 %v512
    %v1958 = vunpack.c.h.b16 %v512
    %v1959 = vunpack.c.l.b16 %v513
    %v1960 = vunpack.c.h.b16 %v513
    %v1961 = vunpack.c.l.b16 %v514
    %v1962 = vunpack.c.h.b16 %v514
    %v1963 = vunpack.c.l.b16 %v515
    %v1964 = vunpack.c.h.b16 %v515
    %v1965 = vunpack.c.l.b16 %v516
    %v1966 = vunpack.c.h.b16 %v516
    %v1967 = vunpack.c.l.b16 %v517
    %v1968 = vunpack.c.h.b16 %v517
    %v1969 = vunpack.c.l.b16 %v518
    %v1970 = vunpack.c.h.b16 %v518
    %v1971 = vunpack.c.l.b16 %v519
    %v1972 = vunpack.c.h.b16 %v519
    %v1973 = vunpack.c.l.b16 %v520
    %v1974 = vunpack.c.h.b16 %v520
    %v1975 = vunpack.c.l.b16 %v521
    %v1976 = vunpack.c.h.b16 %v521
    %v1977 = vunpack.c.l.b16 %v522
    %v1978 = vunpack.c.h.b16 %v522
    %v1979 = vunpack.c.l.b16 %v523
    %v1980 = vunpack.c.h.b16 %v523
    %v1981 = vunpack.c.l.b16 %v524
    %v1982 = vunpack.c.h.b16 %v524
    %v1983 = vunpack.c.l.b16 %v525
    %v1984 = vunpack.c.h.b16 %v525
    %v1985 = vunpack.c.l.b16 %v526
    %v1986 = vunpack.c.h.b16 %v526
    %v1987 = vunpack.c.l.b16 %v527
    %v1988 = vunpack.c.h.b16 %v527
    %v1989 = vunpack.c.l.b16 %v528
    %v1990 = vunpack.c.h.b16 %v528
    %v1991 = vunpack.c.l.b16 %v529
    %v1992 = vunpack.c.h.b16 %v529
    %v1993 = vunpack.c.l.b16 %v530
    %v1994 = vunpack.c.h.b16 %v530
    %v1995 = vunpack.c.l.b16 %v531
    %v1996 = vunpack.c.h.b16 %v531
    %v1997 = vunpack.c.l.b16 %v532
    %v1998 = vunpack.c.h.b16 %v532
    %v1999 = vunpack.c.l.b16 %v533
    %v2000 = vunpack.c.h.b16 %v533
    %v2001 = vunpack.c.l.b16 %v534
    %v2002 = vunpack.c.h.b16 %v534
    %v2003 = vunpack.c.l.b16 %v535
    %v2004 = vunpack.c.h.b16 %v535
    %v2005 = vunpack.c.l.b16 %v536
    %v2006 = vunpack.c.h.b16 %v536
    %v2007 = vunpack.c.l.b16 %v537
    %v2008 = vunpack.c.h.b16 %v537
    %v2009 = vunpack.c.l.b16 %v538
    %v2010 = vunpack.c.h.b16 %v538
    %v2011 = vunpack.c.l.b16 %v539
    %v2012 = vunpack.c.h.b16 %v539
    %v2013 = vunpack.c.l.b16 %v540
    %v2014 = vunpack.c.h.b16 %v540
    %v2015 = vunpack.c.l.b16 %v541
    %v2016 = vunpack.c.h.b16 %v541
    %v2017 = vunpack.c.l.b16 %v542
    %v2018 = vunpack.c.h.b16 %v542
    %v2019 = vunpack.c.l.b16 %v543
    %v2020 = vunpack.c.h.b16 %v543
    %v2021 = vunpack.c.l.b16 %v544
    %v2022 = vunpack.c.h.b16 %v544
    %v2023 = vunpack.c.l.b16 %v545
    %v2024 = vunpack.c.h.b16 %v545
    %v2025 = vunpack.c.l.b16 %v546
    %v2026 = vunpack.c.h.b16 %v546
    %v2027 = vunpack.c.l.b16 %v547
    %v2028 = vunpack.c.h.b16 %v547
    %v2029 = vunpack.c.l.b16 %v548
    %v2030 = vunpack.c.h.b16 %v548
    %v2031 = vunpack.c.l.b16 %v549
    %v2032 = vunpack.c.h.b16 %v549
    %v2033 = vunpack.c.l.b16 %v550
    %v2034 = vunpack.c.h.b16 %v550
    %v2035 = vunpack.c.l.b16 %v551
    %v2036 = vunpack.c.h.b16 %v551
    %v2037 = vunpack.c.l.b16 %v552
    %v2038 = vunpack.c.h.b16 %v552
    %v2039 = vunpack.c.l.b16 %v553
    %v2040 = vunpack.c.h.b16 %v553
    %v2041 = vunpack.c.l.b16 %v554
    %v2042 = vunpack.c.h.b16 %v554
    %v2043 = vunpack.c.l.b16 %v555
    %v2044 = vunpack.c.h.b16 %v555
    %v2045 = vunpack.c.l.b16 %v556
    %v2046 = vunpack.c.h.b16 %v556
    %v2047 = vunpack.c.l.b16 %v557
    %v2048 = vunpack.c.h.b16 %v557
    %v2049 = vunpack.c.l.b16 %v558
    %v2050 = vunpack.c.h.b16 %v558
    %v2051 = vunpack.c.l.b16 %v559
    %v2052 = vunpack.c.h.b16 %v559
    %v2053 = vunpack.c.l.b16 %v560
    %v2054 = vunpack.c.h.b16 %v560
    %v2055 = vunpack.c.l.b16 %v561
    %v2056 = vunpack.c.h.b16 %v561
    %v2057 = vunpack.c.l.b16 %v562
    %v2058 = vunpack.c.h.b16 %v562
    %v2059 = vunpack.c.l.b16 %v563
    %v2060 = vunpack.c.h.b16 %v563
    %v2061 = vunpack.c.l.b16 %v564
    %v2062 = vunpack.c.h.b16 %v564
    %v2063 = vunpack.c.l.b16 %v565
    %v2064 = vunpack.c.h.b16 %v565
    %v2065 = vunpack.c.l.b16 %v566
    %v2066 = vunpack.c.h.b16 %v566
    %v2067 = vunpack.c.l.b16 %v567
    %v2068 = vunpack.c.h.b16 %v567
    %v2069 = vunpack.c.l.b16 %v568
    %v2070 = vunpack.c.h.b16 %v568
    %v2071 = vunpack.c.l.b16 %v569
    %v2072 = vunpack.c.h.b16 %v569
    %v2073 = vunpack.c.l.b16 %v570
    %v2074 = vunpack.c.h.b16 %v570
    %v2075 = vunpack.c.l.b16 %v571
    %v2076 = vunpack.c.h.b16 %v571
    %v2077 = vunpack.c.l.b16 %v572
    %v2078 = vunpack.c.h.b16 %v572
    %v2079 = vunpack.c.l.b16 %v573
    %v2080 = vunpack.c.h.b16 %v573
    %v2081 = vunpack.c.l.b16 %v574
    %v2082 = vunpack.c.h.b16 %v574
    %v2083 = vunpack.c.l.b16 %v575
    %v2084 = vunpack.c.h.b16 %v575
    %v2085 = vunpack.c.l.b16 %v576
    %v2086 = vunpack.c.h.b16 %v576
    %v2087 = vunpack.c.l.b16 %v577
    %v2088 = vunpack.c.h.b16 %v577
    %v2089 = vunpack.c.l.b16 %v578
    %v2090 = vunpack.c.h.b16 %v578
    %v2091 = vunpack.c.l.b16 %v579
    %v2092 = vunpack.c.h.b16 %v579
    %v2093 = vunpack.c.l.b16 %v580
    %v2094 = vunpack.c.h.b16 %v580
    %v2095 = vunpack.c.l.b16 %v581
    %v2096 = vunpack.c.h.b16 %v581
    %v2097 = vunpack.c.l.b16 %v582
    %v2098 = vunpack.c.h.b16 %v582
    %v2099 = vunpack.c.l.b16 %v583
    %v2100 = vunpack.c.h.b16 %v583
    %v2101 = vunpack.c.l.b16 %v584
    %v2102 = vunpack.c.h.b16 %v584
    %v2103 = vunpack.c.l.b16 %v585
    %v2104 = vunpack.c.h.b16 %v585
    %v2105 = vunpack.c.l.b16 %v586
    %v2106 = vunpack.c.h.b16 %v586
    %v2107 = vunpack.c.l.b16 %v587
    %v2108 = vunpack.c.h.b16 %v587
    %v2109 = vunpack.c.l.b16 %v588
    %v2110 = vunpack.c.h.b16 %v588
    %v2111 = vunpack.c.l.b16 %v589
    %v2112 = vunpack.c.h.b16 %v589
    %v2113 = vunpack.c.l.b16 %v590
    %v2114 = vunpack.c.h.b16 %v590
    %v2115 = vunpack.c.l.b16 %v591
    %v2116 = vunpack.c.h.b16 %v591
    %v2117 = vunpack.c.l.b16 %v592
    %v2118 = vunpack.c.h.b16 %v592
    %v2119 = vunpack.c.l.b16 %v593
    %v2120 = vunpack.c.h.b16 %v593
    %v2121 = vunpack.c.l.b16 %v594
    %v2122 = vunpack.c.h.b16 %v594
    %v2123 = vunpack.c.l.b16 %v595
    %v2124 = vunpack.c.h.b16 %v595
    %v2125 = vunpack.c.l.b16 %v596
    %v2126 = vunpack.c.h.b16 %v596
    %v2127 = vunpack.c.l.b16 %v597
    %v2128 = vunpack.c.h.b16 %v597
    %v2129 = vunpack.c.l.b16 %v598
    %v2130 = vunpack.c.h.b16 %v598
    %v2131 = vunpack.c.l.b16 %v599
    %v2132 = vunpack.c.h.b16 %v599
    %v2133 = vunpack.c.l.b16 %v600
    %v2134 = vunpack.c.h.b16 %v600
    %v2135 = vunpack.c.l.b16 %v601
    %v2136 = vunpack.c.h.b16 %v601
    %v2137 = vunpack.c.l.b16 %v602
    %v2138 = vunpack.c.h.b16 %v602
    %v2139 = vunpack.c.l.b16 %v603
    %v2140 = vunpack.c.h.b16 %v603
    %v2141 = vunpack.c.l.b16 %v604
    %v2142 = vunpack.c.h.b16 %v604
    %v2143 = vunpack.c.l.b16 %v605
    %v2144 = vunpack.c.h.b16 %v605
    %v2145 = vunpack.c.l.b16 %v606
    %v2146 = vunpack.c.h.b16 %v606
    %v2147 = vunpack.c.l.b16 %v607
    %v2148 = vunpack.c.h.b16 %v607
    %v2149 = vunpack.c.l.b16 %v608
    %v2150 = vunpack.c.h.b16 %v608
    %v2151 = vunpack.c.l.b16 %v609
    %v2152 = vunpack.c.h.b16 %v609
    %v2153 = vunpack.c.l.b16 %v610
    %v2154 = vunpack.c.h.b16 %v610
    %v2155 = vunpack.c.l.b16 %v611
    %v2156 = vunpack.c.h.b16 %v611
    %v2157 = vunpack.c.l.b16 %v612
    %v2158 = vunpack.c.h.b16 %v612
    %v2159 = vunpack.c.l.b16 %v613
    %v2160 = vunpack.c.h.b16 %v613
    %v2161 = vunpack.c.l.b16 %v614
    %v2162 = vunpack.c.h.b16 %v614
    %v2163 = vunpack.c.l.b16 %v615
    %v2164 = vunpack.c.h.b16 %v615
    %v2165 = vunpack.c.l.b16 %v616
    %v2166 = vunpack.c.h.b16 %v616
    %v2167 = vunpack.c.l.b16 %v617
    %v2168 = vunpack.c.h.b16 %v617
    %v2169 = vunpack.c.l.b16 %v618
    %v2170 = vunpack.c.h.b16 %v618
    %v2171 = vunpack.c.l.b16 %v619
    %v2172 = vunpack.c.h.b16 %v619
    %v2173 = vunpack.c.l.b16 %v620
    %v2174 = vunpack.c.h.b16 %v620
    %v2175 = vunpack.c.l.b16 %v621
    %v2176 = vunpack.c.h.b16 %v621
    %v2177 = vunpack.c.l.b16 %v622
    %v2178 = vunpack.c.h.b16 %v622
    %v2179 = vunpack.c.l.b16 %v623
    %v2180 = vunpack.c.h.b16 %v623
    %v2181 = vunpack.c.l.b16 %v624
    %v2182 = vunpack.c.h.b16 %v624
    %v2183 = vunpack.c.l.b16 %v625
    %v2184 = vunpack.c.h.b16 %v625
    %v2185 = vunpack.c.l.b16 %v626
    %v2186 = vunpack.c.h.b16 %v626
    %v2187 = vunpack.c.l.b16 %v627
    %v2188 = vunpack.c.h.b16 %v627
    %v2189 = vunpack.c.l.b16 %v628
    %v2190 = vunpack.c.h.b16 %v628
    %v2191 = vunpack.c.l.b16 %v629
    %v2192 = vunpack.c.h.b16 %v629
    %v2193 = vunpack.c.l.b16 %v630
    %v2194 = vunpack.c.h.b16 %v630
    %v2195 = vunpack.c.l.b16 %v631
    %v2196 = vunpack.c.h.b16 %v631
    %v2197 = vunpack.c.l.b16 %v632
    %v2198 = vunpack.c.h.b16 %v632
    %v2199 = vunpack.c.l.b16 %v633
    %v2200 = vunpack.c.h.b16 %v633
    %v2201 = vunpack.c.l.b16 %v634
    %v2202 = vunpack.c.h.b16 %v634
    %v2203 = vunpack.c.l.b16 %v635
    %v2204 = vunpack.c.h.b16 %v635
    %v2205 = vunpack.c.l.b16 %v636
    %v2206 = vunpack.c.h.b16 %v636
    %v2207 = vunpack.c.l.b16 %v637
    %v2208 = vunpack.c.h.b16 %v637
    %v2209 = vunpack.c.l.b16 %v638
    %v2210 = vunpack.c.h.b16 %v638
    %v2211 = vunpack.c.l.b16 %v639
    %v2212 = vunpack.c.h.b16 %v639
    %v2213 = vunpack.c.l.b16 %v640
    %v2214 = vunpack.c.h.b16 %v640
    %v2215 = vunpack.c.l.b16 %v641
    %v2216 = vunpack.c.h.b16 %v641
    %v2217 = vunpack.c.l.b16 %v642
    %v2218 = vunpack.c.h.b16 %v642
    %v2219 = vunpack.c.l.b16 %v643
    %v2220 = vunpack.c.h.b16 %v643
    %v2221 = vunpack.c.l.b16 %v644
    %v2222 = vunpack.c.h.b16 %v644
    %v2223 = vpack.c.b16 %v1207, %v1199
    %v2224 = vpack.c.b16 %v1208, %v1200
    %v2225 = vpack.c.b16 %v1209, %v1201
    %v2226 = vpack.c.b16 %v1210, %v1202
    %v2227 = vpack.c.b16 %v1211, %v1203
    %v2228 = vpack.c.b16 %v1212, %v1204
    %v2229 = vpack.c.b16 %v1213, %v1205
    %v2230 = vpack.c.b16 %v1214, %v1206
    %v2231 = vpack.c.b16 %v1223, %v1215
    %v2232 = vpack.c.b16 %v1224, %v1216
    %v2233 = vpack.c.b16 %v1225, %v1217
    %v2234 = vpack.c.b16 %v1226, %v1218
    %v2235 = vpack.c.b16 %v1227, %v1219
    %v2236 = vpack.c.b16 %v1228, %v1220
    %v2237 = vpack.c.b16 %v1229, %v1221
    %v2238 = vpack.c.b16 %v1230, %v1222
    %v2239 = vpack.c.b16 %v1239, %v1231
    %v2240 = vpack.c.b16 %v1240, %v1232
    %v2241 = vpack.c.b16 %v1241, %v1233
    %v2242 = vpack.c.b16 %v1242, %v1234
    %v2243 = vpack.c.b16 %v1243, %v1235
    %v2244 = vpack.c.b16 %v1244, %v1236
    %v2245 = vpack.c.b16 %v1245, %v1237
    %v2246 = vpack.c.b16 %v1246, %v1238
    %v2247 = vpack.c.b16 %v1255, %v1247
    %v2248 = vpack.c.b16 %v1256, %v1248
    %v2249 = vpack.c.b16 %v1257, %v1249
    %v2250 = vpack.c.b16 %v1258, %v1250
    %v2251 = vpack.c.b16 %v1259, %v1251
    %v2252 = vpack.c.b16 %v1260, %v1252
    %v2253 = vpack.c.b16 %v1261, %v1253
    %v2254 = vpack.c.b16 %v1262, %v1254
    %v2255 = vpack.c.b16 %v1271, %v1263
    %v2256 = vpack.c.b16 %v1272, %v1264
    %v2257 = vpack.c.b16 %v1273, %v1265
    %v2258 = vpack.c.b16 %v1274, %v1266
    %v2259 = vpack.c.b16 %v1275, %v1267
    %v2260 = vpack.c.b16 %v1276, %v1268
    %v2261 = vpack.c.b16 %v1277, %v1269
    %v2262 = vpack.c.b16 %v1278, %v1270
    %v2263 = vpack.c.b16 %v1287, %v1279
    %v2264 = vpack.c.b16 %v1288, %v1280
    %v2265 = vpack.c.b16 %v1289, %v1281
    %v2266 = vpack.c.b16 %v1290, %v1282
    %v2267 = vpack.c.b16 %v1291, %v1283
    %v2268 = vpack.c.b16 %v1292, %v1284
    %v2269 = vpack.c.b16 %v1293, %v1285
    %v2270 = vpack.c.b16 %v1294, %v1286
    %v2271 = vpack.c.b16 %v1303, %v1295
    %v2272 = vpack.c.b16 %v1304, %v1296
    %v2273 = vpack.c.b16 %v1305, %v1297
    %v2274 = vpack.c.b16 %v1306, %v1298
    %v2275 = vpack.c.b16 %v1307, %v1299
    %v2276 = vpack.c.b16 %v1308, %v1300
    %v2277 = vpack.c.b16 %v1309, %v1301
    %v2278 = vpack.c.b16 %v1310, %v1302
    %v2279 = vpack.c.b16 %v1319, %v1311
    %v2280 = vpack.c.b16 %v1320, %v1312
    %v2281 = vpack.c.b16 %v1321, %v1313
    %v2282 = vpack.c.b16 %v1322, %v1314
    %v2283 = vpack.c.b16 %v1323, %v1315
    %v2284 = vpack.c.b16 %v1324, %v1316
    %v2285 = vpack.c.b16 %v1325, %v1317
    %v2286 = vpack.c.b16 %v1326, %v1318
    %v2287 = vpack.c.b16 %v1335, %v1327
    %v2288 = vpack.c.b16 %v1336, %v1328
    %v2289 = vpack.c.b16 %v1337, %v1329
    %v2290 = vpack.c.b16 %v1338, %v1330
    %v2291 = vpack.c.b16 %v1339, %v1331
    %v2292 = vpack.c.b16 %v1340, %v1332
    %v2293 = vpack.c.b16 %v1341, %v1333
    %v2294 = vpack.c.b16 %v1342, %v1334
    %v2295 = vpack.c.b16 %v1351, %v1343
    %v2296 = vpack.c.b16 %v1352, %v1344
    %v2297 = vpack.c.b16 %v1353, %v1345
    %v2298 = vpack.c.b16 %v1354, %v1346
    %v2299 = vpack.c.b16 %v1355, %v1347
    %v2300 = vpack.c.b16 %v1356, %v1348
    %v2301 = vpack.c.b16 %v1357, %v1349
    %v2302 = vpack.c.b16 %v1358, %v1350
    %v2303 = vpack.c.b16 %v1367, %v1359
    %v2304 = vpack.c.b16 %v1368, %v1360
    %v2305 = vpack.c.b16 %v1369, %v1361
    %v2306 = vpack.c.b16 %v1370, %v1362
    %v2307 = vpack.c.b16 %v1371, %v1363
    %v2308 = vpack.c.b16 %v1372, %v1364
    %v2309 = vpack.c.b16 %v1373, %v1365
    %v2310 = vpack.c.b16 %v1374, %v1366
    %v2311 = vpack.c.b16 %v1383, %v1375
    %v2312 = vpack.c.b16 %v1384, %v1376
    %v2313 = vpack.c.b16 %v1385, %v1377
    %v2314 = vpack.c.b16 %v1386, %v1378
    %v2315 = vpack.c.b16 %v1387, %v1379
    %v2316 = vpack.c.b16 %v1388, %v1380
    %v2317 = vpack.c.b16 %v1389, %v1381
    %v2318 = vpack.c.b16 %v1390, %v1382
    %v2319 = vpack.c.b16 %v1399, %v1391
    %v2320 = vpack.c.b16 %v1400, %v1392
    %v2321 = vpack.c.b16 %v1401, %v1393
    %v2322 = vpack.c.b16 %v1402, %v1394
    %v2323 = vpack.c.b16 %v1403, %v1395
    %v2324 = vpack.c.b16 %v1404, %v1396
    %v2325 = vpack.c.b16 %v1405, %v1397
    %v2326 = vpack.c.b16 %v1406, %v1398
    %v2327 = vpack.c.b16 %v1415, %v1407
    %v2328 = vpack.c.b16 %v1416, %v1408
    %v2329 = vpack.c.b16 %v1417, %v1409
    %v2330 = vpack.c.b16 %v1418, %v1410
    %v2331 = vpack.c.b16 %v1419, %v1411
    %v2332 = vpack.c.b16 %v1420, %v1412
    %v2333 = vpack.c.b16 %v1421, %v1413
    %v2334 = vpack.c.b16 %v1422, %v1414
    %v2335 = vpack.c.b16 %v1431, %v1423
    %v2336 = vpack.c.b16 %v1432, %v1424
    %v2337 = vpack.c.b16 %v1433, %v1425
    %v2338 = vpack.c.b16 %v1434, %v1426
    %v2339 = vpack.c.b16 %v1435, %v1427
    %v2340 = vpack.c.b16 %v1436, %v1428
    %v2341 = vpack.c.b16 %v1437, %v1429
    %v2342 = vpack.c.b16 %v1438, %v1430
    %v2343 = vpack.c.b16 %v1447, %v1439
    %v2344 = vpack.c.b16 %v1448, %v1440
    %v2345 = vpack.c.b16 %v1449, %v1441
    %v2346 = vpack.c.b16 %v1450, %v1442
    %v2347 = vpack.c.b16 %v1451, %v1443
    %v2348 = vpack.c.b16 %v1452, %v1444
    %v2349 = vpack.c.b16 %v1453, %v1445
    %v2350 = vpack.c.b16 %v1454, %v1446
    %v2351 = vpack.c.b16 %v1463, %v1455
    %v2352 = vpack.c.b16 %v1464, %v1456
    %v2353 = vpack.c.b16 %v1465, %v1457
    %v2354 = vpack.c.b16 %v1466, %v1458
    %v2355 = vpack.c.b16 %v1467, %v1459
    %v2356 = vpack.c.b16 %v1468, %v1460
    %v2357 = vpack.c.b16 %v1469, %v1461
    %v2358 = vpack.c.b16 %v1470, %v1462
    %v2359 = vpack.c.b16 %v1479, %v1471
    %v2360 = vpack.c.b16 %v1480, %v1472
    %v2361 = vpack.c.b16 %v1481, %v1473
    %v2362 = vpack.c.b16 %v1482, %v1474
    %v2363 = vpack.c.b16 %v1483, %v1475
    %v2364 = vpack.c.b16 %v1484, %v1476
    %v2365 = vpack.c.b16 %v1485, %v1477
    %v2366 = vpack.c.b16 %v1486, %v1478
    %v2367 = vpack.c.b16 %v1495, %v1487
    %v2368 = vpack.c.b16 %v1496, %v1488
    %v2369 = vpack.c.b16 %v1497, %v1489
    %v2370 = vpack.c.b16 %v1498, %v1490
    %v2371 = vpack.c.b16 %v1499, %v1491
    %v2372 = vpack.c.b16 %v1500, %v1492
    %v2373 = vpack.c.b16 %v1501, %v1493
    %v2374 = vpack.c.b16 %v1502, %v1494
    %v2375 = vpack.c.b16 %v1511, %v1503
    %v2376 = vpack.c.b16 %v1512, %v1504
    %v2377 = vpack.c.b16 %v1513, %v1505
    %v2378 = vpack.c.b16 %v1514, %v1506
    %v2379 = vpack.c.b16 %v1515, %v1507
    %v2380 = vpack.c.b16 %v1516, %v1508
    %v2381 = vpack.c.b16 %v1517, %v1509
    %v2382 = vpack.c.b16 %v1518, %v1510
    %v2383 = vpack.c.b16 %v1527, %v1519
    %v2384 = vpack.c.b16 %v1528, %v1520
    %v2385 = vpack.c.b16 %v1529, %v1521
    %v2386 = vpack.c.b16 %v1530, %v1522
    %v2387 = vpack.c.b16 %v1531, %v1523
    %v2388 = vpack.c.b16 %v1532, %v1524
    %v2389 = vpack.c.b16 %v1533, %v1525
    %v2390 = vpack.c.b16 %v1534, %v1526
    %v2391 = vpack.c.b16 %v1543, %v1535
    %v2392 = vpack.c.b16 %v1544, %v1536
    %v2393 = vpack.c.b16 %v1545, %v1537
    %v2394 = vpack.c.b16 %v1546, %v1538
    %v2395 = vpack.c.b16 %v1547, %v1539
    %v2396 = vpack.c.b16 %v1548, %v1540
    %v2397 = vpack.c.b16 %v1549, %v1541
    %v2398 = vpack.c.b16 %v1550, %v1542
    %v2399 = vpack.c.b16 %v1559, %v1551
    %v2400 = vpack.c.b16 %v1560, %v1552
    %v2401 = vpack.c.b16 %v1561, %v1553
    %v2402 = vpack.c.b16 %v1562, %v1554
    %v2403 = vpack.c.b16 %v1563, %v1555
    %v2404 = vpack.c.b16 %v1564, %v1556
    %v2405 = vpack.c.b16 %v1565, %v1557
    %v2406 = vpack.c.b16 %v1566, %v1558
    %v2407 = vpack.c.b16 %v1575, %v1567
    %v2408 = vpack.c.b16 %v1576, %v1568
    %v2409 = vpack.c.b16 %v1577, %v1569
    %v2410 = vpack.c.b16 %v1578, %v1570
    %v2411 = vpack.c.b16 %v1579, %v1571
    %v2412 = vpack.c.b16 %v1580, %v1572
    %v2413 = vpack.c.b16 %v1581, %v1573
    %v2414 = vpack.c.b16 %v1582, %v1574
    %v2415 = vpack.c.b16 %v1591, %v1583
    %v2416 = vpack.c.b16 %v1592, %v1584
    %v2417 = vpack.c.b16 %v1593, %v1585
    %v2418 = vpack.c.b16 %v1594, %v1586
    %v2419 = vpack.c.b16 %v1595, %v1587
    %v2420 = vpack.c.b16 %v1596, %v1588
    %v2421 = vpack.c.b16 %v1597, %v1589
    %v2422 = vpack.c.b16 %v1598, %v1590
    %v2423 = vpack.c.b16 %v1607, %v1599
    %v2424 = vpack.c.b16 %v1608, %v1600
    %v2425 = vpack.c.b16 %v1609, %v1601
    %v2426 = vpack.c.b16 %v1610, %v1602
    %v2427 = vpack.c.b16 %v1611, %v1603
    %v2428 = vpack.c.b16 %v1612, %v1604
    %v2429 = vpack.c.b16 %v1613, %v1605
    %v2430 = vpack.c.b16 %v1614, %v1606
    %v2431 = vpack.c.b16 %v1623, %v1615
    %v2432 = vpack.c.b16 %v1624, %v1616
    %v2433 = vpack.c.b16 %v1625, %v1617
    %v2434 = vpack.c.b16 %v1626, %v1618
    %v2435 = vpack.c.b16 %v1627, %v1619
    %v2436 = vpack.c.b16 %v1628, %v1620
    %v2437 = vpack.c.b16 %v1629, %v1621
    %v2438 = vpack.c.b16 %v1630, %v1622
    %v2439 = vpack.c.b16 %v1639, %v1631
    %v2440 = vpack.c.b16 %v1640, %v1632
    %v2441 = vpack.c.b16 %v1641, %v1633
    %v2442 = vpack.c.b16 %v1642, %v1634
    %v2443 = vpack.c.b16 %v1643, %v1635
    %v2444 = vpack.c.b16 %v1644, %v1636
    %v2445 = vpack.c.b16 %v1645, %v1637
    %v2446 = vpack.c.b16 %v1646, %v1638
    %v2447 = vpack.c.b16 %v1655, %v1647
    %v2448 = vpack.c.b16 %v1656, %v1648
    %v2449 = vpack.c.b16 %v1657, %v1649
    %v2450 = vpack.c.b16 %v1658, %v1650
    %v2451 = vpack.c.b16 %v1659, %v1651
    %v2452 = vpack.c.b16 %v1660, %v1652
    %v2453 = vpack.c.b16 %v1661, %v1653
    %v2454 = vpack.c.b16 %v1662, %v1654
    %v2455 = vpack.c.b16 %v1671, %v1663
    %v2456 = vpack.c.b16 %v1672, %v1664
    %v2457 = vpack.c.b16 %v1673, %v1665
    %v2458 = vpack.c.b16 %v1674, %v1666
    %v2459 = vpack.c.b16 %v1675, %v1667
    %v2460 = vpack.c.b16 %v1676, %v1668
    %v2461 = vpack.c.b16 %v1677, %v1669
    %v2462 = vpack.c.b16 %v1678, %v1670
    %v2463 = vpack.c.b16 %v1687, %v1679
    %v2464 = vpack.c.b16 %v1688, %v1680
    %v2465 = vpack.c.b16 %v1689, %v1681
    %v2466 = vpack.c.b16 %v1690, %v1682
    %v2467 = vpack.c.b16 %v1691, %v1683
    %v2468 = vpack.c.b16 %v1692, %v1684
    %v2469 = vpack.c.b16 %v1693, %v1685
    %v2470 = vpack.c.b16 %v1694, %v1686
    %v2471 = vpack.c.b16 %v1703, %v1695
    %v2472 = vpack.c.b16 %v1704, %v1696
    %v2473 = vpack.c.b16 %v1705, %v1697
    %v2474 = vpack.c.b16 %v1706, %v1698
    %v2475 = vpack.c.b16 %v1707, %v1699
    %v2476 = vpack.c.b16 %v1708, %v1700
    %v2477 = vpack.c.b16 %v1709, %v1701
    %v2478 = vpack.c.b16 %v1710, %v1702
    %v2479 = vpack.c.b16 %v1719, %v1711
    %v2480 = vpack.c.b16 %v1720, %v1712
    %v2481 = vpack.c.b16 %v1721, %v1713
    %v2482 = vpack.c.b16 %v1722, %v1714
    %v2483 = vpack.c.b16 %v1723, %v1715
    %v2484 = vpack.c.b16 %v1724, %v1716
    %v2485 = vpack.c.b16 %v1725, %v1717
    %v2486 = vpack.c.b16 %v1726, %v1718
    %v2487 = vpack.c.b16 %v1735, %v1727
    %v2488 = vpack.c.b16 %v1736, %v1728
    %v2489 = vpack.c.b16 %v1737, %v1729
    %v2490 = vpack.c.b16 %v1738, %v1730
    %v2491 = vpack.c.b16 %v1739, %v1731
    %v2492 = vpack.c.b16 %v1740, %v1732
    %v2493 = vpack.c.b16 %v1741, %v1733
    %v2494 = vpack.c.b16 %v1742, %v1734
    %v2495 = vpack.c.b16 %v1751, %v1743
    %v2496 = vpack.c.b16 %v1752, %v1744
    %v2497 = vpack.c.b16 %v1753, %v1745
    %v2498 = vpack.c.b16 %v1754, %v1746
    %v2499 = vpack.c.b16 %v1755, %v1747
    %v2500 = vpack.c.b16 %v1756, %v1748
    %v2501 = vpack.c.b16 %v1757, %v1749
    %v2502 = vpack.c.b16 %v1758, %v1750
    %v2503 = vpack.c.b16 %v1767, %v1759
    %v2504 = vpack.c.b16 %v1768, %v1760
    %v2505 = vpack.c.b16 %v1769, %v1761
    %v2506 = vpack.c.b16 %v1770, %v1762
    %v2507 = vpack.c.b16 %v1771, %v1763
    %v2508 = vpack.c.b16 %v1772, %v1764
    %v2509 = vpack.c.b16 %v1773, %v1765
    %v2510 = vpack.c.b16 %v1774, %v1766
    %v2511 = vpack.c.b16 %v1783, %v1775
    %v2512 = vpack.c.b16 %v1784, %v1776
    %v2513 = vpack.c.b16 %v1785, %v1777
    %v2514 = vpack.c.b16 %v1786, %v1778
    %v2515 = vpack.c.b16 %v1787, %v1779
    %v2516 = vpack.c.b16 %v1788, %v1780
    %v2517 = vpack.c.b16 %v1789, %v1781
    %v2518 = vpack.c.b16 %v1790, %v1782
    %v2519 = vpack.c.b16 %v1799, %v1791
    %v2520 = vpack.c.b16 %v1800, %v1792
    %v2521 = vpack.c.b16 %v1801, %v1793
    %v2522 = vpack.c.b16 %v1802, %v1794
    %v2523 = vpack.c.b16 %v1803, %v1795
    %v2524 = vpack.c.b16 %v1804, %v1796
    %v2525 = vpack.c.b16 %v1805, %v1797
    %v2526 = vpack.c.b16 %v1806, %v1798
    %v2527 = vpack.c.b16 %v1815, %v1807
    %v2528 = vpack.c.b16 %v1816, %v1808
    %v2529 = vpack.c.b16 %v1817, %v1809
    %v2530 = vpack.c.b16 %v1818, %v1810
    %v2531 = vpack.c.b16 %v1819, %v1811
    %v2532 = vpack.c.b16 %v1820, %v1812
    %v2533 = vpack.c.b16 %v1821, %v1813
    %v2534 = vpack.c.b16 %v1822, %v1814
    %v2535 = vpack.c.b16 %v1831, %v1823
    %v2536 = vpack.c.b16 %v1832, %v1824
    %v2537 = vpack.c.b16 %v1833, %v1825
    %v2538 = vpack.c.b16 %v1834, %v1826
    %v2539 = vpack.c.b16 %v1835, %v1827
    %v2540 = vpack.c.b16 %v1836, %v1828
    %v2541 = vpack.c.b16 %v1837, %v1829
    %v2542 = vpack.c.b16 %v1838, %v1830
    %v2543 = vpack.c.b16 %v1847, %v1839
    %v2544 = vpack.c.b16 %v1848, %v1840
    %v2545 = vpack.c.b16 %v1849, %v1841
    %v2546 = vpack.c.b16 %v1850, %v1842
    %v2547 = vpack.c.b16 %v1851, %v1843
    %v2548 = vpack.c.b16 %v1852, %v1844
    %v2549 = vpack.c.b16 %v1853, %v1845
    %v2550 = vpack.c.b16 %v1854, %v1846
    %v2551 = vpack.c.b16 %v1863, %v1855
    %v2552 = vpack.c.b16 %v1864, %v1856
    %v2553 = vpack.c.b16 %v1865, %v1857
    %v2554 = vpack.c.b16 %v1866, %v1858
    %v2555 = vpack.c.b16 %v1867, %v1859
    %v2556 = vpack.c.b16 %v1868, %v1860
    %v2557 = vpack.c.b16 %v1869, %v1861
    %v2558 = vpack.c.b16 %v1870, %v1862
    %v2559 = vpack.c.b16 %v1879, %v1871
    %v2560 = vpack.c.b16 %v1880, %v1872
    %v2561 = vpack.c.b16 %v1881, %v1873
    %v2562 = vpack.c.b16 %v1882, %v1874
    %v2563 = vpack.c.b16 %v1883, %v1875
    %v2564 = vpack.c.b16 %v1884, %v1876
    %v2565 = vpack.c.b16 %v1885, %v1877
    %v2566 = vpack.c.b16 %v1886, %v1878
    %v2567 = vpack.c.b16 %v1895, %v1887
    %v2568 = vpack.c.b16 %v1896, %v1888
    %v2569 = vpack.c.b16 %v1897, %v1889
    %v2570 = vpack.c.b16 %v1898, %v1890
    %v2571 = vpack.c.b16 %v1899, %v1891
    %v2572 = vpack.c.b16 %v1900, %v1892
    %v2573 = vpack.c.b16 %v1901, %v1893
    %v2574 = vpack.c.b16 %v1902, %v1894
    %v2575 = vpack.c.b16 %v1911, %v1903
    %v2576 = vpack.c.b16 %v1912, %v1904
    %v2577 = vpack.c.b16 %v1913, %v1905
    %v2578 = vpack.c.b16 %v1914, %v1906
    %v2579 = vpack.c.b16 %v1915, %v1907
    %v2580 = vpack.c.b16 %v1916, %v1908
    %v2581 = vpack.c.b16 %v1917, %v1909
    %v2582 = vpack.c.b16 %v1918, %v1910
    %v2583 = vpack.c.b16 %v1927, %v1919
    %v2584 = vpack.c.b16 %v1928, %v1920
    %v2585 = vpack.c.b16 %v1929, %v1921
    %v2586 = vpack.c.b16 %v1930, %v1922
    %v2587 = vpack.c.b16 %v1931, %v1923
    %v2588 = vpack.c.b16 %v1932, %v1924
    %v2589 = vpack.c.b16 %v1933, %v1925
    %v2590 = vpack.c.b16 %v1934, %v1926
    %v2591 = vpack.c.b16 %v1943, %v1935
    %v2592 = vpack.c.b16 %v1944, %v1936
    %v2593 = vpack.c.b16 %v1945, %v1937
    %v2594 = vpack.c.b16 %v1946, %v1938
    %v2595 = vpack.c.b16 %v1947, %v1939
    %v2596 = vpack.c.b16 %v1948, %v1940
    %v2597 = vpack.c.b16 %v1949, %v1941
    %v2598 = vpack.c.b16 %v1950, %v1942
    %v2599 = vpack.c.b16 %v1959, %v1951
    %v2600 = vpack.c.b16 %v1960, %v1952
    %v2601 = vpack.c.b16 %v1961, %v1953
    %v2602 = vpack.c.b16 %v1962, %v1954
    %v2603 = vpack.c.b16 %v1963, %v1955
    %v2604 = vpack.c.b16 %v1964, %v1956
    %v2605 = vpack.c.b16 %v1965, %v1957
    %v2606 = vpack.c.b16 %v1966, %v1958
    %v2607 = vpack.c.b16 %v1975, %v1967
    %v2608 = vpack.c.b16 %v1976, %v1968
    %v2609 = vpack.c.b16 %v1977, %v1969
    %v2610 = vpack.c.b16 %v1978, %v1970
    %v2611 = vpack.c.b16 %v1979, %v1971
    %v2612 = vpack.c.b16 %v1980, %v1972
    %v2613 = vpack.c.b16 %v1981, %v1973
    %v2614 = vpack.c.b16 %v1982, %v1974
    %v2615 = vpack.c.b16 %v1991, %v1983
    %v2616 = vpack.c.b16 %v1992, %v1984
    %v2617 = vpack.c.b16 %v1993, %v1985
    %v2618 = vpack.c.b16 %v1994, %v1986
    %v2619 = vpack.c.b16 %v1995, %v1987
    %v2620 = vpack.c.b16 %v1996, %v1988
    %v2621 = vpack.c.b16 %v1997, %v1989
    %v2622 = vpack.c.b16 %v1998, %v1990
    %v2623 = vpack.c.b16 %v2007, %v1999
    %v2624 = vpack.c.b16 %v2008, %v2000
    %v2625 = vpack.c.b16 %v2009, %v2001
    %v2626 = vpack.c.b16 %v2010, %v2002
    %v2627 = vpack.c.b16 %v2011, %v2003
    %v2628 = vpack.c.b16 %v2012, %v2004
    %v2629 = vpack.c.b16 %v2013, %v2005
    %v2630 = vpack.c.b16 %v2014, %v2006
    %v2631 = vpack.c.b16 %v2023, %v2015
    %v2632 = vpack.c.b16 %v2024, %v2016
    %v2633 = vpack.c.b16 %v2025, %v2017
    %v2634 = vpack.c.b16 %v2026, %v2018
    %v2635 = vpack.c.b16 %v2027, %v2019
    %v2636 = vpack.c.b16 %v2028, %v2020
    %v2637 = vpack.c.b16 %v2029, %v2021
    %v2638 = vpack.c.b16 %v2030, %v2022
    %v2639 = vpack.c.b16 %v2039, %v2031
    %v2640 = vpack.c.b16 %v2040, %v2032
    %v2641 = vpack.c.b16 %v2041, %v2033
    %v2642 = vpack.c.b16 %v2042, %v2034
    %v2643 = vpack.c.b16 %v2043, %v2035
    %v2644 = vpack.c.b16 %v2044, %v2036
    %v2645 = vpack.c.b16 %v2045, %v2037
    %v2646 = vpack.c.b16 %v2046, %v2038
    %v2647 = vpack.c.b16 %v2055, %v2047
    %v2648 = vpack.c.b16 %v2056, %v2048
    %v2649 = vpack.c.b16 %v2057, %v2049
    %v2650 = vpack.c.b16 %v2058, %v2050
    %v2651 = vpack.c.b16 %v2059, %v2051
    %v2652 = vpack.c.b16 %v2060, %v2052
    %v2653 = vpack.c.b16 %v2061, %v2053
    %v2654 = vpack.c.b16 %v2062, %v2054
    %v2655 = vpack.c.b16 %v2071, %v2063
    %v2656 = vpack.c.b16 %v2072, %v2064
    %v2657 = vpack.c.b16 %v2073, %v2065
    %v2658 = vpack.c.b16 %v2074, %v2066
    %v2659 = vpack.c.b16 %v2075, %v2067
    %v2660 = vpack.c.b16 %v2076, %v2068
    %v2661 = vpack.c.b16 %v2077, %v2069
    %v2662 = vpack.c.b16 %v2078, %v2070
    %v2663 = vpack.c.b16 %v2087, %v2079
    %v2664 = vpack.c.b16 %v2088, %v2080
    %v2665 = vpack.c.b16 %v2089, %v2081
    %v2666 = vpack.c.b16 %v2090, %v2082
    %v2667 = vpack.c.b16 %v2091, %v2083
    %v2668 = vpack.c.b16 %v2092, %v2084
    %v2669 = vpack.c.b16 %v2093, %v2085
    %v2670 = vpack.c.b16 %v2094, %v2086
    %v2671 = vpack.c.b16 %v2103, %v2095
    %v2672 = vpack.c.b16 %v2104, %v2096
    %v2673 = vpack.c.b16 %v2105, %v2097
    %v2674 = vpack.c.b16 %v2106, %v2098
    %v2675 = vpack.c.b16 %v2107, %v2099
    %v2676 = vpack.c.b16 %v2108, %v2100
    %v2677 = vpack.c.b16 %v2109, %v2101
    %v2678 = vpack.c.b16 %v2110, %v2102
    %v2679 = vpack.c.b16 %v2119, %v2111
    %v2680 = vpack.c.b16 %v2120, %v2112
    %v2681 = vpack.c.b16 %v2121, %v2113
    %v2682 = vpack.c.b16 %v2122, %v2114
    %v2683 = vpack.c.b16 %v2123, %v2115
    %v2684 = vpack.c.b16 %v2124, %v2116
    %v2685 = vpack.c.b16 %v2125, %v2117
    %v2686 = vpack.c.b16 %v2126, %v2118
    %v2687 = vpack.c.b16 %v2135, %v2127
    %v2688 = vpack.c.b16 %v2136, %v2128
    %v2689 = vpack.c.b16 %v2137, %v2129
    %v2690 = vpack.c.b16 %v2138, %v2130
    %v2691 = vpack.c.b16 %v2139, %v2131
    %v2692 = vpack.c.b16 %v2140, %v2132
    %v2693 = vpack.c.b16 %v2141, %v2133
    %v2694 = vpack.c.b16 %v2142, %v2134
    %v2695 = vpack.c.b16 %v2151, %v2143
    %v2696 = vpack.c.b16 %v2152, %v2144
    %v2697 = vpack.c.b16 %v2153, %v2145
    %v2698 = vpack.c.b16 %v2154, %v2146
    %v2699 = vpack.c.b16 %v2155, %v2147
    %v2700 = vpack.c.b16 %v2156, %v2148
    %v2701 = vpack.c.b16 %v2157, %v2149
    %v2702 = vpack.c.b16 %v2158, %v2150
    %v2703 = vpack.c.b16 %v2167, %v2159
    %v2704 = vpack.c.b16 %v2168, %v2160
    %v2705 = vpack.c.b16 %v2169, %v2161
    %v2706 = vpack.c.b16 %v2170, %v2162
    %v2707 = vpack.c.b16 %v2171, %v2163
    %v2708 = vpack.c.b16 %v2172, %v2164
    %v2709 = vpack.c.b16 %v2173, %v2165
    %v2710 = vpack.c.b16 %v2174, %v2166
    %v2711 = vpack.c.b16 %v2183, %v2175
    %v2712 = vpack.c.b16 %v2184, %v2176
    %v2713 = vpack.c.b16 %v2185, %v2177
    %v2714 = vpack.c.b16 %v2186, %v2178
    %v2715 = vpack.c.b16 %v2187, %v2179
    %v2716 = vpack.c.b16 %v2188, %v2180
    %v2717 = vpack.c.b16 %v2189, %v2181
    %v2718 = vpack.c.b16 %v2190, %v2182
    %v2719 = vpack.c.b16 %v2199, %v2191
    %v2720 = vpack.c.b16 %v2200, %v2192
    %v2721 = vpack.c.b16 %v2201, %v2193
    %v2722 = vpack.c.b16 %v2202, %v2194
    %v2723 = vpack.c.b16 %v2203, %v2195
    %v2724 = vpack.c.b16 %v2204, %v2196
    %v2725 = vpack.c.b16 %v2205, %v2197
    %v2726 = vpack.c.b16 %v2206, %v2198
    %v2727 = vpack.c.b16 %v2215, %v2207
    %v2728 = vpack.c.b16 %v2216, %v2208
    %v2729 = vpack.c.b16 %v2217, %v2209
    %v2730 = vpack.c.b16 %v2218, %v2210
    %v2731 = vpack.c.b16 %v2219, %v2211
    %v2732 = vpack.c.b16 %v2220, %v2212
    %v2733 = vpack.c.b16 %v2221, %v2213
    %v2734 = vpack.c.b16 %v2222, %v2214
    %3247 = vmatprep.subr.bf16.mxu0 %v2224
    %3248 = vmatpush1.bf16.msra.mxu0 %v2223
    %3249 = vmatprep.subr.bf16.mxu0 %v2232
    %3250 = vmatpush1.bf16.msra.mxu0 %v2231
    %3251 = vmatprep.subr.bf16.mxu0 %v2240
    %3252 = vmatpush1.bf16.msra.mxu0 %v2239
    %3253 = vmatprep.subr.bf16.mxu0 %v2248
    %3254 = vmatpush1.bf16.msra.mxu0 %v2247
    %3255 = vmatprep.subr.bf16.mxu0 %v2256
    %3256 = vmatpush1.bf16.msra.mxu0 %v2255
    %3257 = vmatprep.subr.bf16.mxu0 %v2264
    %3258 = vmatpush1.bf16.msra.mxu0 %v2263
    %3259 = vmatprep.subr.bf16.mxu0 %v2272
    %3260 = vmatpush1.bf16.msra.mxu0 %v2271
    %3261 = vmatprep.subr.bf16.mxu0 %v2280
    %3262 = vmatpush1.bf16.msra.mxu0 %v2279
    %3263 = vmatprep.subr.bf16.mxu0 %v2288
    %3264 = vmatpush1.bf16.msra.mxu0 %v2287
    %3265 = vmatprep.subr.bf16.mxu0 %v2296
    %3266 = vmatpush1.bf16.msra.mxu0 %v2295
    %3267 = vmatprep.subr.bf16.mxu0 %v2304
    %3268 = vmatpush1.bf16.msra.mxu0 %v2303
    %3269 = vmatprep.subr.bf16.mxu0 %v2312
    %3270 = vmatpush1.bf16.msra.mxu0 %v2311
    %3271 = vmatprep.subr.bf16.mxu0 %v2320
    %3272 = vmatpush1.bf16.msra.mxu0 %v2319
    %3273 = vmatprep.subr.bf16.mxu0 %v2328
    %3274 = vmatpush1.bf16.msra.mxu0 %v2327
    %3275 = vmatprep.subr.bf16.mxu0 %v2336
    %3276 = vmatpush1.bf16.msra.mxu0 %v2335
    %3277 = vmatprep.subr.bf16.mxu0 %v2344
    %3278 = vmatpush1.bf16.msra.mxu0 %v2343
    %3279 = vmatprep.mubr.bf16.mxu0 %v118
    %3280 = vmatmul.mubr.bf16.gmra.mrb[0].mxu0 %v117
    %v3281 = vpop.f32.mrb[0].mxu0
    %v3282 = vadd.f32 %v650, %v3281
    %v3283 = vpop.f32.mrb[0].mxu0
    %v3284 = vadd.f32 %v654, %v3283
    %v3285 = vpop.f32.mrb[0].mxu0
    %v3286 = vadd.f32 %v650, %v3285
    %v3287 = vpop.f32.mrb[0].mxu0
    %v3288 = vadd.f32 %v654, %v3287
    %3289 = vmatprep.mubr.bf16.mxu0 %v126
    %3290 = vmatmul.mubr.bf16.gmra.mrb[0].mxu0 %v125
    %v3291 = vpop.f32.mrb[0].mxu0
    %v3292 = vadd.f32 %v650, %v3291
    %v3293 = vpop.f32.mrb[0].mxu0
    %v3294 = vadd.f32 %v654, %v3293
    %v3295 = vpop.f32.mrb[0].mxu0
    %v3296 = vadd.f32 %v650, %v3295
    %v3297 = vpop.f32.mrb[0].mxu0
    %v3298 = vadd.f32 %v654, %v3297
    %3299 = vdwg.mxu0
    %3300 = vmatprep.subr.bf16.mxu0 %v2352
    %3301 = vmatpush1.bf16.msra.mxu0 %v2351
    %3302 = vmatprep.subr.bf16.mxu0 %v2360
    %3303 = vmatpush1.bf16.msra.mxu0 %v2359
    %3304 = vmatprep.subr.bf16.mxu0 %v2368
    %3305 = vmatpush1.bf16.msra.mxu0 %v2367
    %3306 = vmatprep.subr.bf16.mxu0 %v2376
    %3307 = vmatpush1.bf16.msra.mxu0 %v2375
    %3308 = vmatprep.subr.bf16.mxu0 %v2384
    %3309 = vmatpush1.bf16.msra.mxu0 %v2383
    %3310 = vmatprep.subr.bf16.mxu0 %v2392
    %3311 = vmatpush1.bf16.msra.mxu0 %v2391
    %3312 = vmatprep.subr.bf16.mxu0 %v2400
    %3313 = vmatpush1.bf16.msra.mxu0 %v2399
    %3314 = vmatprep.subr.bf16.mxu0 %v2408
    %3315 = vmatpush1.bf16.msra.mxu0 %v2407
    %3316 = vmatprep.subr.bf16.mxu0 %v2416
    %3317 = vmatpush1.bf16.msra.mxu0 %v2415
    %3318 = vmatprep.subr.bf16.mxu0 %v2424
    %3319 = vmatpush1.bf16.msra.mxu0 %v2423
    %3320 = vmatprep.subr.bf16.mxu0 %v2432
    %3321 = vmatpush1.bf16.msra.mxu0 %v2431
    %3322 = vmatprep.subr.bf16.mxu0 %v2440
    %3323 = vmatpush1.bf16.msra.mxu0 %v2439
    %3324 = vmatprep.subr.bf16.mxu0 %v2448
    %3325 = vmatpush1.bf16.msra.mxu0 %v2447
    %3326 = vmatprep.subr.bf16.mxu0 %v2456
    %3327 = vmatpush1.bf16.msra.mxu0 %v2455
    %3328 = vmatprep.subr.bf16.mxu0 %v2464
    %3329 = vmatpush1.bf16.msra.mxu0 %v2463
    %3330 = vmatprep.subr.bf16.mxu0 %v2472
    %3331 = vmatpush1.bf16.msra.mxu0 %v2471
    %3332 = vmatprep.mubr.bf16.mxu0 %v120
    %3333 = vmatmul.mubr.bf16.gmra.mrb[0].mxu0 %v119
    %v3334 = vpop.f32.mrb[0].mxu0
    %v3335 = vadd.f32 %v3282, %v3334
    %v3336 = vpop.f32.mrb[0].mxu0
    %v3337 = vadd.f32 %v3284, %v3336
    %v3338 = vpop.f32.mrb[0].mxu0
    %v3339 = vadd.f32 %v3286, %v3338
    %v3340 = vpop.f32.mrb[0].mxu0
    %v3341 = vadd.f32 %v3288, %v3340
    %3342 = vmatprep.mubr.bf16.mxu0 %v128
    %3343 = vmatmul.mubr.bf16.gmra.mrb[0].mxu0 %v127
    %v3344 = vpop.f32.mrb[0].mxu0
    %v3345 = vadd.f32 %v3292, %v3344
    %v3346 = vpop.f32.mrb[0].mxu0
    %v3347 = vadd.f32 %v3294, %v3346
    %v3348 = vpop.f32.mrb[0].mxu0
    %v3349 = vadd.f32 %v3296, %v3348
    %v3350 = vpop.f32.mrb[0].mxu0
    %v3351 = vadd.f32 %v3298, %v3350
    %3352 = vdwg.mxu0
    %3353 = vmatprep.subr.bf16.mxu0 %v2480
    %3354 = vmatpush1.bf16.msra.mxu0 %v2479
    %3355 = vmatprep.subr.bf16.mxu0 %v2488
    %3356 = vmatpush1.bf16.msra.mxu0 %v2487
    %3357 = vmatprep.subr.bf16.mxu0 %v2496
    %3358 = vmatpush1.bf16.msra.mxu0 %v2495
    %3359 = vmatprep.subr.bf16.mxu0 %v2504
    %3360 = vmatpush1.bf16.msra.mxu0 %v2503
    %3361 = vmatprep.subr.bf16.mxu0 %v2512
    %3362 = vmatpush1.bf16.msra.mxu0 %v2511
    %3363 = vmatprep.subr.bf16.mxu0 %v2520
    %3364 = vmatpush1.bf16.msra.mxu0 %v2519
    %3365 = vmatprep.subr.bf16.mxu0 %v2528
    %3366 = vmatpush1.bf16.msra.mxu0 %v2527
    %3367 = vmatprep.subr.bf16.mxu0 %v2536
    %3368 = vmatpush1.bf16.msra.mxu0 %v2535
    %3369 = vmatprep.subr.bf16.mxu0 %v2544
    %3370 = vmatpush1.bf16.msra.mxu0 %v2543
    %3371 = vmatprep.subr.bf16.mxu0 %v2552
    %3372 = vmatpush1.bf16.msra.mxu0 %v2551
    %3373 = vmatprep.subr.bf16.mxu0 %v2560
    %3374 = vmatpush1.bf16.msra.mxu0 %v2559
    %3375 = vmatprep.subr.bf16.mxu0 %v2568
    %3376 = vmatpush1.bf16.msra.mxu0 %v2567
    %3377 = vmatprep.subr.bf16.mxu0 %v2576
    %3378 = vmatpush1.bf16.msra.mxu0 %v2575
    %3379 = vmatprep.subr.bf16.mxu0 %v2584
    %3380 = vmatpush1.bf16.msra.mxu0 %v2583
    %3381 = vmatprep.subr.bf16.mxu0 %v2592
    %3382 = vmatpush1.bf16.msra.mxu0 %v2591
    %3383 = vmatprep.subr.bf16.mxu0 %v2600
    %3384 = vmatpush1.bf16.msra.mxu0 %v2599
    %3385 = vmatprep.mubr.bf16.mxu0 %v122
    %3386 = vmatmul.mubr.bf16.gmra.mrb[0].mxu0 %v121
    %v3387 = vpop.f32.mrb[0].mxu0
    %v3388 = vadd.f32 %v3335, %v3387
    %v3389 = vpop.f32.mrb[0].mxu0
    %v3390 = vadd.f32 %v3337, %v3389
    %v3391 = vpop.f32.mrb[0].mxu0
    %v3392 = vadd.f32 %v3339, %v3391
    %v3393 = vpop.f32.mrb[0].mxu0
    %v3394 = vadd.f32 %v3341, %v3393
    %3395 = vmatprep.mubr.bf16.mxu0 %v130
    %3396 = vmatmul.mubr.bf16.gmra.mrb[0].mxu0 %v129
    %v3397 = vpop.f32.mrb[0].mxu0
    %v3398 = vadd.f32 %v3345, %v3397
    %v3399 = vpop.f32.mrb[0].mxu0
    %v3400 = vadd.f32 %v3347, %v3399
    %v3401 = vpop.f32.mrb[0].mxu0
    %v3402 = vadd.f32 %v3349, %v3401
    %v3403 = vpop.f32.mrb[0].mxu0
    %v3404 = vadd.f32 %v3351, %v3403
    %3405 = vdwg.mxu0
    %3406 = vmatprep.subr.bf16.mxu0 %v2608
    %3407 = vmatpush1.bf16.msra.mxu0 %v2607
    %3408 = vmatprep.subr.bf16.mxu0 %v2616
    %3409 = vmatpush1.bf16.msra.mxu0 %v2615
    %3410 = vmatprep.subr.bf16.mxu0 %v2624
    %3411 = vmatpush1.bf16.msra.mxu0 %v2623
    %3412 = vmatprep.subr.bf16.mxu0 %v2632
    %3413 = vmatpush1.bf16.msra.mxu0 %v2631
    %3414 = vmatprep.subr.bf16.mxu0 %v2640
    %3415 = vmatpush1.bf16.msra.mxu0 %v2639
    %3416 = vmatprep.subr.bf16.mxu0 %v2648
    %3417 = vmatpush1.bf16.msra.mxu0 %v2647
    %3418 = vmatprep.subr.bf16.mxu0 %v2656
    %3419 = vmatpush1.bf16.msra.mxu0 %v2655
    %3420 = vmatprep.subr.bf16.mxu0 %v2664
    %3421 = vmatpush1.bf16.msra.mxu0 %v2663
    %3422 = vmatprep.subr.bf16.mxu0 %v2672
    %3423 = vmatpush1.bf16.msra.mxu0 %v2671
    %3424 = vmatprep.subr.bf16.mxu0 %v2680
    %3425 = vmatpush1.bf16.msra.mxu0 %v2679
    %3426 = vmatprep.subr.bf16.mxu0 %v2688
    %3427 = vmatpush1.bf16.msra.mxu0 %v2687
    %3428 = vmatprep.subr.bf16.mxu0 %v2696
    %3429 = vmatpush1.bf16.msra.mxu0 %v2695
    %3430 = vmatprep.subr.bf16.mxu0 %v2704
    %3431 = vmatpush1.bf16.msra.mxu0 %v2703
    %3432 = vmatprep.subr.bf16.mxu0 %v2712
    %3433 = vmatpush1.bf16.msra.mxu0 %v2711
    %3434 = vmatprep.subr.bf16.mxu0 %v2720
    %3435 = vmatpush1.bf16.msra.mxu0 %v2719
    %3436 = vmatprep.subr.bf16.mxu0 %v2728
    %3437 = vmatpush1.bf16.msra.mxu0 %v2727
    %3438 = vmatprep.mubr.bf16.mxu0 %v124
    %3439 = vmatmul.mubr.bf16.gmra.mrb[0].mxu0 %v123
    %v3440 = vpop.f32.mrb[0].mxu0
    %v3441 = vadd.f32 %v3388, %v3440
    %v3442 = vpop.f32.mrb[0].mxu0
    %v3443 = vadd.f32 %v3390, %v3442
    %v3444 = vpop.f32.mrb[0].mxu0
    %v3445 = vadd.f32 %v3392, %v3444
    %v3446 = vpop.f32.mrb[0].mxu0
    %v3447 = vadd.f32 %v3394, %v3446
    %3448 = vmatprep.mubr.bf16.mxu0 %v132
    %3449 = vmatmul.mubr.bf16.gmra.mrb[0].mxu0 %v131
    %v3450 = vpop.f32.mrb[0].mxu0
    %v3451 = vadd.f32 %v3398, %v3450
    %v3452 = vpop.f32.mrb[0].mxu0
    %v3453 = vadd.f32 %v3400, %v3452
    %v3454 = vpop.f32.mrb[0].mxu0
    %v3455 = vadd.f32 %v3402, %v3454
    %v3456 = vpop.f32.mrb[0].mxu0
    %v3457 = vadd.f32 %v3404, %v3456
    %3458 = vdwg.mxu0
    %3459 = vmatprep.subr.bf16.mxu0 %v2226
    %3460 = vmatpush1.bf16.msra.mxu0 %v2225
    %3461 = vmatprep.subr.bf16.mxu0 %v2234
    %3462 = vmatpush1.bf16.msra.mxu0 %v2233
    %3463 = vmatprep.subr.bf16.mxu0 %v2242
    %3464 = vmatpush1.bf16.msra.mxu0 %v2241
    %3465 = vmatprep.subr.bf16.mxu0 %v2250
    %3466 = vmatpush1.bf16.msra.mxu0 %v2249
    %3467 = vmatprep.subr.bf16.mxu0 %v2258
    %3468 = vmatpush1.bf16.msra.mxu0 %v2257
    %3469 = vmatprep.subr.bf16.mxu0 %v2266
    %3470 = vmatpush1.bf16.msra.mxu0 %v2265
    %3471 = vmatprep.subr.bf16.mxu0 %v2274
    %3472 = vmatpush1.bf16.msra.mxu0 %v2273
    %3473 = vmatprep.subr.bf16.mxu0 %v2282
    %3474 = vmatpush1.bf16.msra.mxu0 %v2281
    %3475 = vmatprep.subr.bf16.mxu0 %v2290
    %3476 = vmatpush1.bf16.msra.mxu0 %v2289
    %3477 = vmatprep.subr.bf16.mxu0 %v2298
    %3478 = vmatpush1.bf16.msra.mxu0 %v2297
    %3479 = vmatprep.subr.bf16.mxu0 %v2306
    %3480 = vmatpush1.bf16.msra.mxu0 %v2305
    %3481 = vmatprep.subr.bf16.mxu0 %v2314
    %3482 = vmatpush1.bf16.msra.mxu0 %v2313
    %3483 = vmatprep.subr.bf16.mxu0 %v2322
    %3484 = vmatpush1.bf16.msra.mxu0 %v2321
    %3485 = vmatprep.subr.bf16.mxu0 %v2330
    %3486 = vmatpush1.bf16.msra.mxu0 %v2329
    %3487 = vmatprep.subr.bf16.mxu0 %v2338
    %3488 = vmatpush1.bf16.msra.mxu0 %v2337
    %3489 = vmatprep.subr.bf16.mxu0 %v2346
    %3490 = vmatpush1.bf16.msra.mxu0 %v2345
    %3491 = vmatprep.mubr.bf16.mxu0 %v118
    %3492 = vmatmul.mubr.bf16.gmra.mrb[0].mxu0 %v117
    %v3493 = vpop.f32.mrb[0].mxu0
    %v3494 = vadd.f32 %v658, %v3493
    %v3495 = vpop.f32.mrb[0].mxu0
    %v3496 = vadd.f32 %v662, %v3495
    %v3497 = vpop.f32.mrb[0].mxu0
    %v3498 = vadd.f32 %v658, %v3497
    %v3499 = vpop.f32.mrb[0].mxu0
    %v3500 = vadd.f32 %v662, %v3499
    %3501 = vmatprep.mubr.bf16.mxu0 %v126
    %3502 = vmatmul.mubr.bf16.gmra.mrb[0].mxu0 %v125
    %v3503 = vpop.f32.mrb[0].mxu0
    %v3504 = vadd.f32 %v658, %v3503
    %v3505 = vpop.f32.mrb[0].mxu0
    %v3506 = vadd.f32 %v662, %v3505
    %v3507 = vpop.f32.mrb[0].mxu0
    %v3508 = vadd.f32 %v658, %v3507
    %v3509 = vpop.f32.mrb[0].mxu0
    %v3510 = vadd.f32 %v662, %v3509
    %3511 = vdwg.mxu0
    %3512 = vmatprep.subr.bf16.mxu0 %v2354
    %3513 = vmatpush1.bf16.msra.mxu0 %v2353
    %3514 = vmatprep.subr.bf16.mxu0 %v2362
    %3515 = vmatpush1.bf16.msra.mxu0 %v2361
    %3516 = vmatprep.subr.bf16.mxu0 %v2370
    %3517 = vmatpush1.bf16.msra.mxu0 %v2369
    %3518 = vmatprep.subr.bf16.mxu0 %v2378
    %3519 = vmatpush1.bf16.msra.mxu0 %v2377
    %3520 = vmatprep.subr.bf16.mxu0 %v2386
    %3521 = vmatpush1.bf16.msra.mxu0 %v2385
    %3522 = vmatprep.subr.bf16.mxu0 %v2394
    %3523 = vmatpush1.bf16.msra.mxu0 %v2393
    %3524 = vmatprep.subr.bf16.mxu0 %v2402
    %3525 = vmatpush1.bf16.msra.mxu0 %v2401
    %3526 = vmatprep.subr.bf16.mxu0 %v2410
    %3527 = vmatpush1.bf16.msra.mxu0 %v2409
    %3528 = vmatprep.subr.bf16.mxu0 %v2418
    %3529 = vmatpush1.bf16.msra.mxu0 %v2417
    %3530 = vmatprep.subr.bf16.mxu0 %v2426
    %3531 = vmatpush1.bf16.msra.mxu0 %v2425
    %3532 = vmatprep.subr.bf16.mxu0 %v2434
    %3533 = vmatpush1.bf16.msra.mxu0 %v2433
    %3534 = vmatprep.subr.bf16.mxu0 %v2442
    %3535 = vmatpush1.bf16.msra.mxu0 %v2441
    %3536 = vmatprep.subr.bf16.mxu0 %v2450
    %3537 = vmatpush1.bf16.msra.mxu0 %v2449
    %3538 = vmatprep.subr.bf16.mxu0 %v2458
    %3539 = vmatpush1.bf16.msra.mxu0 %v2457
    %3540 = vmatprep.subr.bf16.mxu0 %v2466
    %3541 = vmatpush1.bf16.msra.mxu0 %v2465
    %3542 = vmatprep.subr.bf16.mxu0 %v2474
    %3543 = vmatpush1.bf16.msra.mxu0 %v2473
    %3544 = vmatprep.mubr.bf16.mxu0 %v120
    %3545 = vmatmul.mubr.bf16.gmra.mrb[0].mxu0 %v119
    %v3546 = vpop.f32.mrb[0].mxu0
    %v3547 = vadd.f32 %v3494, %v3546
    %v3548 = vpop.f32.mrb[0].mxu0
    %v3549 = vadd.f32 %v3496, %v3548
    %v3550 = vpop.f32.mrb[0].mxu0
    %v3551 = vadd.f32 %v3498, %v3550
    %v3552 = vpop.f32.mrb[0].mxu0
    %v3553 = vadd.f32 %v3500, %v3552
    %3554 = vmatprep.mubr.bf16.mxu0 %v128
    %3555 = vmatmul.mubr.bf16.gmra.mrb[0].mxu0 %v127
    %v3556 = vpop.f32.mrb[0].mxu0
    %v3557 = vadd.f32 %v3504, %v3556
    %v3558 = vpop.f32.mrb[0].mxu0
    %v3559 = vadd.f32 %v3506, %v3558
    %v3560 = vpop.f32.mrb[0].mxu0
    %v3561 = vadd.f32 %v3508, %v3560
    %v3562 = vpop.f32.mrb[0].mxu0
    %v3563 = vadd.f32 %v3510, %v3562
    %3564 = vdwg.mxu0
    %3565 = vmatprep.subr.bf16.mxu0 %v2482
    %3566 = vmatpush1.bf16.msra.mxu0 %v2481
    %3567 = vmatprep.subr.bf16.mxu0 %v2490
    %3568 = vmatpush1.bf16.msra.mxu0 %v2489
    %3569 = vmatprep.subr.bf16.mxu0 %v2498
    %3570 = vmatpush1.bf16.msra.mxu0 %v2497
    %3571 = vmatprep.subr.bf16.mxu0 %v2506
    %3572 = vmatpush1.bf16.msra.mxu0 %v2505
    %3573 = vmatprep.subr.bf16.mxu0 %v2514
    %3574 = vmatpush1.bf16.msra.mxu0 %v2513
    %3575 = vmatprep.subr.bf16.mxu0 %v2522
    %3576 = vmatpush1.bf16.msra.mxu0 %v2521
    %3577 = vmatprep.subr.bf16.mxu0 %v2530
    %3578 = vmatpush1.bf16.msra.mxu0 %v2529
    %3579 = vmatprep.subr.bf16.mxu0 %v2538
    %3580 = vmatpush1.bf16.msra.mxu0 %v2537
    %3581 = vmatprep.subr.bf16.mxu0 %v2546
    %3582 = vmatpush1.bf16.msra.mxu0 %v2545
    %3583 = vmatprep.subr.bf16.mxu0 %v2554
    %3584 = vmatpush1.bf16.msra.mxu0 %v2553
    %3585 = vmatprep.subr.bf16.mxu0 %v2562
    %3586 = vmatpush1.bf16.msra.mxu0 %v2561
    %3587 = vmatprep.subr.bf16.mxu0 %v2570
    %3588 = vmatpush1.bf16.msra.mxu0 %v2569
    %3589 = vmatprep.subr.bf16.mxu0 %v2578
    %3590 = vmatpush1.bf16.msra.mxu0 %v2577
    %3591 = vmatprep.subr.bf16.mxu0 %v2586
    %3592 = vmatpush1.bf16.msra.mxu0 %v2585
    %3593 = vmatprep.subr.bf16.mxu0 %v2594
    %3594 = vmatpush1.bf16.msra.mxu0 %v2593
    %3595 = vmatprep.subr.bf16.mxu0 %v2602
    %3596 = vmatpush1.bf16.msra.mxu0 %v2601
    %3597 = vmatprep.mubr.bf16.mxu0 %v122
    %3598 = vmatmul.mubr.bf16.gmra.mrb[0].mxu0 %v121
    %v3599 = vpop.f32.mrb[0].mxu0
    %v3600 = vadd.f32 %v3547, %v3599
    %v3601 = vpop.f32.mrb[0].mxu0
    %v3602 = vadd.f32 %v3549, %v3601
    %v3603 = vpop.f32.mrb[0].mxu0
    %v3604 = vadd.f32 %v3551, %v3603
    %v3605 = vpop.f32.mrb[0].mxu0
    %v3606 = vadd.f32 %v3553, %v3605
    %3607 = vmatprep.mubr.bf16.mxu0 %v130
    %3608 = vmatmul.mubr.bf16.gmra.mrb[0].mxu0 %v129
    %v3609 = vpop.f32.mrb[0].mxu0
    %v3610 = vadd.f32 %v3557, %v3609
    %v3611 = vpop.f32.mrb[0].mxu0
    %v3612 = vadd.f32 %v3559, %v3611
    %v3613 = vpop.f32.mrb[0].mxu0
    %v3614 = vadd.f32 %v3561, %v3613
    %v3615 = vpop.f32.mrb[0].mxu0
    %v3616 = vadd.f32 %v3563, %v3615
    %3617 = vdwg.mxu0
    %3618 = vmatprep.subr.bf16.mxu0 %v2610
    %3619 = vmatpush1.bf16.msra.mxu0 %v2609
    %3620 = vmatprep.subr.bf16.mxu0 %v2618
    %3621 = vmatpush1.bf16.msra.mxu0 %v2617
    %3622 = vmatprep.subr.bf16.mxu0 %v2626
    %3623 = vmatpush1.bf16.msra.mxu0 %v2625
    %3624 = vmatprep.subr.bf16.mxu0 %v2634
    %3625 = vmatpush1.bf16.msra.mxu0 %v2633
    %3626 = vmatprep.subr.bf16.mxu0 %v2642
    %3627 = vmatpush1.bf16.msra.mxu0 %v2641
    %3628 = vmatprep.subr.bf16.mxu0 %v2650
    %3629 = vmatpush1.bf16.msra.mxu0 %v2649
    %3630 = vmatprep.subr.bf16.mxu0 %v2658
    %3631 = vmatpush1.bf16.msra.mxu0 %v2657
    %3632 = vmatprep.subr.bf16.mxu0 %v2666
    %3633 = vmatpush1.bf16.msra.mxu0 %v2665
    %3634 = vmatprep.subr.bf16.mxu0 %v2674
    %3635 = vmatpush1.bf16.msra.mxu0 %v2673
    %3636 = vmatprep.subr.bf16.mxu0 %v2682
    %3637 = vmatpush1.bf16.msra.mxu0 %v2681
    %3638 = vmatprep.subr.bf16.mxu0 %v2690
    %3639 = vmatpush1.bf16.msra.mxu0 %v2689
    %3640 = vmatprep.subr.bf16.mxu0 %v2698
    %3641 = vmatpush1.bf16.msra.mxu0 %v2697
    %3642 = vmatprep.subr.bf16.mxu0 %v2706
    %3643 = vmatpush1.bf16.msra.mxu0 %v2705
    %3644 = vmatprep.subr.bf16.mxu0 %v2714
    %3645 = vmatpush1.bf16.msra.mxu0 %v2713
    %3646 = vmatprep.subr.bf16.mxu0 %v2722
    %3647 = vmatpush1.bf16.msra.mxu0 %v2721
    %3648 = vmatprep.subr.bf16.mxu0 %v2730
    %3649 = vmatpush1.bf16.msra.mxu0 %v2729
    %3650 = vmatprep.mubr.bf16.mxu0 %v124
    %3651 = vmatmul.mubr.bf16.gmra.mrb[0].mxu0 %v123
    %v3652 = vpop.f32.mrb[0].mxu0
    %v3653 = vadd.f32 %v3600, %v3652
    %v3654 = vpop.f32.mrb[0].mxu0
    %v3655 = vadd.f32 %v3602, %v3654
    %v3656 = vpop.f32.mrb[0].mxu0
    %v3657 = vadd.f32 %v3604, %v3656
    %v3658 = vpop.f32.mrb[0].mxu0
    %v3659 = vadd.f32 %v3606, %v3658
    %3660 = vmatprep.mubr.bf16.mxu0 %v132
    %3661 = vmatmul.mubr.bf16.gmra.mrb[0].mxu0 %v131
    %v3662 = vpop.f32.mrb[0].mxu0
    %v3663 = vadd.f32 %v3610, %v3662
    %v3664 = vpop.f32.mrb[0].mxu0
    %v3665 = vadd.f32 %v3612, %v3664
    %v3666 = vpop.f32.mrb[0].mxu0
    %v3667 = vadd.f32 %v3614, %v3666
    %v3668 = vpop.f32.mrb[0].mxu0
    %v3669 = vadd.f32 %v3616, %v3668
    %3670 = vdwg.mxu0
    %3671 = vmatprep.subr.bf16.mxu0 %v2228
    %3672 = vmatpush1.bf16.msra.mxu0 %v2227
    %3673 = vmatprep.subr.bf16.mxu0 %v2236
    %3674 = vmatpush1.bf16.msra.mxu0 %v2235
    %3675 = vmatprep.subr.bf16.mxu0 %v2244
    %3676 = vmatpush1.bf16.msra.mxu0 %v2243
    %3677 = vmatprep.subr.bf16.mxu0 %v2252
    %3678 = vmatpush1.bf16.msra.mxu0 %v2251
    %3679 = vmatprep.subr.bf16.mxu0 %v2260
    %3680 = vmatpush1.bf16.msra.mxu0 %v2259
    %3681 = vmatprep.subr.bf16.mxu0 %v2268
    %3682 = vmatpush1.bf16.msra.mxu0 %v2267
    %3683 = vmatprep.subr.bf16.mxu0 %v2276
    %3684 = vmatpush1.bf16.msra.mxu0 %v2275
    %3685 = vmatprep.subr.bf16.mxu0 %v2284
    %3686 = vmatpush1.bf16.msra.mxu0 %v2283
    %3687 = vmatprep.subr.bf16.mxu0 %v2292
    %3688 = vmatpush1.bf16.msra.mxu0 %v2291
    %3689 = vmatprep.subr.bf16.mxu0 %v2300
    %3690 = vmatpush1.bf16.msra.mxu0 %v2299
    %3691 = vmatprep.subr.bf16.mxu0 %v2308
    %3692 = vmatpush1.bf16.msra.mxu0 %v2307
    %3693 = vmatprep.subr.bf16.mxu0 %v2316
    %3694 = vmatpush1.bf16.msra.mxu0 %v2315
    %3695 = vmatprep.subr.bf16.mxu0 %v2324
    %3696 = vmatpush1.bf16.msra.mxu0 %v2323
    %3697 = vmatprep.subr.bf16.mxu0 %v2332
    %3698 = vmatpush1.bf16.msra.mxu0 %v2331
    %3699 = vmatprep.subr.bf16.mxu0 %v2340
    %3700 = vmatpush1.bf16.msra.mxu0 %v2339
    %3701 = vmatprep.subr.bf16.mxu0 %v2348
    %3702 = vmatpush1.bf16.msra.mxu0 %v2347
    %3703 = vmatprep.mubr.bf16.mxu0 %v118
    %3704 = vmatmul.mubr.bf16.gmra.mrb[0].mxu0 %v117
    %v3705 = vpop.f32.mrb[0].mxu0
    %v3706 = vadd.f32 %v666, %v3705
    %v3707 = vpop.f32.mrb[0].mxu0
    %v3708 = vadd.f32 %v670, %v3707
    %v3709 = vpop.f32.mrb[0].mxu0
    %v3710 = vadd.f32 %v666, %v3709
    %v3711 = vpop.f32.mrb[0].mxu0
    %v3712 = vadd.f32 %v670, %v3711
    %3713 = vmatprep.mubr.bf16.mxu0 %v126
    %3714 = vmatmul.mubr.bf16.gmra.mrb[0].mxu0 %v125
    %v3715 = vpop.f32.mrb[0].mxu0
    %v3716 = vadd.f32 %v666, %v3715
    %v3717 = vpop.f32.mrb[0].mxu0
    %v3718 = vadd.f32 %v670, %v3717
    %v3719 = vpop.f32.mrb[0].mxu0
    %v3720 = vadd.f32 %v666, %v3719
    %v3721 = vpop.f32.mrb[0].mxu0
    %v3722 = vadd.f32 %v670, %v3721
    %3723 = vdwg.mxu0
    %3724 = vmatprep.subr.bf16.mxu0 %v2356
    %3725 = vmatpush1.bf16.msra.mxu0 %v2355
    %3726 = vmatprep.subr.bf16.mxu0 %v2364
    %3727 = vmatpush1.bf16.msra.mxu0 %v2363
    %3728 = vmatprep.subr.bf16.mxu0 %v2372
    %3729 = vmatpush1.bf16.msra.mxu0 %v2371
    %3730 = vmatprep.subr.bf16.mxu0 %v2380
    %3731 = vmatpush1.bf16.msra.mxu0 %v2379
    %3732 = vmatprep.subr.bf16.mxu0 %v2388
    %3733 = vmatpush1.bf16.msra.mxu0 %v2387
    %3734 = vmatprep.subr.bf16.mxu0 %v2396
    %3735 = vmatpush1.bf16.msra.mxu0 %v2395
    %3736 = vmatprep.subr.bf16.mxu0 %v2404
    %3737 = vmatpush1.bf16.msra.mxu0 %v2403
    %3738 = vmatprep.subr.bf16.mxu0 %v2412
    %3739 = vmatpush1.bf16.msra.mxu0 %v2411
    %3740 = vmatprep.subr.bf16.mxu0 %v2420
    %3741 = vmatpush1.bf16.msra.mxu0 %v2419
    %3742 = vmatprep.subr.bf16.mxu0 %v2428
    %3743 = vmatpush1.bf16.msra.mxu0 %v2427
    %3744 = vmatprep.subr.bf16.mxu0 %v2436
    %3745 = vmatpush1.bf16.msra.mxu0 %v2435
    %3746 = vmatprep.subr.bf16.mxu0 %v2444
    %3747 = vmatpush1.bf16.msra.mxu0 %v2443
    %3748 = vmatprep.subr.bf16.mxu0 %v2452
    %3749 = vmatpush1.bf16.msra.mxu0 %v2451
    %3750 = vmatprep.subr.bf16.mxu0 %v2460
    %3751 = vmatpush1.bf16.msra.mxu0 %v2459
    %3752 = vmatprep.subr.bf16.mxu0 %v2468
    %3753 = vmatpush1.bf16.msra.mxu0 %v2467
    %3754 = vmatprep.subr.bf16.mxu0 %v2476
    %3755 = vmatpush1.bf16.msra.mxu0 %v2475
    %3756 = vmatprep.mubr.bf16.mxu0 %v120
    %3757 = vmatmul.mubr.bf16.gmra.mrb[0].mxu0 %v119
    %v3758 = vpop.f32.mrb[0].mxu0
    %v3759 = vadd.f32 %v3706, %v3758
    %v3760 = vpop.f32.mrb[0].mxu0
    %v3761 = vadd.f32 %v3708, %v3760
    %v3762 = vpop.f32.mrb[0].mxu0
    %v3763 = vadd.f32 %v3710, %v3762
    %v3764 = vpop.f32.mrb[0].mxu0
    %v3765 = vadd.f32 %v3712, %v3764
    %3766 = vmatprep.mubr.bf16.mxu0 %v128
    %3767 = vmatmul.mubr.bf16.gmra.mrb[0].mxu0 %v127
    %v3768 = vpop.f32.mrb[0].mxu0
    %v3769 = vadd.f32 %v3716, %v3768
    %v3770 = vpop.f32.mrb[0].mxu0
    %v3771 = vadd.f32 %v3718, %v3770
    %v3772 = vpop.f32.mrb[0].mxu0
    %v3773 = vadd.f32 %v3720, %v3772
    %v3774 = vpop.f32.mrb[0].mxu0
    %v3775 = vadd.f32 %v3722, %v3774
    %3776 = vdwg.mxu0
    %3777 = vmatprep.subr.bf16.mxu0 %v2484
    %3778 = vmatpush1.bf16.msra.mxu0 %v2483
    %3779 = vmatprep.subr.bf16.mxu0 %v2492
    %3780 = vmatpush1.bf16.msra.mxu0 %v2491
    %3781 = vmatprep.subr.bf16.mxu0 %v2500
    %3782 = vmatpush1.bf16.msra.mxu0 %v2499
    %3783 = vmatprep.subr.bf16.mxu0 %v2508
    %3784 = vmatpush1.bf16.msra.mxu0 %v2507
    %3785 = vmatprep.subr.bf16.mxu0 %v2516
    %3786 = vmatpush1.bf16.msra.mxu0 %v2515
    %3787 = vmatprep.subr.bf16.mxu0 %v2524
    %3788 = vmatpush1.bf16.msra.mxu0 %v2523
    %3789 = vmatprep.subr.bf16.mxu0 %v2532
    %3790 = vmatpush1.bf16.msra.mxu0 %v2531
    %3791 = vmatprep.subr.bf16.mxu0 %v2540
    %3792 = vmatpush1.bf16.msra.mxu0 %v2539
    %3793 = vmatprep.subr.bf16.mxu0 %v2548
    %3794 = vmatpush1.bf16.msra.mxu0 %v2547
    %3795 = vmatprep.subr.bf16.mxu0 %v2556
    %3796 = vmatpush1.bf16.msra.mxu0 %v2555
    %3797 = vmatprep.subr.bf16.mxu0 %v2564
    %3798 = vmatpush1.bf16.msra.mxu0 %v2563
    %3799 = vmatprep.subr.bf16.mxu0 %v2572
    %3800 = vmatpush1.bf16.msra.mxu0 %v2571
    %3801 = vmatprep.subr.bf16.mxu0 %v2580
    %3802 = vmatpush1.bf16.msra.mxu0 %v2579
    %3803 = vmatprep.subr.bf16.mxu0 %v2588
    %3804 = vmatpush1.bf16.msra.mxu0 %v2587
    %3805 = vmatprep.subr.bf16.mxu0 %v2596
    %3806 = vmatpush1.bf16.msra.mxu0 %v2595
    %3807 = vmatprep.subr.bf16.mxu0 %v2604
    %3808 = vmatpush1.bf16.msra.mxu0 %v2603
    %3809 = vmatprep.mubr.bf16.mxu0 %v122
    %3810 = vmatmul.mubr.bf16.gmra.mrb[0].mxu0 %v121
    %v3811 = vpop.f32.mrb[0].mxu0
    %v3812 = vadd.f32 %v3759, %v3811
    %v3813 = vpop.f32.mrb[0].mxu0
    %v3814 = vadd.f32 %v3761, %v3813
    %v3815 = vpop.f32.mrb[0].mxu0
    %v3816 = vadd.f32 %v3763, %v3815
    %v3817 = vpop.f32.mrb[0].mxu0
    %v3818 = vadd.f32 %v3765, %v3817
    %3819 = vmatprep.mubr.bf16.mxu0 %v130
    %3820 = vmatmul.mubr.bf16.gmra.mrb[0].mxu0 %v129
    %v3821 = vpop.f32.mrb[0].mxu0
    %v3822 = vadd.f32 %v3769, %v3821
    %v3823 = vpop.f32.mrb[0].mxu0
    %v3824 = vadd.f32 %v3771, %v3823
    %v3825 = vpop.f32.mrb[0].mxu0
    %v3826 = vadd.f32 %v3773, %v3825
    %v3827 = vpop.f32.mrb[0].mxu0
    %v3828 = vadd.f32 %v3775, %v3827
    %3829 = vdwg.mxu0
    %3830 = vmatprep.subr.bf16.mxu0 %v2612
    %3831 = vmatpush1.bf16.msra.mxu0 %v2611
    %3832 = vmatprep.subr.bf16.mxu0 %v2620
    %3833 = vmatpush1.bf16.msra.mxu0 %v2619
    %3834 = vmatprep.subr.bf16.mxu0 %v2628
    %3835 = vmatpush1.bf16.msra.mxu0 %v2627
    %3836 = vmatprep.subr.bf16.mxu0 %v2636
    %3837 = vmatpush1.bf16.msra.mxu0 %v2635
    %3838 = vmatprep.subr.bf16.mxu0 %v2644
    %3839 = vmatpush1.bf16.msra.mxu0 %v2643
    %3840 = vmatprep.subr.bf16.mxu0 %v2652
    %3841 = vmatpush1.bf16.msra.mxu0 %v2651
    %3842 = vmatprep.subr.bf16.mxu0 %v2660
    %3843 = vmatpush1.bf16.msra.mxu0 %v2659
    %3844 = vmatprep.subr.bf16.mxu0 %v2668
    %3845 = vmatpush1.bf16.msra.mxu0 %v2667
    %3846 = vmatprep.subr.bf16.mxu0 %v2676
    %3847 = vmatpush1.bf16.msra.mxu0 %v2675
    %3848 = vmatprep.subr.bf16.mxu0 %v2684
    %3849 = vmatpush1.bf16.msra.mxu0 %v2683
    %3850 = vmatprep.subr.bf16.mxu0 %v2692
    %3851 = vmatpush1.bf16.msra.mxu0 %v2691
    %3852 = vmatprep.subr.bf16.mxu0 %v2700
    %3853 = vmatpush1.bf16.msra.mxu0 %v2699
    %3854 = vmatprep.subr.bf16.mxu0 %v2708
    %3855 = vmatpush1.bf16.msra.mxu0 %v2707
    %3856 = vmatprep.subr.bf16.mxu0 %v2716
    %3857 = vmatpush1.bf16.msra.mxu0 %v2715
    %3858 = vmatprep.subr.bf16.mxu0 %v2724
    %3859 = vmatpush1.bf16.msra.mxu0 %v2723
    %3860 = vmatprep.subr.bf16.mxu0 %v2732
    %3861 = vmatpush1.bf16.msra.mxu0 %v2731
    %3862 = vmatprep.mubr.bf16.mxu0 %v124
    %3863 = vmatmul.mubr.bf16.gmra.mrb[0].mxu0 %v123
    %v3864 = vpop.f32.mrb[0].mxu0
    %v3865 = vadd.f32 %v3812, %v3864
    %v3866 = vpop.f32.mrb[0].mxu0
    %v3867 = vadd.f32 %v3814, %v3866
    %v3868 = vpop.f32.mrb[0].mxu0
    %v3869 = vadd.f32 %v3816, %v3868
    %v3870 = vpop.f32.mrb[0].mxu0
    %v3871 = vadd.f32 %v3818, %v3870
    %3872 = vmatprep.mubr.bf16.mxu0 %v132
    %3873 = vmatmul.mubr.bf16.gmra.mrb[0].mxu0 %v131
    %v3874 = vpop.f32.mrb[0].mxu0
    %v3875 = vadd.f32 %v3822, %v3874
    %v3876 = vpop.f32.mrb[0].mxu0
    %v3877 = vadd.f32 %v3824, %v3876
    %v3878 = vpop.f32.mrb[0].mxu0
    %v3879 = vadd.f32 %v3826, %v3878
    %v3880 = vpop.f32.mrb[0].mxu0
    %v3881 = vadd.f32 %v3828, %v3880
    %3882 = vdwg.mxu0
    %3883 = vmatprep.subr.bf16.mxu0 %v2230
    %3884 = vmatpush1.bf16.msra.mxu0 %v2229
    %3885 = vmatprep.subr.bf16.mxu0 %v2238
    %3886 = vmatpush1.bf16.msra.mxu0 %v2237
    %3887 = vmatprep.subr.bf16.mxu0 %v2246
    %3888 = vmatpush1.bf16.msra.mxu0 %v2245
    %3889 = vmatprep.subr.bf16.mxu0 %v2254
    %3890 = vmatpush1.bf16.msra.mxu0 %v2253
    %3891 = vmatprep.subr.bf16.mxu0 %v2262
    %3892 = vmatpush1.bf16.msra.mxu0 %v2261
    %3893 = vmatprep.subr.bf16.mxu0 %v2270
    %3894 = vmatpush1.bf16.msra.mxu0 %v2269
    %3895 = vmatprep.subr.bf16.mxu0 %v2278
    %3896 = vmatpush1.bf16.msra.mxu0 %v2277
    %3897 = vmatprep.subr.bf16.mxu0 %v2286
    %3898 = vmatpush1.bf16.msra.mxu0 %v2285
    %3899 = vmatprep.subr.bf16.mxu0 %v2294
    %3900 = vmatpush1.bf16.msra.mxu0 %v2293
    %3901 = vmatprep.subr.bf16.mxu0 %v2302
    %3902 = vmatpush1.bf16.msra.mxu0 %v2301
    %3903 = vmatprep.subr.bf16.mxu0 %v2310
    %3904 = vmatpush1.bf16.msra.mxu0 %v2309
    %3905 = vmatprep.subr.bf16.mxu0 %v2318
    %3906 = vmatpush1.bf16.msra.mxu0 %v2317
    %3907 = vmatprep.subr.bf16.mxu0 %v2326
    %3908 = vmatpush1.bf16.msra.mxu0 %v2325
    %3909 = vmatprep.subr.bf16.mxu0 %v2334
    %3910 = vmatpush1.bf16.msra.mxu0 %v2333
    %3911 = vmatprep.subr.bf16.mxu0 %v2342
    %3912 = vmatpush1.bf16.msra.mxu0 %v2341
    %3913 = vmatprep.subr.bf16.mxu0 %v2350
    %3914 = vmatpush1.bf16.msra.mxu0 %v2349
    %3915 = vmatprep.mubr.bf16.mxu0 %v118
    %3916 = vmatmul.mubr.bf16.gmra.mrb[0].mxu0 %v117
    %v3917 = vpop.f32.mrb[0].mxu0
    %v3918 = vadd.f32 %v674, %v3917
    %v3919 = vpop.f32.mrb[0].mxu0
    %v3920 = vadd.f32 %v678, %v3919
    %v3921 = vpop.f32.mrb[0].mxu0
    %v3922 = vadd.f32 %v674, %v3921
    %v3923 = vpop.f32.mrb[0].mxu0
    %v3924 = vadd.f32 %v678, %v3923
    %3925 = vmatprep.mubr.bf16.mxu0 %v126
    %3926 = vmatmul.mubr.bf16.gmra.mrb[0].mxu0 %v125
    %v3927 = vpop.f32.mrb[0].mxu0
    %v3928 = vadd.f32 %v674, %v3927
    %v3929 = vpop.f32.mrb[0].mxu0
    %v3930 = vadd.f32 %v678, %v3929
    %v3931 = vpop.f32.mrb[0].mxu0
    %v3932 = vadd.f32 %v674, %v3931
    %v3933 = vpop.f32.mrb[0].mxu0
    %v3934 = vadd.f32 %v678, %v3933
    %3935 = vdwg.mxu0
    %3936 = vmatprep.subr.bf16.mxu0 %v2358
    %3937 = vmatpush1.bf16.msra.mxu0 %v2357
    %3938 = vmatprep.subr.bf16.mxu0 %v2366
    %3939 = vmatpush1.bf16.msra.mxu0 %v2365
    %3940 = vmatprep.subr.bf16.mxu0 %v2374
    %3941 = vmatpush1.bf16.msra.mxu0 %v2373
    %3942 = vmatprep.subr.bf16.mxu0 %v2382
    %3943 = vmatpush1.bf16.msra.mxu0 %v2381
    %3944 = vmatprep.subr.bf16.mxu0 %v2390
    %3945 = vmatpush1.bf16.msra.mxu0 %v2389
    %3946 = vmatprep.subr.bf16.mxu0 %v2398
    %3947 = vmatpush1.bf16.msra.mxu0 %v2397
    %3948 = vmatprep.subr.bf16.mxu0 %v2406
    %3949 = vmatpush1.bf16.msra.mxu0 %v2405
    %3950 = vmatprep.subr.bf16.mxu0 %v2414
    %3951 = vmatpush1.bf16.msra.mxu0 %v2413
    %3952 = vmatprep.subr.bf16.mxu0 %v2422
    %3953 = vmatpush1.bf16.msra.mxu0 %v2421
    %3954 = vmatprep.subr.bf16.mxu0 %v2430
    %3955 = vmatpush1.bf16.msra.mxu0 %v2429
    %3956 = vmatprep.subr.bf16.mxu0 %v2438
    %3957 = vmatpush1.bf16.msra.mxu0 %v2437
    %3958 = vmatprep.subr.bf16.mxu0 %v2446
    %3959 = vmatpush1.bf16.msra.mxu0 %v2445
    %3960 = vmatprep.subr.bf16.mxu0 %v2454
    %3961 = vmatpush1.bf16.msra.mxu0 %v2453
    %3962 = vmatprep.subr.bf16.mxu0 %v2462
    %3963 = vmatpush1.bf16.msra.mxu0 %v2461
    %3964 = vmatprep.subr.bf16.mxu0 %v2470
    %3965 = vmatpush1.bf16.msra.mxu0 %v2469
    %3966 = vmatprep.subr.bf16.mxu0 %v2478
    %3967 = vmatpush1.bf16.msra.mxu0 %v2477
    %3968 = vmatprep.mubr.bf16.mxu0 %v120
    %3969 = vmatmul.mubr.bf16.gmra.mrb[0].mxu0 %v119
    %v3970 = vpop.f32.mrb[0].mxu0
    %v3971 = vadd.f32 %v3918, %v3970
    %v3972 = vpop.f32.mrb[0].mxu0
    %v3973 = vadd.f32 %v3920, %v3972
    %v3974 = vpop.f32.mrb[0].mxu0
    %v3975 = vadd.f32 %v3922, %v3974
    %v3976 = vpop.f32.mrb[0].mxu0
    %v3977 = vadd.f32 %v3924, %v3976
    %3978 = vmatprep.mubr.bf16.mxu0 %v128
    %3979 = vmatmul.mubr.bf16.gmra.mrb[0].mxu0 %v127
    %v3980 = vpop.f32.mrb[0].mxu0
    %v3981 = vadd.f32 %v3928, %v3980
    %v3982 = vpop.f32.mrb[0].mxu0
    %v3983 = vadd.f32 %v3930, %v3982
    %v3984 = vpop.f32.mrb[0].mxu0
    %v3985 = vadd.f32 %v3932, %v3984
    %v3986 = vpop.f32.mrb[0].mxu0
    %v3987 = vadd.f32 %v3934, %v3986
    %3988 = vdwg.mxu0
    %3989 = vmatprep.subr.bf16.mxu0 %v2486
    %3990 = vmatpush1.bf16.msra.mxu0 %v2485
    %3991 = vmatprep.subr.bf16.mxu0 %v2494
    %3992 = vmatpush1.bf16.msra.mxu0 %v2493
    %3993 = vmatprep.subr.bf16.mxu0 %v2502
    %3994 = vmatpush1.bf16.msra.mxu0 %v2501
    %3995 = vmatprep.subr.bf16.mxu0 %v2510
    %3996 = vmatpush1.bf16.msra.mxu0 %v2509
    %3997 = vmatprep.subr.bf16.mxu0 %v2518
    %3998 = vmatpush1.bf16.msra.mxu0 %v2517
    %3999 = vmatprep.subr.bf16.mxu0 %v2526
    %4000 = vmatpush1.bf16.msra.mxu0 %v2525
    %4001 = vmatprep.subr.bf16.mxu0 %v2534
    %4002 = vmatpush1.bf16.msra.mxu0 %v2533
    %4003 = vmatprep.subr.bf16.mxu0 %v2542
    %4004 = vmatpush1.bf16.msra.mxu0 %v2541
    %4005 = vmatprep.subr.bf16.mxu0 %v2550
    %4006 = vmatpush1.bf16.msra.mxu0 %v2549
    %4007 = vmatprep.subr.bf16.mxu0 %v2558
    %4008 = vmatpush1.bf16.msra.mxu0 %v2557
    %4009 = vmatprep.subr.bf16.mxu0 %v2566
    %4010 = vmatpush1.bf16.msra.mxu0 %v2565
    %4011 = vmatprep.subr.bf16.mxu0 %v2574
    %4012 = vmatpush1.bf16.msra.mxu0 %v2573
    %4013 = vmatprep.subr.bf16.mxu0 %v2582
    %4014 = vmatpush1.bf16.msra.mxu0 %v2581
    %4015 = vmatprep.subr.bf16.mxu0 %v2590
    %4016 = vmatpush1.bf16.msra.mxu0 %v2589
    %4017 = vmatprep.subr.bf16.mxu0 %v2598
    %4018 = vmatpush1.bf16.msra.mxu0 %v2597
    %4019 = vmatprep.subr.bf16.mxu0 %v2606
    %4020 = vmatpush1.bf16.msra.mxu0 %v2605
    %4021 = vmatprep.mubr.bf16.mxu0 %v122
    %4022 = vmatmul.mubr.bf16.gmra.mrb[0].mxu0 %v121
    %v4023 = vpop.f32.mrb[0].mxu0
    %v4024 = vadd.f32 %v3971, %v4023
    %v4025 = vpop.f32.mrb[0].mxu0
    %v4026 = vadd.f32 %v3973, %v4025
    %v4027 = vpop.f32.mrb[0].mxu0
    %v4028 = vadd.f32 %v3975, %v4027
    %v4029 = vpop.f32.mrb[0].mxu0
    %v4030 = vadd.f32 %v3977, %v4029
    %4031 = vmatprep.mubr.bf16.mxu0 %v130
    %4032 = vmatmul.mubr.bf16.gmra.mrb[0].mxu0 %v129
    %v4033 = vpop.f32.mrb[0].mxu0
    %v4034 = vadd.f32 %v3981, %v4033
    %v4035 = vpop.f32.mrb[0].mxu0
    %v4036 = vadd.f32 %v3983, %v4035
    %v4037 = vpop.f32.mrb[0].mxu0
    %v4038 = vadd.f32 %v3985, %v4037
    %v4039 = vpop.f32.mrb[0].mxu0
    %v4040 = vadd.f32 %v3987, %v4039
    %4041 = vdwg.mxu0
    %4042 = vmatprep.subr.bf16.mxu0 %v2614
    %4043 = vmatpush1.bf16.msra.mxu0 %v2613
    %4044 = vmatprep.subr.bf16.mxu0 %v2622
    %4045 = vmatpush1.bf16.msra.mxu0 %v2621
    %4046 = vmatprep.subr.bf16.mxu0 %v2630
    %4047 = vmatpush1.bf16.msra.mxu0 %v2629
    %4048 = vmatprep.subr.bf16.mxu0 %v2638
    %4049 = vmatpush1.bf16.msra.mxu0 %v2637
    %4050 = vmatprep.subr.bf16.mxu0 %v2646
    %4051 = vmatpush1.bf16.msra.mxu0 %v2645
    %4052 = vmatprep.subr.bf16.mxu0 %v2654
    %4053 = vmatpush1.bf16.msra.mxu0 %v2653
    %4054 = vmatprep.subr.bf16.mxu0 %v2662
    %4055 = vmatpush1.bf16.msra.mxu0 %v2661
    %4056 = vmatprep.subr.bf16.mxu0 %v2670
    %4057 = vmatpush1.bf16.msra.mxu0 %v2669
    %4058 = vmatprep.subr.bf16.mxu0 %v2678
    %4059 = vmatpush1.bf16.msra.mxu0 %v2677
    %4060 = vmatprep.subr.bf16.mxu0 %v2686
    %4061 = vmatpush1.bf16.msra.mxu0 %v2685
    %4062 = vmatprep.subr.bf16.mxu0 %v2694
    %4063 = vmatpush1.bf16.msra.mxu0 %v2693
    %4064 = vmatprep.subr.bf16.mxu0 %v2702
    %4065 = vmatpush1.bf16.msra.mxu0 %v2701
    %4066 = vmatprep.subr.bf16.mxu0 %v2710
    %4067 = vmatpush1.bf16.msra.mxu0 %v2709
    %4068 = vmatprep.subr.bf16.mxu0 %v2718
    %4069 = vmatpush1.bf16.msra.mxu0 %v2717
    %4070 = vmatprep.subr.bf16.mxu0 %v2726
    %4071 = vmatpush1.bf16.msra.mxu0 %v2725
    %4072 = vmatprep.subr.bf16.mxu0 %v2734
    %4073 = vmatpush1.bf16.msra.mxu0 %v2733
    %4074 = vmatprep.mubr.bf16.mxu0 %v124
    %4075 = vmatmul.mubr.bf16.gmra.mrb[0].mxu0 %v123
    %v4076 = vpop.f32.mrb[0].mxu0
    %v4077 = vadd.f32 %v4024, %v4076
    %v4078 = vpop.f32.mrb[0].mxu0
    %v4079 = vadd.f32 %v4026, %v4078
    %v4080 = vpop.f32.mrb[0].mxu0
    %v4081 = vadd.f32 %v4028, %v4080
    %v4082 = vpop.f32.mrb[0].mxu0
    %v4083 = vadd.f32 %v4030, %v4082
    %4084 = vmatprep.mubr.bf16.mxu0 %v132
    %4085 = vmatmul.mubr.bf16.gmra.mrb[0].mxu0 %v131
    %v4086 = vpop.f32.mrb[0].mxu0
    %v4087 = vadd.f32 %v4034, %v4086
    %v4088 = vpop.f32.mrb[0].mxu0
    %v4089 = vadd.f32 %v4036, %v4088
    %v4090 = vpop.f32.mrb[0].mxu0
    %v4091 = vadd.f32 %v4038, %v4090
    %v4092 = vpop.f32.mrb[0].mxu0
    %v4093 = vadd.f32 %v4040, %v4092
    %4094 = vdwg.mxu0
    %v4095 = vmax.f32 %v3441, 0.0
    %v4096 = vmax.f32 %v3443, 0.0
    %v4097 = vmax.f32 %v3653, 0.0
    %v4098 = vmax.f32 %v3655, 0.0
    %v4099 = vmax.f32 %v3865, 0.0
    %v4100 = vmax.f32 %v3867, 0.0
    %v4101 = vmax.f32 %v4077, 0.0
    %v4102 = vmax.f32 %v4079, 0.0
    %v4103 = vmax.f32 %v3445, 0.0
    %v4104 = vmax.f32 %v3447, 0.0
    %v4105 = vmax.f32 %v3657, 0.0
    %v4106 = vmax.f32 %v3659, 0.0
    %v4107 = vmax.f32 %v3869, 0.0
    %v4108 = vmax.f32 %v3871, 0.0
    %v4109 = vmax.f32 %v4081, 0.0
    %v4110 = vmax.f32 %v4083, 0.0
    %v4111 = vmax.f32 %v3451, 0.0
    %v4112 = vmax.f32 %v3453, 0.0
    %v4113 = vmax.f32 %v3663, 0.0
    %v4114 = vmax.f32 %v3665, 0.0
    %v4115 = vmax.f32 %v3875, 0.0
    %v4116 = vmax.f32 %v3877, 0.0
    %v4117 = vmax.f32 %v4087, 0.0
    %v4118 = vmax.f32 %v4089, 0.0
    %v4119 = vmax.f32 %v3455, 0.0
    %v4120 = vmax.f32 %v3457, 0.0
    %v4121 = vmax.f32 %v3667, 0.0
    %v4122 = vmax.f32 %v3669, 0.0
    %v4123 = vmax.f32 %v3879, 0.0
    %v4124 = vmax.f32 %v3881, 0.0
    %v4125 = vmax.f32 %v4091, 0.0
    %v4126 = vmax.f32 %v4093, 0.0
    %v4127 = vpack.c.bf16 %v4103, %v4095
    %v4128 = vpack.c.bf16 %v4104, %v4096
    %v4129 = vpack.c.bf16 %v4105, %v4097
    %v4130 = vpack.c.bf16 %v4106, %v4098
    %v4131 = vpack.c.bf16 %v4107, %v4099
    %v4132 = vpack.c.bf16 %v4108, %v4100
    %v4133 = vpack.c.bf16 %v4109, %v4101
    %v4134 = vpack.c.bf16 %v4110, %v4102
    %v4135 = vpack.c.bf16 %v4119, %v4111
    %v4136 = vpack.c.bf16 %v4120, %v4112
    %v4137 = vpack.c.bf16 %v4121, %v4113
    %v4138 = vpack.c.bf16 %v4122, %v4114
    %v4139 = vpack.c.bf16 %v4123, %v4115
    %v4140 = vpack.c.bf16 %v4124, %v4116
    %v4141 = vpack.c.bf16 %v4125, %v4117
    %v4142 = vpack.c.bf16 %v4126, %v4118
    %v4143 = vld [vmem:[#allocation8] sm:$0xff]
    %v4144 = vld [vmem:[#allocation8 + $0x8] sm:$0xff]
    %v4145 = vld [vmem:[#allocation8 + $0x10] sm:$0xff]
    %v4146 = vld [vmem:[#allocation8 + $0x18] sm:$0xff]
    %v4147 = vld [vmem:[#allocation8 + $0x20] sm:$0xff]
    %v4148 = vld [vmem:[#allocation8 + $0x28] sm:$0xff]
    %v4149 = vld [vmem:[#allocation8 + $0x30] sm:$0xff]
    %v4150 = vld [vmem:[#allocation8 + $0x38] sm:$0xff]
    %v4151 = vld [vmem:[#allocation8 + $0x40] sm:$0xff]
    %v4152 = vld [vmem:[#allocation8 + $0x48] sm:$0xff]
    %v4153 = vld [vmem:[#allocation8 + $0x50] sm:$0xff]
    %v4154 = vld [vmem:[#allocation8 + $0x58] sm:$0xff]
    %v4155 = vld [vmem:[#allocation8 + $0x60] sm:$0xff]
    %v4156 = vld [vmem:[#allocation8 + $0x68] sm:$0xff]
    %v4157 = vld [vmem:[#allocation8 + $0x70] sm:$0xff]
    %v4158 = vld [vmem:[#allocation8 + $0x78] sm:$0xff]
    %v4159 = vld [vmem:[#allocation8 + $0x80] sm:$0xff]
    %v4160 = vld [vmem:[#allocation8 + $0x88] sm:$0xff]
    %v4161 = vld [vmem:[#allocation8 + $0x90] sm:$0xff]
    %v4162 = vld [vmem:[#allocation8 + $0x98] sm:$0xff]
    %v4163 = vld [vmem:[#allocation8 + $0xa0] sm:$0xff]
    %v4164 = vld [vmem:[#allocation8 + $0xa8] sm:$0xff]
    %v4165 = vld [vmem:[#allocation8 + $0xb0] sm:$0xff]
    %v4166 = vld [vmem:[#allocation8 + $0xb8] sm:$0xff]
    %v4167 = vld [vmem:[#allocation8 + $0xc0] sm:$0xff]
    %v4168 = vld [vmem:[#allocation8 + $0xc8] sm:$0xff]
    %v4169 = vld [vmem:[#allocation8 + $0xd0] sm:$0xff]
    %v4170 = vld [vmem:[#allocation8 + $0xd8] sm:$0xff]
    %v4171 = vld [vmem:[#allocation8 + $0xe0] sm:$0xff]
    %v4172 = vld [vmem:[#allocation8 + $0xe8] sm:$0xff]
    %v4173 = vld [vmem:[#allocation8 + $0xf0] sm:$0xff]
    %v4174 = vld [vmem:[#allocation8 + $0xf8] sm:$0xff]
    %v4175 = vld [vmem:[#allocation8 + $0x100] sm:$0xff]
    %v4176 = vld [vmem:[#allocation8 + $0x108] sm:$0xff]
    %v4177 = vld [vmem:[#allocation8 + $0x110] sm:$0xff]
    %v4178 = vld [vmem:[#allocation8 + $0x118] sm:$0xff]
    %v4179 = vld [vmem:[#allocation8 + $0x120] sm:$0xff]
    %v4180 = vld [vmem:[#allocation8 + $0x128] sm:$0xff]
    %v4181 = vld [vmem:[#allocation8 + $0x130] sm:$0xff]
    %v4182 = vld [vmem:[#allocation8 + $0x138] sm:$0xff]
    %v4183 = vld [vmem:[#allocation8 + $0x140] sm:$0xff]
    %v4184 = vld [vmem:[#allocation8 + $0x148] sm:$0xff]
    %v4185 = vld [vmem:[#allocation8 + $0x150] sm:$0xff]
    %v4186 = vld [vmem:[#allocation8 + $0x158] sm:$0xff]
    %v4187 = vld [vmem:[#allocation8 + $0x160] sm:$0xff]
    %v4188 = vld [vmem:[#allocation8 + $0x168] sm:$0xff]
    %v4189 = vld [vmem:[#allocation8 + $0x170] sm:$0xff]
    %v4190 = vld [vmem:[#allocation8 + $0x178] sm:$0xff]
    %v4191 = vld [vmem:[#allocation8 + $0x180] sm:$0xff]
    %v4192 = vld [vmem:[#allocation8 + $0x188] sm:$0xff]
    %v4193 = vld [vmem:[#allocation8 + $0x190] sm:$0xff]
    %v4194 = vld [vmem:[#allocation8 + $0x198] sm:$0xff]
    %v4195 = vld [vmem:[#allocation8 + $0x1a0] sm:$0xff]
    %v4196 = vld [vmem:[#allocation8 + $0x1a8] sm:$0xff]
    %v4197 = vld [vmem:[#allocation8 + $0x1b0] sm:$0xff]
    %v4198 = vld [vmem:[#allocation8 + $0x1b8] sm:$0xff]
    %v4199 = vld [vmem:[#allocation8 + $0x1c0] sm:$0xff]
    %v4200 = vld [vmem:[#allocation8 + $0x1c8] sm:$0xff]
    %v4201 = vld [vmem:[#allocation8 + $0x1d0] sm:$0xff]
    %v4202 = vld [vmem:[#allocation8 + $0x1d8] sm:$0xff]
    %v4203 = vld [vmem:[#allocation8 + $0x1e0] sm:$0xff]
    %v4204 = vld [vmem:[#allocation8 + $0x1e8] sm:$0xff]
    %v4205 = vld [vmem:[#allocation8 + $0x1f0] sm:$0xff]
    %v4206 = vld [vmem:[#allocation8 + $0x1f8] sm:$0xff]
    %v4207 = vld [vmem:[#allocation8 + $0x200] sm:$0xff]
    %v4208 = vld [vmem:[#allocation8 + $0x208] sm:$0xff]
    %v4209 = vld [vmem:[#allocation8 + $0x210] sm:$0xff]
    %v4210 = vld [vmem:[#allocation8 + $0x218] sm:$0xff]
    %v4211 = vld [vmem:[#allocation8 + $0x220] sm:$0xff]
    %v4212 = vld [vmem:[#allocation8 + $0x228] sm:$0xff]
    %v4213 = vld [vmem:[#allocation8 + $0x230] sm:$0xff]
    %v4214 = vld [vmem:[#allocation8 + $0x238] sm:$0xff]
    %v4215 = vld [vmem:[#allocation8 + $0x240] sm:$0xff]
    %v4216 = vld [vmem:[#allocation8 + $0x248] sm:$0xff]
    %v4217 = vld [vmem:[#allocation8 + $0x250] sm:$0xff]
    %v4218 = vld [vmem:[#allocation8 + $0x258] sm:$0xff]
    %v4219 = vld [vmem:[#allocation8 + $0x260] sm:$0xff]
    %v4220 = vld [vmem:[#allocation8 + $0x268] sm:$0xff]
    %v4221 = vld [vmem:[#allocation8 + $0x270] sm:$0xff]
    %v4222 = vld [vmem:[#allocation8 + $0x278] sm:$0xff]
    %v4223 = vld [vmem:[#allocation8 + $0x280] sm:$0xff]
    %v4224 = vld [vmem:[#allocation8 + $0x288] sm:$0xff]
    %v4225 = vld [vmem:[#allocation8 + $0x290] sm:$0xff]
    %v4226 = vld [vmem:[#allocation8 + $0x298] sm:$0xff]
    %v4227 = vld [vmem:[#allocation8 + $0x2a0] sm:$0xff]
    %v4228 = vld [vmem:[#allocation8 + $0x2a8] sm:$0xff]
    %v4229 = vld [vmem:[#allocation8 + $0x2b0] sm:$0xff]
    %v4230 = vld [vmem:[#allocation8 + $0x2b8] sm:$0xff]
    %v4231 = vld [vmem:[#allocation8 + $0x2c0] sm:$0xff]
    %v4232 = vld [vmem:[#allocation8 + $0x2c8] sm:$0xff]
    %v4233 = vld [vmem:[#allocation8 + $0x2d0] sm:$0xff]
    %v4234 = vld [vmem:[#allocation8 + $0x2d8] sm:$0xff]
    %v4235 = vld [vmem:[#allocation8 + $0x2e0] sm:$0xff]
    %v4236 = vld [vmem:[#allocation8 + $0x2e8] sm:$0xff]
    %v4237 = vld [vmem:[#allocation8 + $0x2f0] sm:$0xff]
    %v4238 = vld [vmem:[#allocation8 + $0x2f8] sm:$0xff]
    %v4239 = vld [vmem:[#allocation8 + $0x300] sm:$0xff]
    %v4240 = vld [vmem:[#allocation8 + $0x308] sm:$0xff]
    %v4241 = vld [vmem:[#allocation8 + $0x310] sm:$0xff]
    %v4242 = vld [vmem:[#allocation8 + $0x318] sm:$0xff]
    %v4243 = vld [vmem:[#allocation8 + $0x320] sm:$0xff]
    %v4244 = vld [vmem:[#allocation8 + $0x328] sm:$0xff]
    %v4245 = vld [vmem:[#allocation8 + $0x330] sm:$0xff]
    %v4246 = vld [vmem:[#allocation8 + $0x338] sm:$0xff]
    %v4247 = vld [vmem:[#allocation8 + $0x340] sm:$0xff]
    %v4248 = vld [vmem:[#allocation8 + $0x348] sm:$0xff]
    %v4249 = vld [vmem:[#allocation8 + $0x350] sm:$0xff]
    %v4250 = vld [vmem:[#allocation8 + $0x358] sm:$0xff]
    %v4251 = vld [vmem:[#allocation8 + $0x360] sm:$0xff]
    %v4252 = vld [vmem:[#allocation8 + $0x368] sm:$0xff]
    %v4253 = vld [vmem:[#allocation8 + $0x370] sm:$0xff]
    %v4254 = vld [vmem:[#allocation8 + $0x378] sm:$0xff]
    %v4255 = vld [vmem:[#allocation8 + $0x380] sm:$0xff]
    %v4256 = vld [vmem:[#allocation8 + $0x388] sm:$0xff]
    %v4257 = vld [vmem:[#allocation8 + $0x390] sm:$0xff]
    %v4258 = vld [vmem:[#allocation8 + $0x398] sm:$0xff]
    %v4259 = vld [vmem:[#allocation8 + $0x3a0] sm:$0xff]
    %v4260 = vld [vmem:[#allocation8 + $0x3a8] sm:$0xff]
    %v4261 = vld [vmem:[#allocation8 + $0x3b0] sm:$0xff]
    %v4262 = vld [vmem:[#allocation8 + $0x3b8] sm:$0xff]
    %v4263 = vld [vmem:[#allocation8 + $0x3c0] sm:$0xff]
    %v4264 = vld [vmem:[#allocation8 + $0x3c8] sm:$0xff]
    %v4265 = vld [vmem:[#allocation8 + $0x3d0] sm:$0xff]
    %v4266 = vld [vmem:[#allocation8 + $0x3d8] sm:$0xff]
    %v4267 = vld [vmem:[#allocation8 + $0x3e0] sm:$0xff]
    %v4268 = vld [vmem:[#allocation8 + $0x3e8] sm:$0xff]
    %v4269 = vld [vmem:[#allocation8 + $0x3f0] sm:$0xff]
    %v4270 = vld [vmem:[#allocation8 + $0x3f8] sm:$0xff]
    %v4271 = vld [vmem:[#allocation10] sm:$0x3]
    %v4273 = vlaneseq
    %v4274 = vshrl.u32 %v4273, 7
    %v4275 = vsub.s32 0, %v4274
    %v4276 = vrot.slane %v4271, %v4275
    %v4277 = vlaneseq
    %v4278 = vshrl.u32 %v4277, 7
    %v4279 = vsub.s32 1, %v4278
    %v4280 = vrot.slane %v4271, %v4279
    %v4411 = vunpack.c.l.b16 %v4143
    %v4412 = vunpack.c.h.b16 %v4143
    %v4413 = vunpack.c.l.b16 %v4144
    %v4414 = vunpack.c.h.b16 %v4144
    %v4415 = vunpack.c.l.b16 %v4145
    %v4416 = vunpack.c.h.b16 %v4145
    %v4417 = vunpack.c.l.b16 %v4146
    %v4418 = vunpack.c.h.b16 %v4146
    %v4419 = vunpack.c.l.b16 %v4147
    %v4420 = vunpack.c.h.b16 %v4147
    %v4421 = vunpack.c.l.b16 %v4148
    %v4422 = vunpack.c.h.b16 %v4148
    %v4423 = vunpack.c.l.b16 %v4149
    %v4424 = vunpack.c.h.b16 %v4149
    %v4425 = vunpack.c.l.b16 %v4150
    %v4426 = vunpack.c.h.b16 %v4150
    %v4427 = vunpack.c.l.b16 %v4151
    %v4428 = vunpack.c.h.b16 %v4151
    %v4429 = vunpack.c.l.b16 %v4152
    %v4430 = vunpack.c.h.b16 %v4152
    %v4431 = vunpack.c.l.b16 %v4153
    %v4432 = vunpack.c.h.b16 %v4153
    %v4433 = vunpack.c.l.b16 %v4154
    %v4434 = vunpack.c.h.b16 %v4154
    %v4435 = vunpack.c.l.b16 %v4155
    %v4436 = vunpack.c.h.b16 %v4155
    %v4437 = vunpack.c.l.b16 %v4156
    %v4438 = vunpack.c.h.b16 %v4156
    %v4439 = vunpack.c.l.b16 %v4157
    %v4440 = vunpack.c.h.b16 %v4157
    %v4441 = vunpack.c.l.b16 %v4158
    %v4442 = vunpack.c.h.b16 %v4158
    %v4443 = vunpack.c.l.b16 %v4159
    %v4444 = vunpack.c.h.b16 %v4159
    %v4445 = vunpack.c.l.b16 %v4160
    %v4446 = vunpack.c.h.b16 %v4160
    %v4447 = vunpack.c.l.b16 %v4161
    %v4448 = vunpack.c.h.b16 %v4161
    %v4449 = vunpack.c.l.b16 %v4162
    %v4450 = vunpack.c.h.b16 %v4162
    %v4451 = vunpack.c.l.b16 %v4163
    %v4452 = vunpack.c.h.b16 %v4163
    %v4453 = vunpack.c.l.b16 %v4164
    %v4454 = vunpack.c.h.b16 %v4164
    %v4455 = vunpack.c.l.b16 %v4165
    %v4456 = vunpack.c.h.b16 %v4165
    %v4457 = vunpack.c.l.b16 %v4166
    %v4458 = vunpack.c.h.b16 %v4166
    %v4459 = vunpack.c.l.b16 %v4167
    %v4460 = vunpack.c.h.b16 %v4167
    %v4461 = vunpack.c.l.b16 %v4168
    %v4462 = vunpack.c.h.b16 %v4168
    %v4463 = vunpack.c.l.b16 %v4169
    %v4464 = vunpack.c.h.b16 %v4169
    %v4465 = vunpack.c.l.b16 %v4170
    %v4466 = vunpack.c.h.b16 %v4170
    %v4467 = vunpack.c.l.b16 %v4171
    %v4468 = vunpack.c.h.b16 %v4171
    %v4469 = vunpack.c.l.b16 %v4172
    %v4470 = vunpack.c.h.b16 %v4172
    %v4471 = vunpack.c.l.b16 %v4173
    %v4472 = vunpack.c.h.b16 %v4173
    %v4473 = vunpack.c.l.b16 %v4174
    %v4474 = vunpack.c.h.b16 %v4174
    %v4475 = vunpack.c.l.b16 %v4175
    %v4476 = vunpack.c.h.b16 %v4175
    %v4477 = vunpack.c.l.b16 %v4176
    %v4478 = vunpack.c.h.b16 %v4176
    %v4479 = vunpack.c.l.b16 %v4177
    %v4480 = vunpack.c.h.b16 %v4177
    %v4481 = vunpack.c.l.b16 %v4178
    %v4482 = vunpack.c.h.b16 %v4178
    %v4483 = vunpack.c.l.b16 %v4179
    %v4484 = vunpack.c.h.b16 %v4179
    %v4485 = vunpack.c.l.b16 %v4180
    %v4486 = vunpack.c.h.b16 %v4180
    %v4487 = vunpack.c.l.b16 %v4181
    %v4488 = vunpack.c.h.b16 %v4181
    %v4489 = vunpack.c.l.b16 %v4182
    %v4490 = vunpack.c.h.b16 %v4182
    %v4491 = vunpack.c.l.b16 %v4183
    %v4492 = vunpack.c.h.b16 %v4183
    %v4493 = vunpack.c.l.b16 %v4184
    %v4494 = vunpack.c.h.b16 %v4184
    %v4495 = vunpack.c.l.b16 %v4185
    %v4496 = vunpack.c.h.b16 %v4185
    %v4497 = vunpack.c.l.b16 %v4186
    %v4498 = vunpack.c.h.b16 %v4186
    %v4499 = vunpack.c.l.b16 %v4187
    %v4500 = vunpack.c.h.b16 %v4187
    %v4501 = vunpack.c.l.b16 %v4188
    %v4502 = vunpack.c.h.b16 %v4188
    %v4503 = vunpack.c.l.b16 %v4189
    %v4504 = vunpack.c.h.b16 %v4189
    %v4505 = vunpack.c.l.b16 %v4190
    %v4506 = vunpack.c.h.b16 %v4190
    %v4507 = vunpack.c.l.b16 %v4191
    %v4508 = vunpack.c.h.b16 %v4191
    %v4509 = vunpack.c.l.b16 %v4192
    %v4510 = vunpack.c.h.b16 %v4192
    %v4511 = vunpack.c.l.b16 %v4193
    %v4512 = vunpack.c.h.b16 %v4193
    %v4513 = vunpack.c.l.b16 %v4194
    %v4514 = vunpack.c.h.b16 %v4194
    %v4515 = vunpack.c.l.b16 %v4195
    %v4516 = vunpack.c.h.b16 %v4195
    %v4517 = vunpack.c.l.b16 %v4196
    %v4518 = vunpack.c.h.b16 %v4196
    %v4519 = vunpack.c.l.b16 %v4197
    %v4520 = vunpack.c.h.b16 %v4197
    %v4521 = vunpack.c.l.b16 %v4198
    %v4522 = vunpack.c.h.b16 %v4198
    %v4523 = vunpack.c.l.b16 %v4199
    %v4524 = vunpack.c.h.b16 %v4199
    %v4525 = vunpack.c.l.b16 %v4200
    %v4526 = vunpack.c.h.b16 %v4200
    %v4527 = vunpack.c.l.b16 %v4201
    %v4528 = vunpack.c.h.b16 %v4201
    %v4529 = vunpack.c.l.b16 %v4202
    %v4530 = vunpack.c.h.b16 %v4202
    %v4531 = vunpack.c.l.b16 %v4203
    %v4532 = vunpack.c.h.b16 %v4203
    %v4533 = vunpack.c.l.b16 %v4204
    %v4534 = vunpack.c.h.b16 %v4204
    %v4535 = vunpack.c.l.b16 %v4205
    %v4536 = vunpack.c.h.b16 %v4205
    %v4537 = vunpack.c.l.b16 %v4206
    %v4538 = vunpack.c.h.b16 %v4206
    %v4539 = vunpack.c.l.b16 %v4207
    %v4540 = vunpack.c.h.b16 %v4207
    %v4541 = vunpack.c.l.b16 %v4208
    %v4542 = vunpack.c.h.b16 %v4208
    %v4543 = vunpack.c.l.b16 %v4209
    %v4544 = vunpack.c.h.b16 %v4209
    %v4545 = vunpack.c.l.b16 %v4210
    %v4546 = vunpack.c.h.b16 %v4210
    %v4547 = vunpack.c.l.b16 %v4211
    %v4548 = vunpack.c.h.b16 %v4211
    %v4549 = vunpack.c.l.b16 %v4212
    %v4550 = vunpack.c.h.b16 %v4212
    %v4551 = vunpack.c.l.b16 %v4213
    %v4552 = vunpack.c.h.b16 %v4213
    %v4553 = vunpack.c.l.b16 %v4214
    %v4554 = vunpack.c.h.b16 %v4214
    %v4555 = vunpack.c.l.b16 %v4215
    %v4556 = vunpack.c.h.b16 %v4215
    %v4557 = vunpack.c.l.b16 %v4216
    %v4558 = vunpack.c.h.b16 %v4216
    %v4559 = vunpack.c.l.b16 %v4217
    %v4560 = vunpack.c.h.b16 %v4217
    %v4561 = vunpack.c.l.b16 %v4218
    %v4562 = vunpack.c.h.b16 %v4218
    %v4563 = vunpack.c.l.b16 %v4219
    %v4564 = vunpack.c.h.b16 %v4219
    %v4565 = vunpack.c.l.b16 %v4220
    %v4566 = vunpack.c.h.b16 %v4220
    %v4567 = vunpack.c.l.b16 %v4221
    %v4568 = vunpack.c.h.b16 %v4221
    %v4569 = vunpack.c.l.b16 %v4222
    %v4570 = vunpack.c.h.b16 %v4222
    %v4571 = vunpack.c.l.b16 %v4223
    %v4572 = vunpack.c.h.b16 %v4223
    %v4573 = vunpack.c.l.b16 %v4224
    %v4574 = vunpack.c.h.b16 %v4224
    %v4575 = vunpack.c.l.b16 %v4225
    %v4576 = vunpack.c.h.b16 %v4225
    %v4577 = vunpack.c.l.b16 %v4226
    %v4578 = vunpack.c.h.b16 %v4226
    %v4579 = vunpack.c.l.b16 %v4227
    %v4580 = vunpack.c.h.b16 %v4227
    %v4581 = vunpack.c.l.b16 %v4228
    %v4582 = vunpack.c.h.b16 %v4228
    %v4583 = vunpack.c.l.b16 %v4229
    %v4584 = vunpack.c.h.b16 %v4229
    %v4585 = vunpack.c.l.b16 %v4230
    %v4586 = vunpack.c.h.b16 %v4230
    %v4587 = vunpack.c.l.b16 %v4231
    %v4588 = vunpack.c.h.b16 %v4231
    %v4589 = vunpack.c.l.b16 %v4232
    %v4590 = vunpack.c.h.b16 %v4232
    %v4591 = vunpack.c.l.b16 %v4233
    %v4592 = vunpack.c.h.b16 %v4233
    %v4593 = vunpack.c.l.b16 %v4234
    %v4594 = vunpack.c.h.b16 %v4234
    %v4595 = vunpack.c.l.b16 %v4235
    %v4596 = vunpack.c.h.b16 %v4235
    %v4597 = vunpack.c.l.b16 %v4236
    %v4598 = vunpack.c.h.b16 %v4236
    %v4599 = vunpack.c.l.b16 %v4237
    %v4600 = vunpack.c.h.b16 %v4237
    %v4601 = vunpack.c.l.b16 %v4238
    %v4602 = vunpack.c.h.b16 %v4238
    %v4603 = vunpack.c.l.b16 %v4239
    %v4604 = vunpack.c.h.b16 %v4239
    %v4605 = vunpack.c.l.b16 %v4240
    %v4606 = vunpack.c.h.b16 %v4240
    %v4607 = vunpack.c.l.b16 %v4241
    %v4608 = vunpack.c.h.b16 %v4241
    %v4609 = vunpack.c.l.b16 %v4242
    %v4610 = vunpack.c.h.b16 %v4242
    %v4611 = vunpack.c.l.b16 %v4243
    %v4612 = vunpack.c.h.b16 %v4243
    %v4613 = vunpack.c.l.b16 %v4244
    %v4614 = vunpack.c.h.b16 %v4244
    %v4615 = vunpack.c.l.b16 %v4245
    %v4616 = vunpack.c.h.b16 %v4245
    %v4617 = vunpack.c.l.b16 %v4246
    %v4618 = vunpack.c.h.b16 %v4246
    %v4619 = vunpack.c.l.b16 %v4247
    %v4620 = vunpack.c.h.b16 %v4247
    %v4621 = vunpack.c.l.b16 %v4248
    %v4622 = vunpack.c.h.b16 %v4248
    %v4623 = vunpack.c.l.b16 %v4249
    %v4624 = vunpack.c.h.b16 %v4249
    %v4625 = vunpack.c.l.b16 %v4250
    %v4626 = vunpack.c.h.b16 %v4250
    %v4627 = vunpack.c.l.b16 %v4251
    %v4628 = vunpack.c.h.b16 %v4251
    %v4629 = vunpack.c.l.b16 %v4252
    %v4630 = vunpack.c.h.b16 %v4252
    %v4631 = vunpack.c.l.b16 %v4253
    %v4632 = vunpack.c.h.b16 %v4253
    %v4633 = vunpack.c.l.b16 %v4254
    %v4634 = vunpack.c.h.b16 %v4254
    %v4635 = vunpack.c.l.b16 %v4255
    %v4636 = vunpack.c.h.b16 %v4255
    %v4637 = vunpack.c.l.b16 %v4256
    %v4638 = vunpack.c.h.b16 %v4256
    %v4639 = vunpack.c.l.b16 %v4257
    %v4640 = vunpack.c.h.b16 %v4257
    %v4641 = vunpack.c.l.b16 %v4258
    %v4642 = vunpack.c.h.b16 %v4258
    %v4643 = vunpack.c.l.b16 %v4259
    %v4644 = vunpack.c.h.b16 %v4259
    %v4645 = vunpack.c.l.b16 %v4260
    %v4646 = vunpack.c.h.b16 %v4260
    %v4647 = vunpack.c.l.b16 %v4261
    %v4648 = vunpack.c.h.b16 %v4261
    %v4649 = vunpack.c.l.b16 %v4262
    %v4650 = vunpack.c.h.b16 %v4262
    %v4651 = vunpack.c.l.b16 %v4263
    %v4652 = vunpack.c.h.b16 %v4263
    %v4653 = vunpack.c.l.b16 %v4264
    %v4654 = vunpack.c.h.b16 %v4264
    %v4655 = vunpack.c.l.b16 %v4265
    %v4656 = vunpack.c.h.b16 %v4265
    %v4657 = vunpack.c.l.b16 %v4266
    %v4658 = vunpack.c.h.b16 %v4266
    %v4659 = vunpack.c.l.b16 %v4267
    %v4660 = vunpack.c.h.b16 %v4267
    %v4661 = vunpack.c.l.b16 %v4268
    %v4662 = vunpack.c.h.b16 %v4268
    %v4663 = vunpack.c.l.b16 %v4269
    %v4664 = vunpack.c.h.b16 %v4269
    %v4665 = vunpack.c.l.b16 %v4270
    %v4666 = vunpack.c.h.b16 %v4270
    %v4667 = vpack.c.b16 %v4413, %v4411
    %v4668 = vpack.c.b16 %v4414, %v4412
    %v4669 = vpack.c.b16 %v4417, %v4415
    %v4670 = vpack.c.b16 %v4418, %v4416
    %v4671 = vpack.c.b16 %v4421, %v4419
    %v4672 = vpack.c.b16 %v4422, %v4420
    %v4673 = vpack.c.b16 %v4425, %v4423
    %v4674 = vpack.c.b16 %v4426, %v4424
    %v4675 = vpack.c.b16 %v4429, %v4427
    %v4676 = vpack.c.b16 %v4430, %v4428
    %v4677 = vpack.c.b16 %v4433, %v4431
    %v4678 = vpack.c.b16 %v4434, %v4432
    %v4679 = vpack.c.b16 %v4437, %v4435
    %v4680 = vpack.c.b16 %v4438, %v4436
    %v4681 = vpack.c.b16 %v4441, %v4439
    %v4682 = vpack.c.b16 %v4442, %v4440
    %v4683 = vpack.c.b16 %v4445, %v4443
    %v4684 = vpack.c.b16 %v4446, %v4444
    %v4685 = vpack.c.b16 %v4449, %v4447
    %v4686 = vpack.c.b16 %v4450, %v4448
    %v4687 = vpack.c.b16 %v4453, %v4451
    %v4688 = vpack.c.b16 %v4454, %v4452
    %v4689 = vpack.c.b16 %v4457, %v4455
    %v4690 = vpack.c.b16 %v4458, %v4456
    %v4691 = vpack.c.b16 %v4461, %v4459
    %v4692 = vpack.c.b16 %v4462, %v4460
    %v4693 = vpack.c.b16 %v4465, %v4463
    %v4694 = vpack.c.b16 %v4466, %v4464
    %v4695 = vpack.c.b16 %v4469, %v4467
    %v4696 = vpack.c.b16 %v4470, %v4468
    %v4697 = vpack.c.b16 %v4473, %v4471
    %v4698 = vpack.c.b16 %v4474, %v4472
    %v4699 = vpack.c.b16 %v4477, %v4475
    %v4700 = vpack.c.b16 %v4478, %v4476
    %v4701 = vpack.c.b16 %v4481, %v4479
    %v4702 = vpack.c.b16 %v4482, %v4480
    %v4703 = vpack.c.b16 %v4485, %v4483
    %v4704 = vpack.c.b16 %v4486, %v4484
    %v4705 = vpack.c.b16 %v4489, %v4487
    %v4706 = vpack.c.b16 %v4490, %v4488
    %v4707 = vpack.c.b16 %v4493, %v4491
    %v4708 = vpack.c.b16 %v4494, %v4492
    %v4709 = vpack.c.b16 %v4497, %v4495
    %v4710 = vpack.c.b16 %v4498, %v4496
    %v4711 = vpack.c.b16 %v4501, %v4499
    %v4712 = vpack.c.b16 %v4502, %v4500
    %v4713 = vpack.c.b16 %v4505, %v4503
    %v4714 = vpack.c.b16 %v4506, %v4504
    %v4715 = vpack.c.b16 %v4509, %v4507
    %v4716 = vpack.c.b16 %v4510, %v4508
    %v4717 = vpack.c.b16 %v4513, %v4511
    %v4718 = vpack.c.b16 %v4514, %v4512
    %v4719 = vpack.c.b16 %v4517, %v4515
    %v4720 = vpack.c.b16 %v4518, %v4516
    %v4721 = vpack.c.b16 %v4521, %v4519
    %v4722 = vpack.c.b16 %v4522, %v4520
    %v4723 = vpack.c.b16 %v4525, %v4523
    %v4724 = vpack.c.b16 %v4526, %v4524
    %v4725 = vpack.c.b16 %v4529, %v4527
    %v4726 = vpack.c.b16 %v4530, %v4528
    %v4727 = vpack.c.b16 %v4533, %v4531
    %v4728 = vpack.c.b16 %v4534, %v4532
    %v4729 = vpack.c.b16 %v4537, %v4535
    %v4730 = vpack.c.b16 %v4538, %v4536
    %v4731 = vpack.c.b16 %v4541, %v4539
    %v4732 = vpack.c.b16 %v4542, %v4540
    %v4733 = vpack.c.b16 %v4545, %v4543
    %v4734 = vpack.c.b16 %v4546, %v4544
    %v4735 = vpack.c.b16 %v4549, %v4547
    %v4736 = vpack.c.b16 %v4550, %v4548
    %v4737 = vpack.c.b16 %v4553, %v4551
    %v4738 = vpack.c.b16 %v4554, %v4552
    %v4739 = vpack.c.b16 %v4557, %v4555
    %v4740 = vpack.c.b16 %v4558, %v4556
    %v4741 = vpack.c.b16 %v4561, %v4559
    %v4742 = vpack.c.b16 %v4562, %v4560
    %v4743 = vpack.c.b16 %v4565, %v4563
    %v4744 = vpack.c.b16 %v4566, %v4564
    %v4745 = vpack.c.b16 %v4569, %v4567
    %v4746 = vpack.c.b16 %v4570, %v4568
    %v4747 = vpack.c.b16 %v4573, %v4571
    %v4748 = vpack.c.b16 %v4574, %v4572
    %v4749 = vpack.c.b16 %v4577, %v4575
    %v4750 = vpack.c.b16 %v4578, %v4576
    %v4751 = vpack.c.b16 %v4581, %v4579
    %v4752 = vpack.c.b16 %v4582, %v4580
    %v4753 = vpack.c.b16 %v4585, %v4583
    %v4754 = vpack.c.b16 %v4586, %v4584
    %v4755 = vpack.c.b16 %v4589, %v4587
    %v4756 = vpack.c.b16 %v4590, %v4588
    %v4757 = vpack.c.b16 %v4593, %v4591
    %v4758 = vpack.c.b16 %v4594, %v4592
    %v4759 = vpack.c.b16 %v4597, %v4595
    %v4760 = vpack.c.b16 %v4598, %v4596
    %v4761 = vpack.c.b16 %v4601, %v4599
    %v4762 = vpack.c.b16 %v4602, %v4600
    %v4763 = vpack.c.b16 %v4605, %v4603
    %v4764 = vpack.c.b16 %v4606, %v4604
    %v4765 = vpack.c.b16 %v4609, %v4607
    %v4766 = vpack.c.b16 %v4610, %v4608
    %v4767 = vpack.c.b16 %v4613, %v4611
    %v4768 = vpack.c.b16 %v4614, %v4612
    %v4769 = vpack.c.b16 %v4617, %v4615
    %v4770 = vpack.c.b16 %v4618, %v4616
    %v4771 = vpack.c.b16 %v4621, %v4619
    %v4772 = vpack.c.b16 %v4622, %v4620
    %v4773 = vpack.c.b16 %v4625, %v4623
    %v4774 = vpack.c.b16 %v4626, %v4624
    %v4775 = vpack.c.b16 %v4629, %v4627
    %v4776 = vpack.c.b16 %v4630, %v4628
    %v4777 = vpack.c.b16 %v4633, %v4631
    %v4778 = vpack.c.b16 %v4634, %v4632
    %v4779 = vpack.c.b16 %v4637, %v4635
    %v4780 = vpack.c.b16 %v4638, %v4636
    %v4781 = vpack.c.b16 %v4641, %v4639
    %v4782 = vpack.c.b16 %v4642, %v4640
    %v4783 = vpack.c.b16 %v4645, %v4643
    %v4784 = vpack.c.b16 %v4646, %v4644
    %v4785 = vpack.c.b16 %v4649, %v4647
    %v4786 = vpack.c.b16 %v4650, %v4648
    %v4787 = vpack.c.b16 %v4653, %v4651
    %v4788 = vpack.c.b16 %v4654, %v4652
    %v4789 = vpack.c.b16 %v4657, %v4655
    %v4790 = vpack.c.b16 %v4658, %v4656
    %v4791 = vpack.c.b16 %v4661, %v4659
    %v4792 = vpack.c.b16 %v4662, %v4660
    %v4793 = vpack.c.b16 %v4665, %v4663
    %v4794 = vpack.c.b16 %v4666, %v4664
    %4923 = vmatprep.subr.bf16.mxu0 %v4668
    %4924 = vmatpush1.bf16.msra.mxu0 %v4667
    %4925 = vmatprep.subr.bf16.mxu0 %v4670
    %4926 = vmatpush1.bf16.msra.mxu0 %v4669
    %4927 = vmatprep.subr.bf16.mxu0 %v4672
    %4928 = vmatpush1.bf16.msra.mxu0 %v4671
    %4929 = vmatprep.subr.bf16.mxu0 %v4674
    %4930 = vmatpush1.bf16.msra.mxu0 %v4673
    %4931 = vmatprep.subr.bf16.mxu0 %v4676
    %4932 = vmatpush1.bf16.msra.mxu0 %v4675
    %4933 = vmatprep.subr.bf16.mxu0 %v4678
    %4934 = vmatpush1.bf16.msra.mxu0 %v4677
    %4935 = vmatprep.subr.bf16.mxu0 %v4680
    %4936 = vmatpush1.bf16.msra.mxu0 %v4679
    %4937 = vmatprep.subr.bf16.mxu0 %v4682
    %4938 = vmatpush1.bf16.msra.mxu0 %v4681
    %4939 = vmatprep.subr.bf16.mxu0 %v4684
    %4940 = vmatpush1.bf16.msra.mxu0 %v4683
    %4941 = vmatprep.subr.bf16.mxu0 %v4686
    %4942 = vmatpush1.bf16.msra.mxu0 %v4685
    %4943 = vmatprep.subr.bf16.mxu0 %v4688
    %4944 = vmatpush1.bf16.msra.mxu0 %v4687
    %4945 = vmatprep.subr.bf16.mxu0 %v4690
    %4946 = vmatpush1.bf16.msra.mxu0 %v4689
    %4947 = vmatprep.subr.bf16.mxu0 %v4692
    %4948 = vmatpush1.bf16.msra.mxu0 %v4691
    %4949 = vmatprep.subr.bf16.mxu0 %v4694
    %4950 = vmatpush1.bf16.msra.mxu0 %v4693
    %4951 = vmatprep.subr.bf16.mxu0 %v4696
    %4952 = vmatpush1.bf16.msra.mxu0 %v4695
    %4953 = vmatprep.subr.bf16.mxu0 %v4698
    %4954 = vmatpush1.bf16.msra.mxu0 %v4697
    %4955 = vmatprep.mubr.bf16.mxu0 %v4128
    %4956 = vmatmul.mubr.bf16.gmra.mrb[0].mxu0 %v4127
    %v4957 = vpop.f32.mrb[0].mxu0
    %v4958 = vadd.f32 %v4276, %v4957
    %v4959 = vpop.f32.mrb[0].mxu0
    %v4960 = vadd.f32 %v4280, %v4959
    %v4961 = vpop.f32.mrb[0].mxu0
    %v4962 = vadd.f32 %v4276, %v4961
    %v4963 = vpop.f32.mrb[0].mxu0
    %v4964 = vadd.f32 %v4280, %v4963
    %4965 = vmatprep.mubr.bf16.mxu0 %v4136
    %4966 = vmatmul.mubr.bf16.gmra.mrb[0].mxu0 %v4135
    %v4967 = vpop.f32.mrb[0].mxu0
    %v4968 = vadd.f32 %v4276, %v4967
    %v4969 = vpop.f32.mrb[0].mxu0
    %v4970 = vadd.f32 %v4280, %v4969
    %v4971 = vpop.f32.mrb[0].mxu0
    %v4972 = vadd.f32 %v4276, %v4971
    %v4973 = vpop.f32.mrb[0].mxu0
    %v4974 = vadd.f32 %v4280, %v4973
    %4975 = vdwg.mxu0
    %4976 = vmatprep.subr.bf16.mxu0 %v4700
    %4977 = vmatpush1.bf16.msra.mxu0 %v4699
    %4978 = vmatprep.subr.bf16.mxu0 %v4702
    %4979 = vmatpush1.bf16.msra.mxu0 %v4701
    %4980 = vmatprep.subr.bf16.mxu0 %v4704
    %4981 = vmatpush1.bf16.msra.mxu0 %v4703
    %4982 = vmatprep.subr.bf16.mxu0 %v4706
    %4983 = vmatpush1.bf16.msra.mxu0 %v4705
    %4984 = vmatprep.subr.bf16.mxu0 %v4708
    %4985 = vmatpush1.bf16.msra.mxu0 %v4707
    %4986 = vmatprep.subr.bf16.mxu0 %v4710
    %4987 = vmatpush1.bf16.msra.mxu0 %v4709
    %4988 = vmatprep.subr.bf16.mxu0 %v4712
    %4989 = vmatpush1.bf16.msra.mxu0 %v4711
    %4990 = vmatprep.subr.bf16.mxu0 %v4714
    %4991 = vmatpush1.bf16.msra.mxu0 %v4713
    %4992 = vmatprep.subr.bf16.mxu0 %v4716
    %4993 = vmatpush1.bf16.msra.mxu0 %v4715
    %4994 = vmatprep.subr.bf16.mxu0 %v4718
    %4995 = vmatpush1.bf16.msra.mxu0 %v4717
    %4996 = vmatprep.subr.bf16.mxu0 %v4720
    %4997 = vmatpush1.bf16.msra.mxu0 %v4719
    %4998 = vmatprep.subr.bf16.mxu0 %v4722
    %4999 = vmatpush1.bf16.msra.mxu0 %v4721
    %5000 = vmatprep.subr.bf16.mxu0 %v4724
    %5001 = vmatpush1.bf16.msra.mxu0 %v4723
    %5002 = vmatprep.subr.bf16.mxu0 %v4726
    %5003 = vmatpush1.bf16.msra.mxu0 %v4725
    %5004 = vmatprep.subr.bf16.mxu0 %v4728
    %5005 = vmatpush1.bf16.msra.mxu0 %v4727
    %5006 = vmatprep.subr.bf16.mxu0 %v4730
    %5007 = vmatpush1.bf16.msra.mxu0 %v4729
    %5008 = vmatprep.mubr.bf16.mxu0 %v4130
    %5009 = vmatmul.mubr.bf16.gmra.mrb[0].mxu0 %v4129
    %v5010 = vpop.f32.mrb[0].mxu0
    %v5011 = vadd.f32 %v4958, %v5010
    %v5012 = vpop.f32.mrb[0].mxu0
    %v5013 = vadd.f32 %v4960, %v5012
    %v5014 = vpop.f32.mrb[0].mxu0
    %v5015 = vadd.f32 %v4962, %v5014
    %v5016 = vpop.f32.mrb[0].mxu0
    %v5017 = vadd.f32 %v4964, %v5016
    %5018 = vmatprep.mubr.bf16.mxu0 %v4138
    %5019 = vmatmul.mubr.bf16.gmra.mrb[0].mxu0 %v4137
    %v5020 = vpop.f32.mrb[0].mxu0
    %v5021 = vadd.f32 %v4968, %v5020
    %v5022 = vpop.f32.mrb[0].mxu0
    %v5023 = vadd.f32 %v4970, %v5022
    %v5024 = vpop.f32.mrb[0].mxu0
    %v5025 = vadd.f32 %v4972, %v5024
    %v5026 = vpop.f32.mrb[0].mxu0
    %v5027 = vadd.f32 %v4974, %v5026
    %5028 = vdwg.mxu0
    %5029 = vmatprep.subr.bf16.mxu0 %v4732
    %5030 = vmatpush1.bf16.msra.mxu0 %v4731
    %5031 = vmatprep.subr.bf16.mxu0 %v4734
    %5032 = vmatpush1.bf16.msra.mxu0 %v4733
    %5033 = vmatprep.subr.bf16.mxu0 %v4736
    %5034 = vmatpush1.bf16.msra.mxu0 %v4735
    %5035 = vmatprep.subr.bf16.mxu0 %v4738
    %5036 = vmatpush1.bf16.msra.mxu0 %v4737
    %5037 = vmatprep.subr.bf16.mxu0 %v4740
    %5038 = vmatpush1.bf16.msra.mxu0 %v4739
    %5039 = vmatprep.subr.bf16.mxu0 %v4742
    %5040 = vmatpush1.bf16.msra.mxu0 %v4741
    %5041 = vmatprep.subr.bf16.mxu0 %v4744
    %5042 = vmatpush1.bf16.msra.mxu0 %v4743
    %5043 = vmatprep.subr.bf16.mxu0 %v4746
    %5044 = vmatpush1.bf16.msra.mxu0 %v4745
    %5045 = vmatprep.subr.bf16.mxu0 %v4748
    %5046 = vmatpush1.bf16.msra.mxu0 %v4747
    %5047 = vmatprep.subr.bf16.mxu0 %v4750
    %5048 = vmatpush1.bf16.msra.mxu0 %v4749
    %5049 = vmatprep.subr.bf16.mxu0 %v4752
    %5050 = vmatpush1.bf16.msra.mxu0 %v4751
    %5051 = vmatprep.subr.bf16.mxu0 %v4754
    %5052 = vmatpush1.bf16.msra.mxu0 %v4753
    %5053 = vmatprep.subr.bf16.mxu0 %v4756
    %5054 = vmatpush1.bf16.msra.mxu0 %v4755
    %5055 = vmatprep.subr.bf16.mxu0 %v4758
    %5056 = vmatpush1.bf16.msra.mxu0 %v4757
    %5057 = vmatprep.subr.bf16.mxu0 %v4760
    %5058 = vmatpush1.bf16.msra.mxu0 %v4759
    %5059 = vmatprep.subr.bf16.mxu0 %v4762
    %5060 = vmatpush1.bf16.msra.mxu0 %v4761
    %5061 = vmatprep.mubr.bf16.mxu0 %v4132
    %5062 = vmatmul.mubr.bf16.gmra.mrb[0].mxu0 %v4131
    %v5063 = vpop.f32.mrb[0].mxu0
    %v5064 = vadd.f32 %v5011, %v5063
    %v5065 = vpop.f32.mrb[0].mxu0
    %v5066 = vadd.f32 %v5013, %v5065
    %v5067 = vpop.f32.mrb[0].mxu0
    %v5068 = vadd.f32 %v5015, %v5067
    %v5069 = vpop.f32.mrb[0].mxu0
    %v5070 = vadd.f32 %v5017, %v5069
    %5071 = vmatprep.mubr.bf16.mxu0 %v4140
    %5072 = vmatmul.mubr.bf16.gmra.mrb[0].mxu0 %v4139
    %v5073 = vpop.f32.mrb[0].mxu0
    %v5074 = vadd.f32 %v5021, %v5073
    %v5075 = vpop.f32.mrb[0].mxu0
    %v5076 = vadd.f32 %v5023, %v5075
    %v5077 = vpop.f32.mrb[0].mxu0
    %v5078 = vadd.f32 %v5025, %v5077
    %v5079 = vpop.f32.mrb[0].mxu0
    %v5080 = vadd.f32 %v5027, %v5079
    %5081 = vdwg.mxu0
    %5082 = vmatprep.subr.bf16.mxu0 %v4764
    %5083 = vmatpush1.bf16.msra.mxu0 %v4763
    %5084 = vmatprep.subr.bf16.mxu0 %v4766
    %5085 = vmatpush1.bf16.msra.mxu0 %v4765
    %5086 = vmatprep.subr.bf16.mxu0 %v4768
    %5087 = vmatpush1.bf16.msra.mxu0 %v4767
    %5088 = vmatprep.subr.bf16.mxu0 %v4770
    %5089 = vmatpush1.bf16.msra.mxu0 %v4769
    %5090 = vmatprep.subr.bf16.mxu0 %v4772
    %5091 = vmatpush1.bf16.msra.mxu0 %v4771
    %5092 = vmatprep.subr.bf16.mxu0 %v4774
    %5093 = vmatpush1.bf16.msra.mxu0 %v4773
    %5094 = vmatprep.subr.bf16.mxu0 %v4776
    %5095 = vmatpush1.bf16.msra.mxu0 %v4775
    %5096 = vmatprep.subr.bf16.mxu0 %v4778
    %5097 = vmatpush1.bf16.msra.mxu0 %v4777
    %5098 = vmatprep.subr.bf16.mxu0 %v4780
    %5099 = vmatpush1.bf16.msra.mxu0 %v4779
    %5100 = vmatprep.subr.bf16.mxu0 %v4782
    %5101 = vmatpush1.bf16.msra.mxu0 %v4781
    %5102 = vmatprep.subr.bf16.mxu0 %v4784
    %5103 = vmatpush1.bf16.msra.mxu0 %v4783
    %5104 = vmatprep.subr.bf16.mxu0 %v4786
    %5105 = vmatpush1.bf16.msra.mxu0 %v4785
    %5106 = vmatprep.subr.bf16.mxu0 %v4788
    %5107 = vmatpush1.bf16.msra.mxu0 %v4787
    %5108 = vmatprep.subr.bf16.mxu0 %v4790
    %5109 = vmatpush1.bf16.msra.mxu0 %v4789
    %5110 = vmatprep.subr.bf16.mxu0 %v4792
    %5111 = vmatpush1.bf16.msra.mxu0 %v4791
    %5112 = vmatprep.subr.bf16.mxu0 %v4794
    %5113 = vmatpush1.bf16.msra.mxu0 %v4793
    %5114 = vmatprep.mubr.bf16.mxu0 %v4134
    %5115 = vmatmul.mubr.bf16.gmra.mrb[0].mxu0 %v4133
    %v5116 = vpop.f32.mrb[0].mxu0
    %v5117 = vadd.f32 %v5064, %v5116
    %v5118 = vpop.f32.mrb[0].mxu0
    %v5119 = vadd.f32 %v5066, %v5118
    %v5120 = vpop.f32.mrb[0].mxu0
    %v5121 = vadd.f32 %v5068, %v5120
    %v5122 = vpop.f32.mrb[0].mxu0
    %v5123 = vadd.f32 %v5070, %v5122
    %5124 = vmatprep.mubr.bf16.mxu0 %v4142
    %5125 = vmatmul.mubr.bf16.gmra.mrb[0].mxu0 %v4141
    %v5126 = vpop.f32.mrb[0].mxu0
    %v5127 = vadd.f32 %v5074, %v5126
    %v5128 = vpop.f32.mrb[0].mxu0
    %v5129 = vadd.f32 %v5076, %v5128
    %v5130 = vpop.f32.mrb[0].mxu0
    %v5131 = vadd.f32 %v5078, %v5130
    %v5132 = vpop.f32.mrb[0].mxu0
    %v5133 = vadd.f32 %v5080, %v5132
    %5134 = vdwg.mxu0
    %v5135 = vmax.f32 %v5117, 0.0
    %v5136 = vmax.f32 %v5119, 0.0
    %v5137 = vmax.f32 %v5121, 0.0
    %v5138 = vmax.f32 %v5123, 0.0
    %v5139 = vmax.f32 %v5127, 0.0
    %v5140 = vmax.f32 %v5129, 0.0
    %v5141 = vmax.f32 %v5131, 0.0
    %v5142 = vmax.f32 %v5133, 0.0
    %v5143 = vmul.f32 %v5135, %v5135
    %v5144 = vmul.f32 %v5136, %v5136
    %v5145 = vmul.f32 %v5137, %v5137
    %v5146 = vmul.f32 %v5138, %v5138
    %v5147 = vmul.f32 %v5139, %v5139
    %v5148 = vmul.f32 %v5140, %v5140
    %v5149 = vmul.f32 %v5141, %v5141
    %v5150 = vmul.f32 %v5142, %v5142
    %v5151 = vadd.f32 %v5143, %v5144
    %5152 = vadd.xlane.f32.xlu0 %v5151
    %v5153 = vpop.xlane.xlu0 %5152
    %v5154 = vadd.f32 %v5145, %v5146
    %5155 = vadd.xlane.f32.xlu0 %v5154
    %v5156 = vpop.xlane.xlu0 %5155
    %v5157 = vadd.f32 %v5147, %v5148
    %5158 = vadd.xlane.f32.xlu0 %v5157
    %v5159 = vpop.xlane.xlu0 %5158
    %v5160 = vadd.f32 %v5149, %v5150
    %5161 = vadd.xlane.f32.xlu0 %v5160
    %v5162 = vpop.xlane.xlu0 %5161
    %v5163 = vmax.f32 %v5153, 1e-24
    %v5164 = vmax.f32 %v5156, 1e-24
    %v5165 = vmax.f32 %v5159, 1e-24
    %v5166 = vmax.f32 %v5162, 1e-24
    %v5167 = vrsqrt.pop %v5163
    %v5168 = vrsqrt.pop %v5164
    %v5169 = vrsqrt.pop %v5165
    %v5170 = vrsqrt.pop %v5166
    %v5171 = vmul.f32 %v5135, %v5167
    %v5172 = vmul.f32 %v5136, %v5167
    %v5173 = vmul.f32 %v5137, %v5168
    %v5174 = vmul.f32 %v5138, %v5168
    %v5175 = vmul.f32 %v5139, %v5169
    %v5176 = vmul.f32 %v5140, %v5169
    %v5177 = vmul.f32 %v5141, %v5170
    %v5178 = vmul.f32 %v5142, %v5170
    %5179 = vst [vmem:[#allocation11] sm:$0xff] %v5171
    %5180 = vst [vmem:[#allocation11 + $0x8] sm:$0xff] %v5172
    %5181 = vst [vmem:[#allocation11 + $0x10] sm:$0xff] %v5173
    %5182 = vst [vmem:[#allocation11 + $0x18] sm:$0xff] %v5174
    %5183 = vst [vmem:[#allocation11 + $0x20] sm:$0xff] %v5175
    %5184 = vst [vmem:[#allocation11 + $0x28] sm:$0xff] %v5176
    %5185 = vst [vmem:[#allocation11 + $0x30] sm:$0xff] %v5177
    %5186 = vst [vmem:[#allocation11 + $0x38] sm:$0xff] %v5178
    // Predicated region
    $region42: #{project_all.1} parent=1 // pred_check
      _
    $region43: #{project_all.1} parent=1 // pred_check_branch
      %5188 = sbr.rel (0) target = $region45
    $region44: #{project_all.1} parent=1 // pred_region
      %s5190 = ssub.s32 1024, 1024
      %5191 = vsyncadd [#allocation4], %s5190
      %s5192 = sshll.u32 [#allocation11], 4
      %s5193 = int_to_ptr.vmem [resolvable:$true] %s5192
      %5198 = dma.vmem_to_hbm [thread:$0]  %s5193, 1024, %s5, [#allocation4], 256, 256, 16
    $region45: #{project_all.1} parent=1 // pred_fallthru
      _
    // Predicated region
    $region46: #{project_all.1} parent=1 // pred_check
      _
    $region47: #{project_all.1} parent=1 // pred_check_branch
      %5200 = sbr.rel (0) target = $region49
    $region48: #{project_all.1} parent=1 // pred_region
      %5201 = dma.done [#allocation4], 1024
    $region49: #{project_all.1} parent=1 // pred_fallthru
      _
    %5202 = vsyncpa [#allocation3], 1
    %5203 = vsyncpa [#allocation6], 1
    %5204 = vsyncpa [#allocation9], 1
    %5205 = vsyncpa [#allocation4], 1

</llo_original>
